<compile_context>
chip_gen: v6e
topology: v6e:2x2x1
jax: 0.10.0
libtpu: 0.0.40
codegen_flags: <defaults>
</compile_context>

<pallas_src>
import jax
import jax.numpy as jnp
from jax.experimental import pallas as pl
from jax.experimental.pallas import tpu as pltpu

# ----------------------------- model dims -----------------------------------
B = 2              # example batch
C = 4              # input channels
H = W = 16         # spatial
HW = H * W         # 256 (lane axis for the image)
F_RESNET = 2048    # num_ftrs_resnet   (resnet50.fc.in_features)
F_DENSE = 1024     # num_ftrs_densenet (densenet121.classifier.in_features)
F_CAT = F_RESNET + F_DENSE   # 3072
HIDDEN = 512
NUM_CLASSES = 10

NC_PAD = 128       # classifier output padded to a full lane width
TM_MAX = 128       # max batch-tile rows per grid step (MXU-shaped LHS)


def _round_up(n, m):
    return ((n + m - 1) // m) * m


# --------------------------- fused forward kernel ----------------------------
def fused_kernel(x_ref, wp_ref, w1_ref, s1_ref, b1_ref, w2_ref, b2_ref, out_ref):
    """Entire CombinedModel forward for one batch tile.

    x_ref  : [TM, C, HW]      f32   (NCHW flattened over space; HW on lanes)
    wp_ref : [C, F_CAT]       bf16  (concat of both branch projections, 1/HW folded in)
    w1_ref : [F_CAT, HIDDEN]  int8  (head Linear(3072,512), per-col quantized)
    s1_ref : [1, HIDDEN]      f32   (per-output-channel dequant scales)
    b1_ref : [1, HIDDEN]      f32
    w2_ref : [HIDDEN, NC_PAD] bf16  (head Linear(512,10) zero-padded to 128 lanes)
    b2_ref : [1, NC_PAD]      f32
    out_ref: [TM, NC_PAD]     f32
    """
    # Stand-in backbones: global average pool over the lane (spatial) axis.
    # The 1/HW mean scale is folded into wp, so a plain sum suffices here.
    pooled = jnp.sum(x_ref[...], axis=-1)                        # [TM, C] f32

    # Both branch projections + ReLU as one matmul.  Column layout of wp is
    # [resnet(2048) | densenet(1024)], so `feat` IS torch.cat((r, d), dim=1).
    feat = jnp.dot(pooled.astype(jnp.bfloat16), wp_ref[...],
                   preferred_element_type=jnp.float32)
    feat = jnp.maximum(feat, 0.0)                                # [TM, 3072]

    # Head: Dropout(0.5) (eval identity) -> Linear(3072, 512) -> ReLU.
    # int8 weights are dequantized to bf16 in VMEM; the per-output-channel
    # scale factors out of the K-sum, so it is applied once on the f32 acc.
    w1 = w1_ref[...].astype(jnp.bfloat16)                        # [3072, 512]
    h = jnp.dot(feat.astype(jnp.bfloat16), w1,
                preferred_element_type=jnp.float32)
    h = jnp.maximum(h * s1_ref[...] + b1_ref[...], 0.0)          # [TM, 512] f32

    # Dropout(0.5) (eval identity) -> Linear(512, num_classes), lane-dense store.
    out = jnp.dot(h.astype(jnp.bfloat16), w2_ref[...],
                  preferred_element_type=jnp.float32)
    out_ref[...] = out + b2_ref[...]                             # [TM, 128]


def combined_model_forward(x_nchw, params):
    b = x_nchw.shape[0]
    # Batch tile: 8-row minimum (sublanes) for tiny batches, 128 for real ones.
    tm = min(TM_MAX, _round_up(b, 8))
    b_pad = _round_up(b, tm)
    grid = (b_pad // tm,)

    # NCHW -> [B, C, H*W] is a pure reshape (no transpose); pad batch rows.
    x = x_nchw.reshape(b, C, HW).astype(jnp.float32)
    if b_pad != b:
        x = jnp.pad(x, ((0, b_pad - b), (0, 0), (0, 0)))

    bytes_accessed = (
        x.size * 4
        + params["wp"].size * 2
        + params["w1q"].size * 1
        + params["s1"].size * 4
        + params["b1"].size * 4
        + params["w2"].size * 2
        + params["b2"].size * 4
        + b_pad * NC_PAD * 4
    )
    cost = pl.CostEstimate(
        flops=2 * b_pad * (C * F_CAT + F_CAT * HIDDEN + HIDDEN * NC_PAD)
        + b_pad * C * HW,
        transcendentals=0,
        bytes_accessed=bytes_accessed,
    )

    out = pl.pallas_call(
        fused_kernel,
        out_shape=jax.ShapeDtypeStruct((b_pad, NC_PAD), jnp.float32),
        grid=grid,
        in_specs=[
            # x / out tile over the batch grid axis ...
            pl.BlockSpec((tm, C, HW), lambda i: (i, 0, 0)),
            # ... while all weights use a constant index_map and stay
            # VMEM-resident across every batch tile of the call.
            pl.BlockSpec((C, F_CAT), lambda i: (0, 0)),
            pl.BlockSpec((F_CAT, HIDDEN), lambda i: (0, 0)),
            pl.BlockSpec((1, HIDDEN), lambda i: (0, 0)),
            pl.BlockSpec((1, HIDDEN), lambda i: (0, 0)),
            pl.BlockSpec((HIDDEN, NC_PAD), lambda i: (0, 0)),
            pl.BlockSpec((1, NC_PAD), lambda i: (0, 0)),
        ],
        out_specs=pl.BlockSpec((tm, NC_PAD), lambda i: (i, 0)),
        compiler_params=pltpu.CompilerParams(
            # Batch tiles are independent -> shard across v7x's 2 TensorCores.
            dimension_semantics=("parallel",),
            # Whole working set (double-buffered inputs + dequant scratch) is
            # only a few MiB; set the limit explicitly so v5e's 16 MiB scoped
            # default is never a concern.
            vmem_limit_bytes=32 * 1024 * 1024,
        ),
        cost_estimate=cost,
    )(x, params["wp"], params["w1q"], params["s1"], params["b1"],
      params["w2"], params["b2"])

    # Strip batch / class padding.
    return out[:b, :NUM_CLASSES]


def init_params(key):
    ks = jax.random.split(key, 6)
    scale = 0.02
    wp_r = scale * jax.random.normal(ks[0], (C, F_RESNET), jnp.float32)
    wp_d = scale * jax.random.normal(ks[1], (C, F_DENSE), jnp.float32)
    w1 = scale * jax.random.normal(ks[2], (F_CAT, HIDDEN), jnp.float32)
    b1 = scale * jax.random.normal(ks[3], (1, HIDDEN), jnp.float32)
    w2 = scale * jax.random.normal(ks[4], (HIDDEN, NUM_CLASSES), jnp.float32)
    b2 = scale * jax.random.normal(ks[5], (1, NUM_CLASSES), jnp.float32)

    # Concatenate both branch projections ONCE at init (resnet first, matching
    # torch.cat((resnet_out, densenet_out), dim=1)) and fold in the GAP's 1/HW
    # mean scale; store as bf16 (tiny: 24 KB).
    wp = (jnp.concatenate([wp_r, wp_d], axis=1) / float(HW)).astype(jnp.bfloat16)

    # w1: symmetric per-output-channel int8 quantization (dominant weight).
    amax = jnp.max(jnp.abs(w1), axis=0, keepdims=True)            # [1, HIDDEN]
    s1 = jnp.maximum(amax, 1e-8) / 127.0                          # f32 scales
    w1_q = jnp.clip(jnp.round(w1 / s1), -127.0, 127.0).astype(jnp.int8)

    # Pad the classifier to 128 lanes ONCE at init (lane-dense output store).
    w2_pad = jnp.zeros((HIDDEN, NC_PAD), jnp.float32).at[:, :NUM_CLASSES].set(w2)
    b2_pad = jnp.zeros((1, NC_PAD), jnp.float32).at[:, :NUM_CLASSES].set(b2)

    return {
        "wp": wp,
        "w1q": w1_q,
        "s1": s1,
        "b1": b1,
        "w2": w2_pad.astype(jnp.bfloat16),
        "b2": b2_pad,
    }


if __name__ == "__main__":
    key = jax.random.PRNGKey(0)
    k_x, k_p = jax.random.split(key)
    x = jax.random.normal(k_x, (B, C, H, W), jnp.float32)  # NCHW like PyTorch
    params = init_params(k_p)

    fwd = jax.jit(combined_model_forward)
    out = fwd(x, params)
    out = jax.block_until_ready(out)
    assert out.shape == (B, NUM_CLASSES), out.shape
    assert bool(jnp.all(jnp.isfinite(out)))
    print("KERNEL_OK")
</pallas_src>

<mosaic_0001>
module attributes {stable_mosaic.version = 11 : i64} {
  func.func @fused_kernel(%arg0: i32, %arg1: memref<8x4x256xf32, #tpu.memory_space<vmem>>, %arg2: memref<4x3072xbf16, #tpu.memory_space<vmem>>, %arg3: memref<3072x512xi8, #tpu.memory_space<vmem>>, %arg4: memref<1x512xf32, #tpu.memory_space<vmem>>, %arg5: memref<1x512xf32, #tpu.memory_space<vmem>>, %arg6: memref<512x128xbf16, #tpu.memory_space<vmem>>, %arg7: memref<1x128xf32, #tpu.memory_space<vmem>>, %arg8: memref<8x128xf32, #tpu.memory_space<vmem>>) attributes {dimension_semantics = [#tpu.dimension_semantics<parallel>], iteration_bounds = array<i64: 1>, scalar_prefetch = 0 : i64, scratch_operands = 0 : i64, tpu.core_type = #tpu.core_type<tc>, window_params = [{transform_indices = @transform_0, window_bounds = array<i64: 8, 4, 256>}, {pipeline_mode = #tpu.pipeline_mode<synchronous>, transform_indices = @transform_1, window_bounds = array<i64: 4, 3072>}, {pipeline_mode = #tpu.pipeline_mode<synchronous>, transform_indices = @transform_2, window_bounds = array<i64: 3072, 512>}, {pipeline_mode = #tpu.pipeline_mode<synchronous>, transform_indices = @transform_3, window_bounds = array<i64: 1, 512>}, {pipeline_mode = #tpu.pipeline_mode<synchronous>, transform_indices = @transform_4, window_bounds = array<i64: 1, 512>}, {pipeline_mode = #tpu.pipeline_mode<synchronous>, transform_indices = @transform_5, window_bounds = array<i64: 512, 128>}, {pipeline_mode = #tpu.pipeline_mode<synchronous>, transform_indices = @transform_6, window_bounds = array<i64: 1, 128>}, {transform_indices = @transform_7, window_bounds = array<i64: 8, 128>}]} {
    %c0 = arith.constant 0 : index
    %c0_0 = arith.constant 0 : index
    %c0_1 = arith.constant 0 : index
    %0 = vector.load %arg1[%c0, %c0_0, %c0_1] : memref<8x4x256xf32, #tpu.memory_space<vmem>>, vector<8x4x256xf32>
    %cst = arith.constant dense<0.000000e+00> : vector<8x4xf32>
    %1 = vector.multi_reduction <add>, %0, %cst [2] : vector<8x4x256xf32> to vector<8x4xf32>
    %2 = arith.truncf %1 : vector<8x4xf32> to vector<8x4xbf16>
    %c0_2 = arith.constant 0 : index
    %c0_3 = arith.constant 0 : index
    %3 = vector.load %arg2[%c0_2, %c0_3] : memref<4x3072xbf16, #tpu.memory_space<vmem>>, vector<4x3072xbf16>
    %cst_4 = arith.constant dense<0.000000e+00> : vector<8x3072xf32>
    %4 = tpu.matmul %2, %3, %cst_4 {dimension_numbers = #tpu.dot_dimension_numbers<[1], [0], [0], [1], [0, 0, 1, 1], [], []>} : vector<8x4xbf16>, vector<4x3072xbf16>, vector<8x3072xf32> -> vector<8x3072xf32>
    %cst_5 = arith.constant 0.000000e+00 : f32
    %5 = vector.broadcast %cst_5 : f32 to vector<8x3072xf32>
    %6 = arith.maximumf %4, %5 : vector<8x3072xf32>
    %c0_6 = arith.constant 0 : index
    %c0_7 = arith.constant 0 : index
    %7 = vector.load %arg3[%c0_6, %c0_7] : memref<3072x512xi8, #tpu.memory_space<vmem>>, vector<3072x512xi8>
    %8 = arith.sitofp %7 : vector<3072x512xi8> to vector<3072x512xbf16>
    %9 = arith.truncf %6 : vector<8x3072xf32> to vector<8x3072xbf16>
    %cst_8 = arith.constant dense<0.000000e+00> : vector<8x512xf32>
    %10 = tpu.matmul %9, %8, %cst_8 {dimension_numbers = #tpu.dot_dimension_numbers<[1], [0], [0], [1], [0, 0, 1, 1], [], []>} : vector<8x3072xbf16>, vector<3072x512xbf16>, vector<8x512xf32> -> vector<8x512xf32>
    %c0_9 = arith.constant 0 : index
    %c0_10 = arith.constant 0 : index
    %11 = vector.load %arg4[%c0_9, %c0_10] : memref<1x512xf32, #tpu.memory_space<vmem>>, vector<1x512xf32>
    %12 = vector.broadcast %11 : vector<1x512xf32> to vector<8x512xf32>
    %13 = arith.mulf %10, %12 : vector<8x512xf32>
    %c0_11 = arith.constant 0 : index
    %c0_12 = arith.constant 0 : index
    %14 = vector.load %arg5[%c0_11, %c0_12] : memref<1x512xf32, #tpu.memory_space<vmem>>, vector<1x512xf32>
    %15 = vector.broadcast %14 : vector<1x512xf32> to vector<8x512xf32>
    %16 = arith.addf %13, %15 : vector<8x512xf32>
    %cst_13 = arith.constant 0.000000e+00 : f32
    %17 = vector.broadcast %cst_13 : f32 to vector<8x512xf32>
    %18 = arith.maximumf %16, %17 : vector<8x512xf32>
    %19 = arith.truncf %18 : vector<8x512xf32> to vector<8x512xbf16>
    %c0_14 = arith.constant 0 : index
    %c0_15 = arith.constant 0 : index
    %20 = vector.load %arg6[%c0_14, %c0_15] : memref<512x128xbf16, #tpu.memory_space<vmem>>, vector<512x128xbf16>
    %cst_16 = arith.constant dense<0.000000e+00> : vector<8x128xf32>
    %21 = tpu.matmul %19, %20, %cst_16 {dimension_numbers = #tpu.dot_dimension_numbers<[1], [0], [0], [1], [0, 0, 1, 1], [], []>} : vector<8x512xbf16>, vector<512x128xbf16>, vector<8x128xf32> -> vector<8x128xf32>
    %c0_17 = arith.constant 0 : index
    %c0_18 = arith.constant 0 : index
    %22 = vector.load %arg7[%c0_17, %c0_18] : memref<1x128xf32, #tpu.memory_space<vmem>>, vector<1x128xf32>
    %23 = vector.broadcast %22 : vector<1x128xf32> to vector<8x128xf32>
    %24 = arith.addf %21, %23 : vector<8x128xf32>
    %c0_19 = arith.constant 0 : index
    %c0_20 = arith.constant 0 : index
    %25 = vector.load %arg8[%c0_19, %c0_20] : memref<8x128xf32, #tpu.memory_space<vmem>>, vector<8x128xf32>
    tpu.vector_store %arg8[%c0_19, %c0_20], %24 {strides = array<i32>} : memref<8x128xf32, #tpu.memory_space<vmem>>, vector<8x128xf32>,
    return
  }
  func.func @transform_0(%arg0: i32) -> (i32, i32, i32) {
    %c0_i32 = arith.constant 0 : i32
    %c0_i32_0 = arith.constant 0 : i32
    %c0_i32_1 = arith.constant 0 : i32
    return %arg0, %c0_i32, %c0_i32_0 : i32, i32, i32
  }
  func.func @transform_1(%arg0: i32) -> (i32, i32) {
    %c0_i32 = arith.constant 0 : i32
    %c0_i32_0 = arith.constant 0 : i32
    %c0_i32_1 = arith.constant 0 : i32
    return %c0_i32, %c0_i32_0 : i32, i32
  }
  func.func @transform_2(%arg0: i32) -> (i32, i32) {
    %c0_i32 = arith.constant 0 : i32
    %c0_i32_0 = arith.constant 0 : i32
    %c0_i32_1 = arith.constant 0 : i32
    return %c0_i32, %c0_i32_0 : i32, i32
  }
  func.func @transform_3(%arg0: i32) -> (i32, i32) {
    %c0_i32 = arith.constant 0 : i32
    %c0_i32_0 = arith.constant 0 : i32
    %c0_i32_1 = arith.constant 0 : i32
    return %c0_i32, %c0_i32_0 : i32, i32
  }
  func.func @transform_4(%arg0: i32) -> (i32, i32) {
    %c0_i32 = arith.constant 0 : i32
    %c0_i32_0 = arith.constant 0 : i32
    %c0_i32_1 = arith.constant 0 : i32
    return %c0_i32, %c0_i32_0 : i32, i32
  }
  func.func @transform_5(%arg0: i32) -> (i32, i32) {
    %c0_i32 = arith.constant 0 : i32
    %c0_i32_0 = arith.constant 0 : i32
    %c0_i32_1 = arith.constant 0 : i32
    return %c0_i32, %c0_i32_0 : i32, i32
  }
  func.func @transform_6(%arg0: i32) -> (i32, i32) {
    %c0_i32 = arith.constant 0 : i32
    %c0_i32_0 = arith.constant 0 : i32
    %c0_i32_1 = arith.constant 0 : i32
    return %c0_i32, %c0_i32_0 : i32, i32
  }
  func.func @transform_7(%arg0: i32) -> (i32, i32) {
    %c0_i32 = arith.constant 0 : i32
    %c0_i32_0 = arith.constant 0 : i32
    return %arg0, %c0_i32 : i32, i32
  }
}

</mosaic_0001>

<llo_original>
// kernel: combined_model_forward.1
$region0: #{combined_model_forward.1}
  #allocation0 [shape = 'u32[]', space=smem, size = 0x4, offset = 0x4, fixed_abs, tag = 'smem constant byte address 0x4 - core index']
  #allocation1 [shape = 'u32[144,128]{1,0:T(1,128)}', space=vmem, size = 0x12000, scoped, tag = 'internal scratch']
  %s0 = inlined_call_operand.vmem [shape: f32[8,4,256], index: 0, kind: input, shape index: {}]
  %s1 = inlined_call_operand.hbm [shape: bf16[4,3072], index: 1, kind: input, shape index: {}]
  %s2 = inlined_call_operand.hbm [shape: s8[3072,512], index: 2, kind: input, shape index: {}]
  %s3 = inlined_call_operand.hbm [shape: f32[1,512], index: 3, kind: input, shape index: {}]
  %s4 = inlined_call_operand.hbm [shape: f32[1,512], index: 4, kind: input, shape index: {}]
  %s5 = inlined_call_operand.hbm [shape: bf16[512,128], index: 5, kind: input, shape index: {}]
  %s6 = inlined_call_operand.hbm [shape: f32[1,128], index: 6, kind: input, shape index: {}]
  %s7 = inlined_call_operand.vmem [shape: f32[8,128], index: 7, kind: output, shape index: {}]
  %s8 = sld [smem:[#allocation0]]
  $region62: #{combined_model_forward.1} parent=0
    _
  %s10 = ssub.s32 1, %s8
  %s11 = scalar_select 0, %s10, %s8
  $region1: #{combined_model_forward.1} parent=0
    #allocation2 [shape = 'u8[24576]{0}', space=vmem, size = 0x6000, scoped, tag = 'input window, operand 1, single buffered']
    #allocation3 [shape = 's32[1]{0}', space=sflag, size = 0x4, scoped, tag = 'scoped memory for combined_model_forward.1']
    #allocation4 [shape = 'u8[1572864]{0}', space=vmem, size = 0x180000, scoped, tag = 'input window, operand 2, single buffered']
    #allocation5 [shape = 's32[1]{0}', space=sflag, size = 0x4, scoped, tag = 'scoped memory for combined_model_forward.1']
    #allocation6 [shape = 'u8[2048]{0}', space=vmem, size = 0x800, scoped, tag = 'input window, operand 3, single buffered']
    #allocation7 [shape = 'u8[2048]{0}', space=vmem, size = 0x800, scoped, tag = 'input window, operand 4, single buffered']
    #allocation8 [shape = 's32[1]{0}', space=sflag, size = 0x4, scoped, tag = 'scoped memory for combined_model_forward.1']
    #allocation9 [shape = 'u8[131072]{0}', space=vmem, size = 0x20000, scoped, tag = 'input window, operand 5, single buffered']
    #allocation10 [shape = 'u8[512]{0}', space=vmem, size = 0x400, scoped, tag = 'input window, operand 6, single buffered']
    #allocation11 [shape = 's32[1]{0}', space=sflag, size = 0x4, scoped, tag = 'scoped memory for combined_model_forward.1']
    %12 = vsyncpa [#allocation3], 0
    %13 = vsyncpa [#allocation5], 0
    %14 = vsyncpa [#allocation8], 0
    %15 = vsyncpa [#allocation11], 0
    // Predicated region
    $region2: #{combined_model_forward.1} parent=1 // pred_check
      _
    $region3: #{combined_model_forward.1} parent=1 // pred_check_branch
      %17 = sbr.rel (0) target = $region5
    $region4: #{combined_model_forward.1} parent=1 // pred_region
      _
    $region5: #{combined_model_forward.1} parent=1 // pred_fallthru
      _
    // Predicated region
    $region6: #{combined_model_forward.1} parent=1 // pred_check
      _
    $region7: #{combined_model_forward.1} parent=1 // pred_check_branch
      %19 = sbr.rel (0) target = $region9
    $region8: #{combined_model_forward.1} parent=1 // pred_region
      %s21 = ssub.s32 768, 768
      %22 = vsyncadd [#allocation3], %s21
      %s24 = sshll.u32 [#allocation2], 4
      %s25 = int_to_ptr.vmem [resolvable:$true] %s24
      %27 = dma.hbm_to_vmem [thread:$0]  %s1, 768, %s25, [#allocation3]
    $region9: #{combined_model_forward.1} parent=1 // pred_fallthru
      _
    // Predicated region
    $region10: #{combined_model_forward.1} parent=1 // pred_check
      _
    $region11: #{combined_model_forward.1} parent=1 // pred_check_branch
      %29 = sbr.rel (0) target = $region13
    $region12: #{combined_model_forward.1} parent=1 // pred_region
      %s31 = ssub.s32 49152, 49152
      %32 = vsyncadd [#allocation5], %s31
      %s33 = sshll.u32 [#allocation4], 4
      %s34 = int_to_ptr.vmem [resolvable:$true] %s33
      %39 = dma.hbm_to_vmem [thread:$0]  %s2, 49152, %s34, [#allocation5], 512, 512, 32
    $region13: #{combined_model_forward.1} parent=1 // pred_fallthru
      _
    // Predicated region
    $region14: #{combined_model_forward.1} parent=1 // pred_check
      _
    $region15: #{combined_model_forward.1} parent=1 // pred_check_branch
      %41 = sbr.rel (0) target = $region17
    $region16: #{combined_model_forward.1} parent=1 // pred_region
      %s43 = ssub.s32 64, 64
      %44 = vsyncadd [#allocation5], %s43
      %s46 = sshll.u32 [#allocation6], 4
      %s47 = int_to_ptr.vmem [resolvable:$true] %s46
      %49 = dma.hbm_to_vmem [thread:$0]  %s3, 64, %s47, [#allocation5]
    $region17: #{combined_model_forward.1} parent=1 // pred_fallthru
      _
    // Predicated region
    $region18: #{combined_model_forward.1} parent=1 // pred_check
      _
    $region19: #{combined_model_forward.1} parent=1 // pred_check_branch
      %51 = sbr.rel (0) target = $region21
    $region20: #{combined_model_forward.1} parent=1 // pred_region
      %s53 = ssub.s32 64, 64
      %54 = vsyncadd [#allocation8], %s53
      %s56 = sshll.u32 [#allocation7], 4
      %s57 = int_to_ptr.vmem [resolvable:$true] %s56
      %59 = dma.hbm_to_vmem [thread:$0]  %s4, 64, %s57, [#allocation8]
    $region21: #{combined_model_forward.1} parent=1 // pred_fallthru
      _
    // Predicated region
    $region22: #{combined_model_forward.1} parent=1 // pred_check
      _
    $region23: #{combined_model_forward.1} parent=1 // pred_check_branch
      %61 = sbr.rel (0) target = $region25
    $region24: #{combined_model_forward.1} parent=1 // pred_region
      %s63 = ssub.s32 4096, 4096
      %64 = vsyncadd [#allocation8], %s63
      %s65 = sshll.u32 [#allocation9], 4
      %s66 = int_to_ptr.vmem [resolvable:$true] %s65
      %71 = dma.hbm_to_vmem [thread:$0]  %s5, 4096, %s66, [#allocation8], 64, 64, 4
    $region25: #{combined_model_forward.1} parent=1 // pred_fallthru
      _
    // Predicated region
    $region26: #{combined_model_forward.1} parent=1 // pred_check
      _
    $region27: #{combined_model_forward.1} parent=1 // pred_check_branch
      %73 = sbr.rel (0) target = $region29
    $region28: #{combined_model_forward.1} parent=1 // pred_region
      %s75 = ssub.s32 16, 16
      %76 = vsyncadd [#allocation11], %s75
      %s78 = sshll.u32 [#allocation10], 4
      %s79 = int_to_ptr.vmem [resolvable:$true] %s78
      %81 = dma.hbm_to_vmem [thread:$0]  %s6, 16, %s79, [#allocation11]
    $region29: #{combined_model_forward.1} parent=1 // pred_fallthru
      _
    // Predicated region
    $region30: #{combined_model_forward.1} parent=1 // pred_check
      _
    $region31: #{combined_model_forward.1} parent=1 // pred_check_branch
      %83 = sbr.rel (0) target = $region33
    $region32: #{combined_model_forward.1} parent=1 // pred_region
      %84 = dma.done [#allocation3], 768
    $region33: #{combined_model_forward.1} parent=1 // pred_fallthru
      _
    // Predicated region
    $region34: #{combined_model_forward.1} parent=1 // pred_check
      _
    $region35: #{combined_model_forward.1} parent=1 // pred_check_branch
      %86 = sbr.rel (0) target = $region37
    $region36: #{combined_model_forward.1} parent=1 // pred_region
      %87 = dma.done [#allocation5], 49152
    $region37: #{combined_model_forward.1} parent=1 // pred_fallthru
      _
    // Predicated region
    $region38: #{combined_model_forward.1} parent=1 // pred_check
      _
    $region39: #{combined_model_forward.1} parent=1 // pred_check_branch
      %89 = sbr.rel (0) target = $region41
    $region40: #{combined_model_forward.1} parent=1 // pred_region
      %90 = dma.done [#allocation5], 64
    $region41: #{combined_model_forward.1} parent=1 // pred_fallthru
      _
    // Predicated region
    $region42: #{combined_model_forward.1} parent=1 // pred_check
      _
    $region43: #{combined_model_forward.1} parent=1 // pred_check_branch
      %92 = sbr.rel (0) target = $region45
    $region44: #{combined_model_forward.1} parent=1 // pred_region
      %93 = dma.done [#allocation8], 64
    $region45: #{combined_model_forward.1} parent=1 // pred_fallthru
      _
    // Predicated region
    $region46: #{combined_model_forward.1} parent=1 // pred_check
      _
    $region47: #{combined_model_forward.1} parent=1 // pred_check_branch
      %95 = sbr.rel (0) target = $region49
    $region48: #{combined_model_forward.1} parent=1 // pred_region
      %96 = dma.done [#allocation8], 4096
    $region49: #{combined_model_forward.1} parent=1 // pred_fallthru
      _
    // Predicated region
    $region50: #{combined_model_forward.1} parent=1 // pred_check
      _
    $region51: #{combined_model_forward.1} parent=1 // pred_check_branch
      %98 = sbr.rel (0) target = $region53
    $region52: #{combined_model_forward.1} parent=1 // pred_region
      %99 = dma.done [#allocation11], 16
    $region53: #{combined_model_forward.1} parent=1 // pred_fallthru
      _
    %v101 = vld [vmem:[%s0] sm:$0xff]
    %v102 = vld [vmem:[%s0 + $0x8] sm:$0xff]
    %v103 = vld [vmem:[%s0 + $0x10] sm:$0xff]
    %v104 = vld [vmem:[%s0 + $0x18] sm:$0xff]
    %v105 = vld [vmem:[%s0 + $0x20] sm:$0xff]
    %v106 = vld [vmem:[%s0 + $0x28] sm:$0xff]
    %v107 = vld [vmem:[%s0 + $0x30] sm:$0xff]
    %v108 = vld [vmem:[%s0 + $0x38] sm:$0xff]
    %v117 = vcombine.high %v101, %v101
    %v118 = vcombine.high %v102, %v102
    %v119 = vcombine.high %v103, %v103
    %v120 = vcombine.high %v104, %v104
    %v121 = vcombine.high %v105, %v105
    %v122 = vcombine.high %v106, %v106
    %v123 = vcombine.high %v107, %v107
    %v124 = vcombine.high %v108, %v108
    %vm133 = vcmask 1043456
    %v134 = vsel %vm133, %v101, 0.0
    %v135 = vsel %vm133, %v117, 0.0
    %v136 = vadd.f32 %v134, %v135
    %137 = vadd.xlane.f32.xlu0 %v136
    %v138 = vpop.xlane.xlu0 %137
    %v139 = vsel %vm133, %v102, 0.0
    %v140 = vsel %vm133, %v118, 0.0
    %v141 = vadd.f32 %v139, %v140
    %142 = vadd.xlane.f32.xlu0 %v141
    %v143 = vpop.xlane.xlu0 %142
    %v144 = vsel %vm133, %v103, 0.0
    %v145 = vsel %vm133, %v119, 0.0
    %v146 = vadd.f32 %v144, %v145
    %147 = vadd.xlane.f32.xlu0 %v146
    %v148 = vpop.xlane.xlu0 %147
    %v149 = vsel %vm133, %v104, 0.0
    %v150 = vsel %vm133, %v120, 0.0
    %v151 = vadd.f32 %v149, %v150
    %152 = vadd.xlane.f32.xlu0 %v151
    %v153 = vpop.xlane.xlu0 %152
    %v154 = vsel %vm133, %v105, 0.0
    %v155 = vsel %vm133, %v121, 0.0
    %v156 = vadd.f32 %v154, %v155
    %157 = vadd.xlane.f32.xlu0 %v156
    %v158 = vpop.xlane.xlu0 %157
    %v159 = vsel %vm133, %v106, 0.0
    %v160 = vsel %vm133, %v122, 0.0
    %v161 = vadd.f32 %v159, %v160
    %162 = vadd.xlane.f32.xlu0 %v161
    %v163 = vpop.xlane.xlu0 %162
    %v164 = vsel %vm133, %v107, 0.0
    %v165 = vsel %vm133, %v123, 0.0
    %v166 = vadd.f32 %v164, %v165
    %167 = vadd.xlane.f32.xlu0 %v166
    %v168 = vpop.xlane.xlu0 %167
    %v169 = vsel %vm133, %v108, 0.0
    %v170 = vsel %vm133, %v124, 0.0
    %v171 = vadd.f32 %v169, %v170
    %172 = vadd.xlane.f32.xlu0 %v171
    %v173 = vpop.xlane.xlu0 %172
    %v174 = vpack.c.bf16 %v138, %v138
    %v175 = vpack.c.bf16 %v143, %v143
    %v176 = vpack.c.bf16 %v148, %v148
    %v177 = vpack.c.bf16 %v153, %v153
    %v178 = vpack.c.bf16 %v158, %v158
    %v179 = vpack.c.bf16 %v163, %v163
    %v180 = vpack.c.bf16 %v168, %v168
    %v181 = vpack.c.bf16 %v173, %v173
    %v182 = vld [vmem:[#allocation2] sm:$0xff]
    %v183 = vld [vmem:[#allocation2 + $0x8] sm:$0xff]
    %v184 = vld [vmem:[#allocation2 + $0x10] sm:$0xff]
    %v185 = vld [vmem:[#allocation2 + $0x18] sm:$0xff]
    %v186 = vld [vmem:[#allocation2 + $0x20] sm:$0xff]
    %v187 = vld [vmem:[#allocation2 + $0x28] sm:$0xff]
    %v196 = vunpack.c.l.b16 %v174
    %v197 = vunpack.c.l.b16 %v175
    %v198 = vunpack.c.l.b16 %v176
    %v199 = vunpack.c.l.b16 %v177
    %v200 = vunpack.c.l.b16 %v178
    %v201 = vunpack.c.l.b16 %v179
    %v202 = vunpack.c.l.b16 %v180
    %v203 = vunpack.c.l.b16 %v181
    %v204 = vlaneseq
    %v205 = vand.u32 %v204, 127
    %v206 = vlaneseq
    %v207 = vshrl.u32 %v206, 7
    %v208 = vsub.s32 %v205, %v207
    %v209 = vrot.slane %v196, %v208
    %v210 = vlaneseq
    %v211 = vshrl.u32 %v210, 7
    %v212 = vsub.s32 %v205, %v211
    %v213 = vrot.slane %v197, %v212
    %v214 = vlaneseq
    %v215 = vshrl.u32 %v214, 7
    %v216 = vsub.s32 %v205, %v215
    %v217 = vrot.slane %v198, %v216
    %v218 = vlaneseq
    %v219 = vshrl.u32 %v218, 7
    %v220 = vsub.s32 %v205, %v219
    %v221 = vrot.slane %v199, %v220
    %v222 = vlaneseq
    %v223 = vshrl.u32 %v222, 7
    %v224 = vsub.s32 %v205, %v223
    %v225 = vrot.slane %v200, %v224
    %v226 = vlaneseq
    %v227 = vshrl.u32 %v226, 7
    %v228 = vsub.s32 %v205, %v227
    %v229 = vrot.slane %v201, %v228
    %v230 = vlaneseq
    %v231 = vshrl.u32 %v230, 7
    %v232 = vsub.s32 %v205, %v231
    %v233 = vrot.slane %v202, %v232
    %v234 = vlaneseq
    %v235 = vshrl.u32 %v234, 7
    %v236 = vsub.s32 %v205, %v235
    %v237 = vrot.slane %v203, %v236
    %vm238 = vcmask 1041409
    %v239 = vsel %vm238, %v213, %v209
    %vm240 = vcmask 1042434
    %v241 = vsel %vm240, %v217, %v239
    %vm242 = vcmask 1043459
    %v243 = vsel %vm242, %v221, %v241
    %vm244 = vcmask 1044484
    %v245 = vsel %vm244, %v225, %v243
    %vm246 = vcmask 1045509
    %v247 = vsel %vm246, %v229, %v245
    %vm248 = vcmask 1046534
    %v249 = vsel %vm248, %v233, %v247
    %vm250 = vcmask 1047559
    %v251 = vsel %vm250, %v237, %v249
    %v252 = vpack.c.b16 %v251, %v251
    %v259 = vcombine.high %v182, %v182
    %v261 = vunpack.c.l.s4 1983009808
    %v262 = vunpack.c.0.s8 %v261
    %v263 = vlaneseq
    %v264 = vshrl.u32 %v263, 7
    %v265 = vsub.s32 %v262, %v264
    %v266 = vrot.slane %v182, %v265
    %v268 = vunpack.c.l.s4 1983009808
    %v269 = vunpack.c.0.s8 %v268
    %v270 = vlaneseq
    %v271 = vshrl.u32 %v270, 7
    %v272 = vsub.s32 %v269, %v271
    %v273 = vrot.slane %v259, %v272
    %v274 = vcombine.high %v266, %v266
    %v275 = vcombine.high %v273, %v273
    %v276 = vcombine.high %v183, %v183
    %v278 = vunpack.c.l.s4 1983009808
    %v279 = vunpack.c.0.s8 %v278
    %v280 = vlaneseq
    %v281 = vshrl.u32 %v280, 7
    %v282 = vsub.s32 %v279, %v281
    %v283 = vrot.slane %v183, %v282
    %v285 = vunpack.c.l.s4 1983009808
    %v286 = vunpack.c.0.s8 %v285
    %v287 = vlaneseq
    %v288 = vshrl.u32 %v287, 7
    %v289 = vsub.s32 %v286, %v288
    %v290 = vrot.slane %v276, %v289
    %v291 = vcombine.high %v283, %v283
    %v292 = vcombine.high %v290, %v290
    %v293 = vcombine.high %v184, %v184
    %v295 = vunpack.c.l.s4 1983009808
    %v296 = vunpack.c.0.s8 %v295
    %v297 = vlaneseq
    %v298 = vshrl.u32 %v297, 7
    %v299 = vsub.s32 %v296, %v298
    %v300 = vrot.slane %v184, %v299
    %v302 = vunpack.c.l.s4 1983009808
    %v303 = vunpack.c.0.s8 %v302
    %v304 = vlaneseq
    %v305 = vshrl.u32 %v304, 7
    %v306 = vsub.s32 %v303, %v305
    %v307 = vrot.slane %v293, %v306
    %v308 = vcombine.high %v300, %v300
    %v309 = vcombine.high %v307, %v307
    %v310 = vcombine.high %v185, %v185
    %v312 = vunpack.c.l.s4 1983009808
    %v313 = vunpack.c.0.s8 %v312
    %v314 = vlaneseq
    %v315 = vshrl.u32 %v314, 7
    %v316 = vsub.s32 %v313, %v315
    %v317 = vrot.slane %v185, %v316
    %v319 = vunpack.c.l.s4 1983009808
    %v320 = vunpack.c.0.s8 %v319
    %v321 = vlaneseq
    %v322 = vshrl.u32 %v321, 7
    %v323 = vsub.s32 %v320, %v322
    %v324 = vrot.slane %v310, %v323
    %v325 = vcombine.high %v317, %v317
    %v326 = vcombine.high %v324, %v324
    %v327 = vcombine.high %v186, %v186
    %v329 = vunpack.c.l.s4 1983009808
    %v330 = vunpack.c.0.s8 %v329
    %v331 = vlaneseq
    %v332 = vshrl.u32 %v331, 7
    %v333 = vsub.s32 %v330, %v332
    %v334 = vrot.slane %v186, %v333
    %v336 = vunpack.c.l.s4 1983009808
    %v337 = vunpack.c.0.s8 %v336
    %v338 = vlaneseq
    %v339 = vshrl.u32 %v338, 7
    %v340 = vsub.s32 %v337, %v339
    %v341 = vrot.slane %v327, %v340
    %v342 = vcombine.high %v334, %v334
    %v343 = vcombine.high %v341, %v341
    %v344 = vcombine.high %v187, %v187
    %v346 = vunpack.c.l.s4 1983009808
    %v347 = vunpack.c.0.s8 %v346
    %v348 = vlaneseq
    %v349 = vshrl.u32 %v348, 7
    %v350 = vsub.s32 %v347, %v349
    %v351 = vrot.slane %v187, %v350
    %v353 = vunpack.c.l.s4 1983009808
    %v354 = vunpack.c.0.s8 %v353
    %v355 = vlaneseq
    %v356 = vshrl.u32 %v355, 7
    %v357 = vsub.s32 %v354, %v356
    %v358 = vrot.slane %v344, %v357
    %v359 = vcombine.high %v351, %v351
    %v360 = vcombine.high %v358, %v358
    %vm361 = vcmask 31744
    %v363 = vsel %vm361, %v252, 0
    %vm365 = vcmask 1041408
    %v367 = vsel %vm365, %v266, 0
    %v370 = vsel %vm365, %v274, 0
    %v373 = vsel %vm365, %v273, 0
    %v376 = vsel %vm365, %v275, 0
    %v379 = vsel %vm365, %v283, 0
    %v382 = vsel %vm365, %v291, 0
    %v385 = vsel %vm365, %v290, 0
    %v388 = vsel %vm365, %v292, 0
    %v391 = vsel %vm365, %v300, 0
    %v394 = vsel %vm365, %v308, 0
    %v397 = vsel %vm365, %v307, 0
    %v400 = vsel %vm365, %v309, 0
    %v403 = vsel %vm365, %v317, 0
    %v406 = vsel %vm365, %v325, 0
    %v409 = vsel %vm365, %v324, 0
    %v412 = vsel %vm365, %v326, 0
    %v415 = vsel %vm365, %v334, 0
    %v418 = vsel %vm365, %v342, 0
    %v421 = vsel %vm365, %v341, 0
    %v424 = vsel %vm365, %v343, 0
    %v427 = vsel %vm365, %v351, 0
    %v430 = vsel %vm365, %v359, 0
    %v433 = vsel %vm365, %v358, 0
    %v436 = vsel %vm365, %v360, 0
    %438 = vmatprep.subr.bf16.mxu0 0
    %439 = vmatpush1.bf16.msra.mxu0 0
    %440 = vmatprep.subr.bf16.mxu0 0
    %441 = vmatpush1.bf16.msra.mxu0 0
    %442 = vmatprep.subr.bf16.mxu0 0
    %443 = vmatpush1.bf16.msra.mxu0 0
    %444 = vmatprep.subr.bf16.mxu0 0
    %445 = vmatpush1.bf16.msra.mxu0 0
    %446 = vmatprep.subr.bf16.mxu0 0
    %447 = vmatpush1.bf16.msra.mxu0 0
    %448 = vmatprep.subr.bf16.mxu0 0
    %449 = vmatpush1.bf16.msra.mxu0 0
    %450 = vmatprep.subr.bf16.mxu0 0
    %451 = vmatpush1.bf16.msra.mxu0 0
    %452 = vmatprep.subr.bf16.mxu0 %v370
    %453 = vmatpush1.bf16.msra.mxu0 %v367
    %454 = vmatprep.subr.bf16.mxu0 0
    %455 = vmatpush2.bf16.msra.mxu0 0
    %456 = vmatprep.subr.bf16.mxu0 0
    %457 = vmatpush2.bf16.msra.mxu0 0
    %458 = vmatprep.subr.bf16.mxu0 0
    %459 = vmatpush2.bf16.msra.mxu0 0
    %460 = vmatprep.subr.bf16.mxu0 0
    %461 = vmatpush2.bf16.msra.mxu0 0
    %462 = vmatprep.subr.bf16.mxu0 0
    %463 = vmatpush2.bf16.msra.mxu0 0
    %464 = vmatprep.subr.bf16.mxu0 0
    %465 = vmatpush2.bf16.msra.mxu0 0
    %466 = vmatprep.subr.bf16.mxu0 0
    %467 = vmatpush2.bf16.msra.mxu0 0
    %468 = vmatprep.subr.bf16.mxu0 0
    %469 = vmatpush2.bf16.msra.mxu0 0
    %470 = vmatprep.mubr.bf16.mxu0 0
    %471 = vmatmul.mubr.bf16.gmra.mxu0 %v363
    %v472 = vpop.f32.mrf.mxu0
    %v473 = vadd.f32 0.0, %v472
    %v474 = vpop.f32.mrf.mxu0
    %v475 = vadd.f32 0.0, %v474
    %v476 = vpop.f32.mrf.mxu0
    %v477 = vpop.f32.mrf.mxu0
    %478 = vdwg.mxu0
    %479 = vmatprep.subr.bf16.mxu0 0
    %480 = vmatpush1.bf16.msra.mxu0 0
    %481 = vmatprep.subr.bf16.mxu0 0
    %482 = vmatpush1.bf16.msra.mxu0 0
    %483 = vmatprep.subr.bf16.mxu0 0
    %484 = vmatpush1.bf16.msra.mxu0 0
    %485 = vmatprep.subr.bf16.mxu0 0
    %486 = vmatpush1.bf16.msra.mxu0 0
    %487 = vmatprep.subr.bf16.mxu0 0
    %488 = vmatpush1.bf16.msra.mxu0 0
    %489 = vmatprep.subr.bf16.mxu0 0
    %490 = vmatpush1.bf16.msra.mxu0 0
    %491 = vmatprep.subr.bf16.mxu0 0
    %492 = vmatpush1.bf16.msra.mxu0 0
    %493 = vmatprep.subr.bf16.mxu0 %v376
    %494 = vmatpush1.bf16.msra.mxu0 %v373
    %495 = vmatprep.subr.bf16.mxu0 0
    %496 = vmatpush2.bf16.msra.mxu0 0
    %497 = vmatprep.subr.bf16.mxu0 0
    %498 = vmatpush2.bf16.msra.mxu0 0
    %499 = vmatprep.subr.bf16.mxu0 0
    %500 = vmatpush2.bf16.msra.mxu0 0
    %501 = vmatprep.subr.bf16.mxu0 0
    %502 = vmatpush2.bf16.msra.mxu0 0
    %503 = vmatprep.subr.bf16.mxu0 0
    %504 = vmatpush2.bf16.msra.mxu0 0
    %505 = vmatprep.subr.bf16.mxu0 0
    %506 = vmatpush2.bf16.msra.mxu0 0
    %507 = vmatprep.subr.bf16.mxu0 0
    %508 = vmatpush2.bf16.msra.mxu0 0
    %509 = vmatprep.subr.bf16.mxu0 0
    %510 = vmatpush2.bf16.msra.mxu0 0
    %511 = vmatprep.mubr.bf16.mxu0 0
    %512 = vmatmul.mubr.bf16.gmra.mxu0 %v363
    %v513 = vpop.f32.mrf.mxu0
    %v514 = vadd.f32 0.0, %v513
    %v515 = vpop.f32.mrf.mxu0
    %v516 = vadd.f32 0.0, %v515
    %v517 = vpop.f32.mrf.mxu0
    %v518 = vpop.f32.mrf.mxu0
    %519 = vdwg.mxu0
    %520 = vmatprep.subr.bf16.mxu0 0
    %521 = vmatpush1.bf16.msra.mxu0 0
    %522 = vmatprep.subr.bf16.mxu0 0
    %523 = vmatpush1.bf16.msra.mxu0 0
    %524 = vmatprep.subr.bf16.mxu0 0
    %525 = vmatpush1.bf16.msra.mxu0 0
    %526 = vmatprep.subr.bf16.mxu0 0
    %527 = vmatpush1.bf16.msra.mxu0 0
    %528 = vmatprep.subr.bf16.mxu0 0
    %529 = vmatpush1.bf16.msra.mxu0 0
    %530 = vmatprep.subr.bf16.mxu0 0
    %531 = vmatpush1.bf16.msra.mxu0 0
    %532 = vmatprep.subr.bf16.mxu0 0
    %533 = vmatpush1.bf16.msra.mxu0 0
    %534 = vmatprep.subr.bf16.mxu0 %v382
    %535 = vmatpush1.bf16.msra.mxu0 %v379
    %536 = vmatprep.subr.bf16.mxu0 0
    %537 = vmatpush2.bf16.msra.mxu0 0
    %538 = vmatprep.subr.bf16.mxu0 0
    %539 = vmatpush2.bf16.msra.mxu0 0
    %540 = vmatprep.subr.bf16.mxu0 0
    %541 = vmatpush2.bf16.msra.mxu0 0
    %542 = vmatprep.subr.bf16.mxu0 0
    %543 = vmatpush2.bf16.msra.mxu0 0
    %544 = vmatprep.subr.bf16.mxu0 0
    %545 = vmatpush2.bf16.msra.mxu0 0
    %546 = vmatprep.subr.bf16.mxu0 0
    %547 = vmatpush2.bf16.msra.mxu0 0
    %548 = vmatprep.subr.bf16.mxu0 0
    %549 = vmatpush2.bf16.msra.mxu0 0
    %550 = vmatprep.subr.bf16.mxu0 0
    %551 = vmatpush2.bf16.msra.mxu0 0
    %552 = vmatprep.mubr.bf16.mxu0 0
    %553 = vmatmul.mubr.bf16.gmra.mxu0 %v363
    %v554 = vpop.f32.mrf.mxu0
    %v555 = vadd.f32 0.0, %v554
    %v556 = vpop.f32.mrf.mxu0
    %v557 = vadd.f32 0.0, %v556
    %v558 = vpop.f32.mrf.mxu0
    %v559 = vpop.f32.mrf.mxu0
    %560 = vdwg.mxu0
    %561 = vmatprep.subr.bf16.mxu0 0
    %562 = vmatpush1.bf16.msra.mxu0 0
    %563 = vmatprep.subr.bf16.mxu0 0
    %564 = vmatpush1.bf16.msra.mxu0 0
    %565 = vmatprep.subr.bf16.mxu0 0
    %566 = vmatpush1.bf16.msra.mxu0 0
    %567 = vmatprep.subr.bf16.mxu0 0
    %568 = vmatpush1.bf16.msra.mxu0 0
    %569 = vmatprep.subr.bf16.mxu0 0
    %570 = vmatpush1.bf16.msra.mxu0 0
    %571 = vmatprep.subr.bf16.mxu0 0
    %572 = vmatpush1.bf16.msra.mxu0 0
    %573 = vmatprep.subr.bf16.mxu0 0
    %574 = vmatpush1.bf16.msra.mxu0 0
    %575 = vmatprep.subr.bf16.mxu0 %v388
    %576 = vmatpush1.bf16.msra.mxu0 %v385
    %577 = vmatprep.subr.bf16.mxu0 0
    %578 = vmatpush2.bf16.msra.mxu0 0
    %579 = vmatprep.subr.bf16.mxu0 0
    %580 = vmatpush2.bf16.msra.mxu0 0
    %581 = vmatprep.subr.bf16.mxu0 0
    %582 = vmatpush2.bf16.msra.mxu0 0
    %583 = vmatprep.subr.bf16.mxu0 0
    %584 = vmatpush2.bf16.msra.mxu0 0
    %585 = vmatprep.subr.bf16.mxu0 0
    %586 = vmatpush2.bf16.msra.mxu0 0
    %587 = vmatprep.subr.bf16.mxu0 0
    %588 = vmatpush2.bf16.msra.mxu0 0
    %589 = vmatprep.subr.bf16.mxu0 0
    %590 = vmatpush2.bf16.msra.mxu0 0
    %591 = vmatprep.subr.bf16.mxu0 0
    %592 = vmatpush2.bf16.msra.mxu0 0
    %593 = vmatprep.mubr.bf16.mxu0 0
    %594 = vmatmul.mubr.bf16.gmra.mxu0 %v363
    %v595 = vpop.f32.mrf.mxu0
    %v596 = vadd.f32 0.0, %v595
    %v597 = vpop.f32.mrf.mxu0
    %v598 = vadd.f32 0.0, %v597
    %v599 = vpop.f32.mrf.mxu0
    %v600 = vpop.f32.mrf.mxu0
    %601 = vdwg.mxu0
    %602 = vmatprep.subr.bf16.mxu0 0
    %603 = vmatpush1.bf16.msra.mxu0 0
    %604 = vmatprep.subr.bf16.mxu0 0
    %605 = vmatpush1.bf16.msra.mxu0 0
    %606 = vmatprep.subr.bf16.mxu0 0
    %607 = vmatpush1.bf16.msra.mxu0 0
    %608 = vmatprep.subr.bf16.mxu0 0
    %609 = vmatpush1.bf16.msra.mxu0 0
    %610 = vmatprep.subr.bf16.mxu0 0
    %611 = vmatpush1.bf16.msra.mxu0 0
    %612 = vmatprep.subr.bf16.mxu0 0
    %613 = vmatpush1.bf16.msra.mxu0 0
    %614 = vmatprep.subr.bf16.mxu0 0
    %615 = vmatpush1.bf16.msra.mxu0 0
    %616 = vmatprep.subr.bf16.mxu0 %v394
    %617 = vmatpush1.bf16.msra.mxu0 %v391
    %618 = vmatprep.subr.bf16.mxu0 0
    %619 = vmatpush2.bf16.msra.mxu0 0
    %620 = vmatprep.subr.bf16.mxu0 0
    %621 = vmatpush2.bf16.msra.mxu0 0
    %622 = vmatprep.subr.bf16.mxu0 0
    %623 = vmatpush2.bf16.msra.mxu0 0
    %624 = vmatprep.subr.bf16.mxu0 0
    %625 = vmatpush2.bf16.msra.mxu0 0
    %626 = vmatprep.subr.bf16.mxu0 0
    %627 = vmatpush2.bf16.msra.mxu0 0
    %628 = vmatprep.subr.bf16.mxu0 0
    %629 = vmatpush2.bf16.msra.mxu0 0
    %630 = vmatprep.subr.bf16.mxu0 0
    %631 = vmatpush2.bf16.msra.mxu0 0
    %632 = vmatprep.subr.bf16.mxu0 0
    %633 = vmatpush2.bf16.msra.mxu0 0
    %634 = vmatprep.mubr.bf16.mxu0 0
    %635 = vmatmul.mubr.bf16.gmra.mxu0 %v363
    %v636 = vpop.f32.mrf.mxu0
    %v637 = vadd.f32 0.0, %v636
    %v638 = vpop.f32.mrf.mxu0
    %v639 = vadd.f32 0.0, %v638
    %v640 = vpop.f32.mrf.mxu0
    %v641 = vpop.f32.mrf.mxu0
    %642 = vdwg.mxu0
    %643 = vmatprep.subr.bf16.mxu0 0
    %644 = vmatpush1.bf16.msra.mxu0 0
    %645 = vmatprep.subr.bf16.mxu0 0
    %646 = vmatpush1.bf16.msra.mxu0 0
    %647 = vmatprep.subr.bf16.mxu0 0
    %648 = vmatpush1.bf16.msra.mxu0 0
    %649 = vmatprep.subr.bf16.mxu0 0
    %650 = vmatpush1.bf16.msra.mxu0 0
    %651 = vmatprep.subr.bf16.mxu0 0
    %652 = vmatpush1.bf16.msra.mxu0 0
    %653 = vmatprep.subr.bf16.mxu0 0
    %654 = vmatpush1.bf16.msra.mxu0 0
    %655 = vmatprep.subr.bf16.mxu0 0
    %656 = vmatpush1.bf16.msra.mxu0 0
    %657 = vmatprep.subr.bf16.mxu0 %v400
    %658 = vmatpush1.bf16.msra.mxu0 %v397
    %659 = vmatprep.subr.bf16.mxu0 0
    %660 = vmatpush2.bf16.msra.mxu0 0
    %661 = vmatprep.subr.bf16.mxu0 0
    %662 = vmatpush2.bf16.msra.mxu0 0
    %663 = vmatprep.subr.bf16.mxu0 0
    %664 = vmatpush2.bf16.msra.mxu0 0
    %665 = vmatprep.subr.bf16.mxu0 0
    %666 = vmatpush2.bf16.msra.mxu0 0
    %667 = vmatprep.subr.bf16.mxu0 0
    %668 = vmatpush2.bf16.msra.mxu0 0
    %669 = vmatprep.subr.bf16.mxu0 0
    %670 = vmatpush2.bf16.msra.mxu0 0
    %671 = vmatprep.subr.bf16.mxu0 0
    %672 = vmatpush2.bf16.msra.mxu0 0
    %673 = vmatprep.subr.bf16.mxu0 0
    %674 = vmatpush2.bf16.msra.mxu0 0
    %675 = vmatprep.mubr.bf16.mxu0 0
    %676 = vmatmul.mubr.bf16.gmra.mxu0 %v363
    %v677 = vpop.f32.mrf.mxu0
    %v678 = vadd.f32 0.0, %v677
    %v679 = vpop.f32.mrf.mxu0
    %v680 = vadd.f32 0.0, %v679
    %v681 = vpop.f32.mrf.mxu0
    %v682 = vpop.f32.mrf.mxu0
    %683 = vdwg.mxu0
    %684 = vmatprep.subr.bf16.mxu0 0
    %685 = vmatpush1.bf16.msra.mxu0 0
    %686 = vmatprep.subr.bf16.mxu0 0
    %687 = vmatpush1.bf16.msra.mxu0 0
    %688 = vmatprep.subr.bf16.mxu0 0
    %689 = vmatpush1.bf16.msra.mxu0 0
    %690 = vmatprep.subr.bf16.mxu0 0
    %691 = vmatpush1.bf16.msra.mxu0 0
    %692 = vmatprep.subr.bf16.mxu0 0
    %693 = vmatpush1.bf16.msra.mxu0 0
    %694 = vmatprep.subr.bf16.mxu0 0
    %695 = vmatpush1.bf16.msra.mxu0 0
    %696 = vmatprep.subr.bf16.mxu0 0
    %697 = vmatpush1.bf16.msra.mxu0 0
    %698 = vmatprep.subr.bf16.mxu0 %v406
    %699 = vmatpush1.bf16.msra.mxu0 %v403
    %700 = vmatprep.subr.bf16.mxu0 0
    %701 = vmatpush2.bf16.msra.mxu0 0
    %702 = vmatprep.subr.bf16.mxu0 0
    %703 = vmatpush2.bf16.msra.mxu0 0
    %704 = vmatprep.subr.bf16.mxu0 0
    %705 = vmatpush2.bf16.msra.mxu0 0
    %706 = vmatprep.subr.bf16.mxu0 0
    %707 = vmatpush2.bf16.msra.mxu0 0
    %708 = vmatprep.subr.bf16.mxu0 0
    %709 = vmatpush2.bf16.msra.mxu0 0
    %710 = vmatprep.subr.bf16.mxu0 0
    %711 = vmatpush2.bf16.msra.mxu0 0
    %712 = vmatprep.subr.bf16.mxu0 0
    %713 = vmatpush2.bf16.msra.mxu0 0
    %714 = vmatprep.subr.bf16.mxu0 0
    %715 = vmatpush2.bf16.msra.mxu0 0
    %716 = vmatprep.mubr.bf16.mxu0 0
    %717 = vmatmul.mubr.bf16.gmra.mxu0 %v363
    %v718 = vpop.f32.mrf.mxu0
    %v719 = vadd.f32 0.0, %v718
    %v720 = vpop.f32.mrf.mxu0
    %v721 = vadd.f32 0.0, %v720
    %v722 = vpop.f32.mrf.mxu0
    %v723 = vpop.f32.mrf.mxu0
    %724 = vdwg.mxu0
    %725 = vmatprep.subr.bf16.mxu0 0
    %726 = vmatpush1.bf16.msra.mxu0 0
    %727 = vmatprep.subr.bf16.mxu0 0
    %728 = vmatpush1.bf16.msra.mxu0 0
    %729 = vmatprep.subr.bf16.mxu0 0
    %730 = vmatpush1.bf16.msra.mxu0 0
    %731 = vmatprep.subr.bf16.mxu0 0
    %732 = vmatpush1.bf16.msra.mxu0 0
    %733 = vmatprep.subr.bf16.mxu0 0
    %734 = vmatpush1.bf16.msra.mxu0 0
    %735 = vmatprep.subr.bf16.mxu0 0
    %736 = vmatpush1.bf16.msra.mxu0 0
    %737 = vmatprep.subr.bf16.mxu0 0
    %738 = vmatpush1.bf16.msra.mxu0 0
    %739 = vmatprep.subr.bf16.mxu0 %v412
    %740 = vmatpush1.bf16.msra.mxu0 %v409
    %741 = vmatprep.subr.bf16.mxu0 0
    %742 = vmatpush2.bf16.msra.mxu0 0
    %743 = vmatprep.subr.bf16.mxu0 0
    %744 = vmatpush2.bf16.msra.mxu0 0
    %745 = vmatprep.subr.bf16.mxu0 0
    %746 = vmatpush2.bf16.msra.mxu0 0
    %747 = vmatprep.subr.bf16.mxu0 0
    %748 = vmatpush2.bf16.msra.mxu0 0
    %749 = vmatprep.subr.bf16.mxu0 0
    %750 = vmatpush2.bf16.msra.mxu0 0
    %751 = vmatprep.subr.bf16.mxu0 0
    %752 = vmatpush2.bf16.msra.mxu0 0
    %753 = vmatprep.subr.bf16.mxu0 0
    %754 = vmatpush2.bf16.msra.mxu0 0
    %755 = vmatprep.subr.bf16.mxu0 0
    %756 = vmatpush2.bf16.msra.mxu0 0
    %757 = vmatprep.mubr.bf16.mxu0 0
    %758 = vmatmul.mubr.bf16.gmra.mxu0 %v363
    %v759 = vpop.f32.mrf.mxu0
    %v760 = vadd.f32 0.0, %v759
    %v761 = vpop.f32.mrf.mxu0
    %v762 = vadd.f32 0.0, %v761
    %v763 = vpop.f32.mrf.mxu0
    %v764 = vpop.f32.mrf.mxu0
    %765 = vdwg.mxu0
    %766 = vmatprep.subr.bf16.mxu0 0
    %767 = vmatpush1.bf16.msra.mxu0 0
    %768 = vmatprep.subr.bf16.mxu0 0
    %769 = vmatpush1.bf16.msra.mxu0 0
    %770 = vmatprep.subr.bf16.mxu0 0
    %771 = vmatpush1.bf16.msra.mxu0 0
    %772 = vmatprep.subr.bf16.mxu0 0
    %773 = vmatpush1.bf16.msra.mxu0 0
    %774 = vmatprep.subr.bf16.mxu0 0
    %775 = vmatpush1.bf16.msra.mxu0 0
    %776 = vmatprep.subr.bf16.mxu0 0
    %777 = vmatpush1.bf16.msra.mxu0 0
    %778 = vmatprep.subr.bf16.mxu0 0
    %779 = vmatpush1.bf16.msra.mxu0 0
    %780 = vmatprep.subr.bf16.mxu0 %v418
    %781 = vmatpush1.bf16.msra.mxu0 %v415
    %782 = vmatprep.subr.bf16.mxu0 0
    %783 = vmatpush2.bf16.msra.mxu0 0
    %784 = vmatprep.subr.bf16.mxu0 0
    %785 = vmatpush2.bf16.msra.mxu0 0
    %786 = vmatprep.subr.bf16.mxu0 0
    %787 = vmatpush2.bf16.msra.mxu0 0
    %788 = vmatprep.subr.bf16.mxu0 0
    %789 = vmatpush2.bf16.msra.mxu0 0
    %790 = vmatprep.subr.bf16.mxu0 0
    %791 = vmatpush2.bf16.msra.mxu0 0
    %792 = vmatprep.subr.bf16.mxu0 0
    %793 = vmatpush2.bf16.msra.mxu0 0
    %794 = vmatprep.subr.bf16.mxu0 0
    %795 = vmatpush2.bf16.msra.mxu0 0
    %796 = vmatprep.subr.bf16.mxu0 0
    %797 = vmatpush2.bf16.msra.mxu0 0
    %798 = vmatprep.mubr.bf16.mxu0 0
    %799 = vmatmul.mubr.bf16.gmra.mxu0 %v363
    %v800 = vpop.f32.mrf.mxu0
    %v801 = vadd.f32 0.0, %v800
    %v802 = vpop.f32.mrf.mxu0
    %v803 = vadd.f32 0.0, %v802
    %v804 = vpop.f32.mrf.mxu0
    %v805 = vpop.f32.mrf.mxu0
    %806 = vdwg.mxu0
    %807 = vmatprep.subr.bf16.mxu0 0
    %808 = vmatpush1.bf16.msra.mxu0 0
    %809 = vmatprep.subr.bf16.mxu0 0
    %810 = vmatpush1.bf16.msra.mxu0 0
    %811 = vmatprep.subr.bf16.mxu0 0
    %812 = vmatpush1.bf16.msra.mxu0 0
    %813 = vmatprep.subr.bf16.mxu0 0
    %814 = vmatpush1.bf16.msra.mxu0 0
    %815 = vmatprep.subr.bf16.mxu0 0
    %816 = vmatpush1.bf16.msra.mxu0 0
    %817 = vmatprep.subr.bf16.mxu0 0
    %818 = vmatpush1.bf16.msra.mxu0 0
    %819 = vmatprep.subr.bf16.mxu0 0
    %820 = vmatpush1.bf16.msra.mxu0 0
    %821 = vmatprep.subr.bf16.mxu0 %v424
    %822 = vmatpush1.bf16.msra.mxu0 %v421
    %823 = vmatprep.subr.bf16.mxu0 0
    %824 = vmatpush2.bf16.msra.mxu0 0
    %825 = vmatprep.subr.bf16.mxu0 0
    %826 = vmatpush2.bf16.msra.mxu0 0
    %827 = vmatprep.subr.bf16.mxu0 0
    %828 = vmatpush2.bf16.msra.mxu0 0
    %829 = vmatprep.subr.bf16.mxu0 0
    %830 = vmatpush2.bf16.msra.mxu0 0
    %831 = vmatprep.subr.bf16.mxu0 0
    %832 = vmatpush2.bf16.msra.mxu0 0
    %833 = vmatprep.subr.bf16.mxu0 0
    %834 = vmatpush2.bf16.msra.mxu0 0
    %835 = vmatprep.subr.bf16.mxu0 0
    %836 = vmatpush2.bf16.msra.mxu0 0
    %837 = vmatprep.subr.bf16.mxu0 0
    %838 = vmatpush2.bf16.msra.mxu0 0
    %839 = vmatprep.mubr.bf16.mxu0 0
    %840 = vmatmul.mubr.bf16.gmra.mxu0 %v363
    %v841 = vpop.f32.mrf.mxu0
    %v842 = vadd.f32 0.0, %v841
    %v843 = vpop.f32.mrf.mxu0
    %v844 = vadd.f32 0.0, %v843
    %v845 = vpop.f32.mrf.mxu0
    %v846 = vpop.f32.mrf.mxu0
    %847 = vdwg.mxu0
    %848 = vmatprep.subr.bf16.mxu0 0
    %849 = vmatpush1.bf16.msra.mxu0 0
    %850 = vmatprep.subr.bf16.mxu0 0
    %851 = vmatpush1.bf16.msra.mxu0 0
    %852 = vmatprep.subr.bf16.mxu0 0
    %853 = vmatpush1.bf16.msra.mxu0 0
    %854 = vmatprep.subr.bf16.mxu0 0
    %855 = vmatpush1.bf16.msra.mxu0 0
    %856 = vmatprep.subr.bf16.mxu0 0
    %857 = vmatpush1.bf16.msra.mxu0 0
    %858 = vmatprep.subr.bf16.mxu0 0
    %859 = vmatpush1.bf16.msra.mxu0 0
    %860 = vmatprep.subr.bf16.mxu0 0
    %861 = vmatpush1.bf16.msra.mxu0 0
    %862 = vmatprep.subr.bf16.mxu0 %v430
    %863 = vmatpush1.bf16.msra.mxu0 %v427
    %864 = vmatprep.subr.bf16.mxu0 0
    %865 = vmatpush2.bf16.msra.mxu0 0
    %866 = vmatprep.subr.bf16.mxu0 0
    %867 = vmatpush2.bf16.msra.mxu0 0
    %868 = vmatprep.subr.bf16.mxu0 0
    %869 = vmatpush2.bf16.msra.mxu0 0
    %870 = vmatprep.subr.bf16.mxu0 0
    %871 = vmatpush2.bf16.msra.mxu0 0
    %872 = vmatprep.subr.bf16.mxu0 0
    %873 = vmatpush2.bf16.msra.mxu0 0
    %874 = vmatprep.subr.bf16.mxu0 0
    %875 = vmatpush2.bf16.msra.mxu0 0
    %876 = vmatprep.subr.bf16.mxu0 0
    %877 = vmatpush2.bf16.msra.mxu0 0
    %878 = vmatprep.subr.bf16.mxu0 0
    %879 = vmatpush2.bf16.msra.mxu0 0
    %880 = vmatprep.mubr.bf16.mxu0 0
    %881 = vmatmul.mubr.bf16.gmra.mxu0 %v363
    %v882 = vpop.f32.mrf.mxu0
    %v883 = vadd.f32 0.0, %v882
    %v884 = vpop.f32.mrf.mxu0
    %v885 = vadd.f32 0.0, %v884
    %v886 = vpop.f32.mrf.mxu0
    %v887 = vpop.f32.mrf.mxu0
    %888 = vdwg.mxu0
    %889 = vmatprep.subr.bf16.mxu0 0
    %890 = vmatpush1.bf16.msra.mxu0 0
    %891 = vmatprep.subr.bf16.mxu0 0
    %892 = vmatpush1.bf16.msra.mxu0 0
    %893 = vmatprep.subr.bf16.mxu0 0
    %894 = vmatpush1.bf16.msra.mxu0 0
    %895 = vmatprep.subr.bf16.mxu0 0
    %896 = vmatpush1.bf16.msra.mxu0 0
    %897 = vmatprep.subr.bf16.mxu0 0
    %898 = vmatpush1.bf16.msra.mxu0 0
    %899 = vmatprep.subr.bf16.mxu0 0
    %900 = vmatpush1.bf16.msra.mxu0 0
    %901 = vmatprep.subr.bf16.mxu0 0
    %902 = vmatpush1.bf16.msra.mxu0 0
    %903 = vmatprep.subr.bf16.mxu0 %v436
    %904 = vmatpush1.bf16.msra.mxu0 %v433
    %905 = vmatprep.subr.bf16.mxu0 0
    %906 = vmatpush2.bf16.msra.mxu0 0
    %907 = vmatprep.subr.bf16.mxu0 0
    %908 = vmatpush2.bf16.msra.mxu0 0
    %909 = vmatprep.subr.bf16.mxu0 0
    %910 = vmatpush2.bf16.msra.mxu0 0
    %911 = vmatprep.subr.bf16.mxu0 0
    %912 = vmatpush2.bf16.msra.mxu0 0
    %913 = vmatprep.subr.bf16.mxu0 0
    %914 = vmatpush2.bf16.msra.mxu0 0
    %915 = vmatprep.subr.bf16.mxu0 0
    %916 = vmatpush2.bf16.msra.mxu0 0
    %917 = vmatprep.subr.bf16.mxu0 0
    %918 = vmatpush2.bf16.msra.mxu0 0
    %919 = vmatprep.subr.bf16.mxu0 0
    %920 = vmatpush2.bf16.msra.mxu0 0
    %921 = vmatprep.mubr.bf16.mxu0 0
    %922 = vmatmul.mubr.bf16.gmra.mxu0 %v363
    %v923 = vpop.f32.mrf.mxu0
    %v924 = vadd.f32 0.0, %v923
    %v925 = vpop.f32.mrf.mxu0
    %v926 = vadd.f32 0.0, %v925
    %v927 = vpop.f32.mrf.mxu0
    %v928 = vpop.f32.mrf.mxu0
    %929 = vdwg.mxu0
    %v930 = vmax.f32 %v473, 0.0
    %v931 = vmax.f32 %v475, 0.0
    %v932 = vmax.f32 %v514, 0.0
    %v933 = vmax.f32 %v516, 0.0
    %v934 = vmax.f32 %v555, 0.0
    %v935 = vmax.f32 %v557, 0.0
    %v936 = vmax.f32 %v596, 0.0
    %v937 = vmax.f32 %v598, 0.0
    %v938 = vmax.f32 %v637, 0.0
    %v939 = vmax.f32 %v639, 0.0
    %v940 = vmax.f32 %v678, 0.0
    %v941 = vmax.f32 %v680, 0.0
    %v942 = vmax.f32 %v719, 0.0
    %v943 = vmax.f32 %v721, 0.0
    %v944 = vmax.f32 %v760, 0.0
    %v945 = vmax.f32 %v762, 0.0
    %v946 = vmax.f32 %v801, 0.0
    %v947 = vmax.f32 %v803, 0.0
    %v948 = vmax.f32 %v842, 0.0
    %v949 = vmax.f32 %v844, 0.0
    %v950 = vmax.f32 %v883, 0.0
    %v951 = vmax.f32 %v885, 0.0
    %v952 = vmax.f32 %v924, 0.0
    %v953 = vmax.f32 %v926, 0.0
    %v954 = vld [vmem:[#allocation4] sm:$0xff]
    %v955 = vld [vmem:[#allocation4 + $0x8] sm:$0xff]
    %v956 = vld [vmem:[#allocation4 + $0x10] sm:$0xff]
    %v957 = vld [vmem:[#allocation4 + $0x18] sm:$0xff]
    %v958 = vld [vmem:[#allocation4 + $0x20] sm:$0xff]
    %v959 = vld [vmem:[#allocation4 + $0x28] sm:$0xff]
    %v960 = vld [vmem:[#allocation4 + $0x30] sm:$0xff]
    %v961 = vld [vmem:[#allocation4 + $0x38] sm:$0xff]
    %v962 = vld [vmem:[#allocation4 + $0x40] sm:$0xff]
    %v963 = vld [vmem:[#allocation4 + $0x48] sm:$0xff]
    %v964 = vld [vmem:[#allocation4 + $0x50] sm:$0xff]
    %v965 = vld [vmem:[#allocation4 + $0x58] sm:$0xff]
    %v966 = vld [vmem:[#allocation4 + $0x60] sm:$0xff]
    %v967 = vld [vmem:[#allocation4 + $0x68] sm:$0xff]
    %v968 = vld [vmem:[#allocation4 + $0x70] sm:$0xff]
    %v969 = vld [vmem:[#allocation4 + $0x78] sm:$0xff]
    %v970 = vld [vmem:[#allocation4 + $0x80] sm:$0xff]
    %v971 = vld [vmem:[#allocation4 + $0x88] sm:$0xff]
    %v972 = vld [vmem:[#allocation4 + $0x90] sm:$0xff]
    %v973 = vld [vmem:[#allocation4 + $0x98] sm:$0xff]
    %v974 = vld [vmem:[#allocation4 + $0xa0] sm:$0xff]
    %v975 = vld [vmem:[#allocation4 + $0xa8] sm:$0xff]
    %v976 = vld [vmem:[#allocation4 + $0xb0] sm:$0xff]
    %v977 = vld [vmem:[#allocation4 + $0xb8] sm:$0xff]
    %v978 = vld [vmem:[#allocation4 + $0xc0] sm:$0xff]
    %v979 = vld [vmem:[#allocation4 + $0xc8] sm:$0xff]
    %v980 = vld [vmem:[#allocation4 + $0xd0] sm:$0xff]
    %v981 = vld [vmem:[#allocation4 + $0xd8] sm:$0xff]
    %v982 = vld [vmem:[#allocation4 + $0xe0] sm:$0xff]
    %v983 = vld [vmem:[#allocation4 + $0xe8] sm:$0xff]
    %v984 = vld [vmem:[#allocation4 + $0xf0] sm:$0xff]
    %v985 = vld [vmem:[#allocation4 + $0xf8] sm:$0xff]
    %v986 = vld [vmem:[#allocation4 + $0x100] sm:$0xff]
    %v987 = vld [vmem:[#allocation4 + $0x108] sm:$0xff]
    %v988 = vld [vmem:[#allocation4 + $0x110] sm:$0xff]
    %v989 = vld [vmem:[#allocation4 + $0x118] sm:$0xff]
    %v990 = vld [vmem:[#allocation4 + $0x120] sm:$0xff]
    %v991 = vld [vmem:[#allocation4 + $0x128] sm:$0xff]
    %v992 = vld [vmem:[#allocation4 + $0x130] sm:$0xff]
    %v993 = vld [vmem:[#allocation4 + $0x138] sm:$0xff]
    %v994 = vld [vmem:[#allocation4 + $0x140] sm:$0xff]
    %v995 = vld [vmem:[#allocation4 + $0x148] sm:$0xff]
    %v996 = vld [vmem:[#allocation4 + $0x150] sm:$0xff]
    %v997 = vld [vmem:[#allocation4 + $0x158] sm:$0xff]
    %v998 = vld [vmem:[#allocation4 + $0x160] sm:$0xff]
    %v999 = vld [vmem:[#allocation4 + $0x168] sm:$0xff]
    %v1000 = vld [vmem:[#allocation4 + $0x170] sm:$0xff]
    %v1001 = vld [vmem:[#allocation4 + $0x178] sm:$0xff]
    %v1002 = vld [vmem:[#allocation4 + $0x180] sm:$0xff]
    %v1003 = vld [vmem:[#allocation4 + $0x188] sm:$0xff]
    %v1004 = vld [vmem:[#allocation4 + $0x190] sm:$0xff]
    %v1005 = vld [vmem:[#allocation4 + $0x198] sm:$0xff]
    %v1006 = vld [vmem:[#allocation4 + $0x1a0] sm:$0xff]
    %v1007 = vld [vmem:[#allocation4 + $0x1a8] sm:$0xff]
    %v1008 = vld [vmem:[#allocation4 + $0x1b0] sm:$0xff]
    %v1009 = vld [vmem:[#allocation4 + $0x1b8] sm:$0xff]
    %v1010 = vld [vmem:[#allocation4 + $0x1c0] sm:$0xff]
    %v1011 = vld [vmem:[#allocation4 + $0x1c8] sm:$0xff]
    %v1012 = vld [vmem:[#allocation4 + $0x1d0] sm:$0xff]
    %v1013 = vld [vmem:[#allocation4 + $0x1d8] sm:$0xff]
    %v1014 = vld [vmem:[#allocation4 + $0x1e0] sm:$0xff]
    %v1015 = vld [vmem:[#allocation4 + $0x1e8] sm:$0xff]
    %v1016 = vld [vmem:[#allocation4 + $0x1f0] sm:$0xff]
    %v1017 = vld [vmem:[#allocation4 + $0x1f8] sm:$0xff]
    %v1018 = vld [vmem:[#allocation4 + $0x200] sm:$0xff]
    %v1019 = vld [vmem:[#allocation4 + $0x208] sm:$0xff]
    %v1020 = vld [vmem:[#allocation4 + $0x210] sm:$0xff]
    %v1021 = vld [vmem:[#allocation4 + $0x218] sm:$0xff]
    %v1022 = vld [vmem:[#allocation4 + $0x220] sm:$0xff]
    %v1023 = vld [vmem:[#allocation4 + $0x228] sm:$0xff]
    %v1024 = vld [vmem:[#allocation4 + $0x230] sm:$0xff]
    %v1025 = vld [vmem:[#allocation4 + $0x238] sm:$0xff]
    %v1026 = vld [vmem:[#allocation4 + $0x240] sm:$0xff]
    %v1027 = vld [vmem:[#allocation4 + $0x248] sm:$0xff]
    %v1028 = vld [vmem:[#allocation4 + $0x250] sm:$0xff]
    %v1029 = vld [vmem:[#allocation4 + $0x258] sm:$0xff]
    %v1030 = vld [vmem:[#allocation4 + $0x260] sm:$0xff]
    %v1031 = vld [vmem:[#allocation4 + $0x268] sm:$0xff]
    %v1032 = vld [vmem:[#allocation4 + $0x270] sm:$0xff]
    %v1033 = vld [vmem:[#allocation4 + $0x278] sm:$0xff]
    %v1034 = vld [vmem:[#allocation4 + $0x280] sm:$0xff]
    %v1035 = vld [vmem:[#allocation4 + $0x288] sm:$0xff]
    %v1036 = vld [vmem:[#allocation4 + $0x290] sm:$0xff]
    %v1037 = vld [vmem:[#allocation4 + $0x298] sm:$0xff]
    %v1038 = vld [vmem:[#allocation4 + $0x2a0] sm:$0xff]
    %v1039 = vld [vmem:[#allocation4 + $0x2a8] sm:$0xff]
    %v1040 = vld [vmem:[#allocation4 + $0x2b0] sm:$0xff]
    %v1041 = vld [vmem:[#allocation4 + $0x2b8] sm:$0xff]
    %v1042 = vld [vmem:[#allocation4 + $0x2c0] sm:$0xff]
    %v1043 = vld [vmem:[#allocation4 + $0x2c8] sm:$0xff]
    %v1044 = vld [vmem:[#allocation4 + $0x2d0] sm:$0xff]
    %v1045 = vld [vmem:[#allocation4 + $0x2d8] sm:$0xff]
    %v1046 = vld [vmem:[#allocation4 + $0x2e0] sm:$0xff]
    %v1047 = vld [vmem:[#allocation4 + $0x2e8] sm:$0xff]
    %v1048 = vld [vmem:[#allocation4 + $0x2f0] sm:$0xff]
    %v1049 = vld [vmem:[#allocation4 + $0x2f8] sm:$0xff]
    %v1050 = vld [vmem:[#allocation4 + $0x300] sm:$0xff]
    %v1051 = vld [vmem:[#allocation4 + $0x308] sm:$0xff]
    %v1052 = vld [vmem:[#allocation4 + $0x310] sm:$0xff]
    %v1053 = vld [vmem:[#allocation4 + $0x318] sm:$0xff]
    %v1054 = vld [vmem:[#allocation4 + $0x320] sm:$0xff]
    %v1055 = vld [vmem:[#allocation4 + $0x328] sm:$0xff]
    %v1056 = vld [vmem:[#allocation4 + $0x330] sm:$0xff]
    %v1057 = vld [vmem:[#allocation4 + $0x338] sm:$0xff]
    %v1058 = vld [vmem:[#allocation4 + $0x340] sm:$0xff]
    %v1059 = vld [vmem:[#allocation4 + $0x348] sm:$0xff]
    %v1060 = vld [vmem:[#allocation4 + $0x350] sm:$0xff]
    %v1061 = vld [vmem:[#allocation4 + $0x358] sm:$0xff]
    %v1062 = vld [vmem:[#allocation4 + $0x360] sm:$0xff]
    %v1063 = vld [vmem:[#allocation4 + $0x368] sm:$0xff]
    %v1064 = vld [vmem:[#allocation4 + $0x370] sm:$0xff]
    %v1065 = vld [vmem:[#allocation4 + $0x378] sm:$0xff]
    %v1066 = vld [vmem:[#allocation4 + $0x380] sm:$0xff]
    %v1067 = vld [vmem:[#allocation4 + $0x388] sm:$0xff]
    %v1068 = vld [vmem:[#allocation4 + $0x390] sm:$0xff]
    %v1069 = vld [vmem:[#allocation4 + $0x398] sm:$0xff]
    %v1070 = vld [vmem:[#allocation4 + $0x3a0] sm:$0xff]
    %v1071 = vld [vmem:[#allocation4 + $0x3a8] sm:$0xff]
    %v1072 = vld [vmem:[#allocation4 + $0x3b0] sm:$0xff]
    %v1073 = vld [vmem:[#allocation4 + $0x3b8] sm:$0xff]
    %v1074 = vld [vmem:[#allocation4 + $0x3c0] sm:$0xff]
    %v1075 = vld [vmem:[#allocation4 + $0x3c8] sm:$0xff]
    %v1076 = vld [vmem:[#allocation4 + $0x3d0] sm:$0xff]
    %v1077 = vld [vmem:[#allocation4 + $0x3d8] sm:$0xff]
    %v1078 = vld [vmem:[#allocation4 + $0x3e0] sm:$0xff]
    %v1079 = vld [vmem:[#allocation4 + $0x3e8] sm:$0xff]
    %v1080 = vld [vmem:[#allocation4 + $0x3f0] sm:$0xff]
    %v1081 = vld [vmem:[#allocation4 + $0x3f8] sm:$0xff]
    %v1082 = vld [vmem:[#allocation4 + $0x400] sm:$0xff]
    %v1083 = vld [vmem:[#allocation4 + $0x408] sm:$0xff]
    %v1084 = vld [vmem:[#allocation4 + $0x410] sm:$0xff]
    %v1085 = vld [vmem:[#allocation4 + $0x418] sm:$0xff]
    %v1086 = vld [vmem:[#allocation4 + $0x420] sm:$0xff]
    %v1087 = vld [vmem:[#allocation4 + $0x428] sm:$0xff]
    %v1088 = vld [vmem:[#allocation4 + $0x430] sm:$0xff]
    %v1089 = vld [vmem:[#allocation4 + $0x438] sm:$0xff]
    %v1090 = vld [vmem:[#allocation4 + $0x440] sm:$0xff]
    %v1091 = vld [vmem:[#allocation4 + $0x448] sm:$0xff]
    %v1092 = vld [vmem:[#allocation4 + $0x450] sm:$0xff]
    %v1093 = vld [vmem:[#allocation4 + $0x458] sm:$0xff]
    %v1094 = vld [vmem:[#allocation4 + $0x460] sm:$0xff]
    %v1095 = vld [vmem:[#allocation4 + $0x468] sm:$0xff]
    %v1096 = vld [vmem:[#allocation4 + $0x470] sm:$0xff]
    %v1097 = vld [vmem:[#allocation4 + $0x478] sm:$0xff]
    %v1098 = vld [vmem:[#allocation4 + $0x480] sm:$0xff]
    %v1099 = vld [vmem:[#allocation4 + $0x488] sm:$0xff]
    %v1100 = vld [vmem:[#allocation4 + $0x490] sm:$0xff]
    %v1101 = vld [vmem:[#allocation4 + $0x498] sm:$0xff]
    %v1102 = vld [vmem:[#allocation4 + $0x4a0] sm:$0xff]
    %v1103 = vld [vmem:[#allocation4 + $0x4a8] sm:$0xff]
    %v1104 = vld [vmem:[#allocation4 + $0x4b0] sm:$0xff]
    %v1105 = vld [vmem:[#allocation4 + $0x4b8] sm:$0xff]
    %v1106 = vld [vmem:[#allocation4 + $0x4c0] sm:$0xff]
    %v1107 = vld [vmem:[#allocation4 + $0x4c8] sm:$0xff]
    %v1108 = vld [vmem:[#allocation4 + $0x4d0] sm:$0xff]
    %v1109 = vld [vmem:[#allocation4 + $0x4d8] sm:$0xff]
    %v1110 = vld [vmem:[#allocation4 + $0x4e0] sm:$0xff]
    %v1111 = vld [vmem:[#allocation4 + $0x4e8] sm:$0xff]
    %v1112 = vld [vmem:[#allocation4 + $0x4f0] sm:$0xff]
    %v1113 = vld [vmem:[#allocation4 + $0x4f8] sm:$0xff]
    %v1114 = vld [vmem:[#allocation4 + $0x500] sm:$0xff]
    %v1115 = vld [vmem:[#allocation4 + $0x508] sm:$0xff]
    %v1116 = vld [vmem:[#allocation4 + $0x510] sm:$0xff]
    %v1117 = vld [vmem:[#allocation4 + $0x518] sm:$0xff]
    %v1118 = vld [vmem:[#allocation4 + $0x520] sm:$0xff]
    %v1119 = vld [vmem:[#allocation4 + $0x528] sm:$0xff]
    %v1120 = vld [vmem:[#allocation4 + $0x530] sm:$0xff]
    %v1121 = vld [vmem:[#allocation4 + $0x538] sm:$0xff]
    %v1122 = vld [vmem:[#allocation4 + $0x540] sm:$0xff]
    %v1123 = vld [vmem:[#allocation4 + $0x548] sm:$0xff]
    %v1124 = vld [vmem:[#allocation4 + $0x550] sm:$0xff]
    %v1125 = vld [vmem:[#allocation4 + $0x558] sm:$0xff]
    %v1126 = vld [vmem:[#allocation4 + $0x560] sm:$0xff]
    %v1127 = vld [vmem:[#allocation4 + $0x568] sm:$0xff]
    %v1128 = vld [vmem:[#allocation4 + $0x570] sm:$0xff]
    %v1129 = vld [vmem:[#allocation4 + $0x578] sm:$0xff]
    %v1130 = vld [vmem:[#allocation4 + $0x580] sm:$0xff]
    %v1131 = vld [vmem:[#allocation4 + $0x588] sm:$0xff]
    %v1132 = vld [vmem:[#allocation4 + $0x590] sm:$0xff]
    %v1133 = vld [vmem:[#allocation4 + $0x598] sm:$0xff]
    %v1134 = vld [vmem:[#allocation4 + $0x5a0] sm:$0xff]
    %v1135 = vld [vmem:[#allocation4 + $0x5a8] sm:$0xff]
    %v1136 = vld [vmem:[#allocation4 + $0x5b0] sm:$0xff]
    %v1137 = vld [vmem:[#allocation4 + $0x5b8] sm:$0xff]
    %v1138 = vld [vmem:[#allocation4 + $0x5c0] sm:$0xff]
    %v1139 = vld [vmem:[#allocation4 + $0x5c8] sm:$0xff]
    %v1140 = vld [vmem:[#allocation4 + $0x5d0] sm:$0xff]
    %v1141 = vld [vmem:[#allocation4 + $0x5d8] sm:$0xff]
    %v1142 = vld [vmem:[#allocation4 + $0x5e0] sm:$0xff]
    %v1143 = vld [vmem:[#allocation4 + $0x5e8] sm:$0xff]
    %v1144 = vld [vmem:[#allocation4 + $0x5f0] sm:$0xff]
    %v1145 = vld [vmem:[#allocation4 + $0x5f8] sm:$0xff]
    %v1146 = vld [vmem:[#allocation4 + $0x600] sm:$0xff]
    %v1147 = vld [vmem:[#allocation4 + $0x608] sm:$0xff]
    %v1148 = vld [vmem:[#allocation4 + $0x610] sm:$0xff]
    %v1149 = vld [vmem:[#allocation4 + $0x618] sm:$0xff]
    %v1150 = vld [vmem:[#allocation4 + $0x620] sm:$0xff]
    %v1151 = vld [vmem:[#allocation4 + $0x628] sm:$0xff]
    %v1152 = vld [vmem:[#allocation4 + $0x630] sm:$0xff]
    %v1153 = vld [vmem:[#allocation4 + $0x638] sm:$0xff]
    %v1154 = vld [vmem:[#allocation4 + $0x640] sm:$0xff]
    %v1155 = vld [vmem:[#allocation4 + $0x648] sm:$0xff]
    %v1156 = vld [vmem:[#allocation4 + $0x650] sm:$0xff]
    %v1157 = vld [vmem:[#allocation4 + $0x658] sm:$0xff]
    %v1158 = vld [vmem:[#allocation4 + $0x660] sm:$0xff]
    %v1159 = vld [vmem:[#allocation4 + $0x668] sm:$0xff]
    %v1160 = vld [vmem:[#allocation4 + $0x670] sm:$0xff]
    %v1161 = vld [vmem:[#allocation4 + $0x678] sm:$0xff]
    %v1162 = vld [vmem:[#allocation4 + $0x680] sm:$0xff]
    %v1163 = vld [vmem:[#allocation4 + $0x688] sm:$0xff]
    %v1164 = vld [vmem:[#allocation4 + $0x690] sm:$0xff]
    %v1165 = vld [vmem:[#allocation4 + $0x698] sm:$0xff]
    %v1166 = vld [vmem:[#allocation4 + $0x6a0] sm:$0xff]
    %v1167 = vld [vmem:[#allocation4 + $0x6a8] sm:$0xff]
    %v1168 = vld [vmem:[#allocation4 + $0x6b0] sm:$0xff]
    %v1169 = vld [vmem:[#allocation4 + $0x6b8] sm:$0xff]
    %v1170 = vld [vmem:[#allocation4 + $0x6c0] sm:$0xff]
    %v1171 = vld [vmem:[#allocation4 + $0x6c8] sm:$0xff]
    %v1172 = vld [vmem:[#allocation4 + $0x6d0] sm:$0xff]
    %v1173 = vld [vmem:[#allocation4 + $0x6d8] sm:$0xff]
    %v1174 = vld [vmem:[#allocation4 + $0x6e0] sm:$0xff]
    %v1175 = vld [vmem:[#allocation4 + $0x6e8] sm:$0xff]
    %v1176 = vld [vmem:[#allocation4 + $0x6f0] sm:$0xff]
    %v1177 = vld [vmem:[#allocation4 + $0x6f8] sm:$0xff]
    %v1178 = vld [vmem:[#allocation4 + $0x700] sm:$0xff]
    %v1179 = vld [vmem:[#allocation4 + $0x708] sm:$0xff]
    %v1180 = vld [vmem:[#allocation4 + $0x710] sm:$0xff]
    %v1181 = vld [vmem:[#allocation4 + $0x718] sm:$0xff]
    %v1182 = vld [vmem:[#allocation4 + $0x720] sm:$0xff]
    %v1183 = vld [vmem:[#allocation4 + $0x728] sm:$0xff]
    %v1184 = vld [vmem:[#allocation4 + $0x730] sm:$0xff]
    %v1185 = vld [vmem:[#allocation4 + $0x738] sm:$0xff]
    %v1186 = vld [vmem:[#allocation4 + $0x740] sm:$0xff]
    %v1187 = vld [vmem:[#allocation4 + $0x748] sm:$0xff]
    %v1188 = vld [vmem:[#allocation4 + $0x750] sm:$0xff]
    %v1189 = vld [vmem:[#allocation4 + $0x758] sm:$0xff]
    %v1190 = vld [vmem:[#allocation4 + $0x760] sm:$0xff]
    %v1191 = vld [vmem:[#allocation4 + $0x768] sm:$0xff]
    %v1192 = vld [vmem:[#allocation4 + $0x770] sm:$0xff]
    %v1193 = vld [vmem:[#allocation4 + $0x778] sm:$0xff]
    %v1194 = vld [vmem:[#allocation4 + $0x780] sm:$0xff]
    %v1195 = vld [vmem:[#allocation4 + $0x788] sm:$0xff]
    %v1196 = vld [vmem:[#allocation4 + $0x790] sm:$0xff]
    %v1197 = vld [vmem:[#allocation4 + $0x798] sm:$0xff]
    %v1198 = vld [vmem:[#allocation4 + $0x7a0] sm:$0xff]
    %v1199 = vld [vmem:[#allocation4 + $0x7a8] sm:$0xff]
    %v1200 = vld [vmem:[#allocation4 + $0x7b0] sm:$0xff]
    %v1201 = vld [vmem:[#allocation4 + $0x7b8] sm:$0xff]
    %v1202 = vld [vmem:[#allocation4 + $0x7c0] sm:$0xff]
    %v1203 = vld [vmem:[#allocation4 + $0x7c8] sm:$0xff]
    %v1204 = vld [vmem:[#allocation4 + $0x7d0] sm:$0xff]
    %v1205 = vld [vmem:[#allocation4 + $0x7d8] sm:$0xff]
    %v1206 = vld [vmem:[#allocation4 + $0x7e0] sm:$0xff]
    %v1207 = vld [vmem:[#allocation4 + $0x7e8] sm:$0xff]
    %v1208 = vld [vmem:[#allocation4 + $0x7f0] sm:$0xff]
    %v1209 = vld [vmem:[#allocation4 + $0x7f8] sm:$0xff]
    %v1210 = vld [vmem:[#allocation4 + $0x800] sm:$0xff]
    %v1211 = vld [vmem:[#allocation4 + $0x808] sm:$0xff]
    %v1212 = vld [vmem:[#allocation4 + $0x810] sm:$0xff]
    %v1213 = vld [vmem:[#allocation4 + $0x818] sm:$0xff]
    %v1214 = vld [vmem:[#allocation4 + $0x820] sm:$0xff]
    %v1215 = vld [vmem:[#allocation4 + $0x828] sm:$0xff]
    %v1216 = vld [vmem:[#allocation4 + $0x830] sm:$0xff]
    %v1217 = vld [vmem:[#allocation4 + $0x838] sm:$0xff]
    %v1218 = vld [vmem:[#allocation4 + $0x840] sm:$0xff]
    %v1219 = vld [vmem:[#allocation4 + $0x848] sm:$0xff]
    %v1220 = vld [vmem:[#allocation4 + $0x850] sm:$0xff]
    %v1221 = vld [vmem:[#allocation4 + $0x858] sm:$0xff]
    %v1222 = vld [vmem:[#allocation4 + $0x860] sm:$0xff]
    %v1223 = vld [vmem:[#allocation4 + $0x868] sm:$0xff]
    %v1224 = vld [vmem:[#allocation4 + $0x870] sm:$0xff]
    %v1225 = vld [vmem:[#allocation4 + $0x878] sm:$0xff]
    %v1226 = vld [vmem:[#allocation4 + $0x880] sm:$0xff]
    %v1227 = vld [vmem:[#allocation4 + $0x888] sm:$0xff]
    %v1228 = vld [vmem:[#allocation4 + $0x890] sm:$0xff]
    %v1229 = vld [vmem:[#allocation4 + $0x898] sm:$0xff]
    %v1230 = vld [vmem:[#allocation4 + $0x8a0] sm:$0xff]
    %v1231 = vld [vmem:[#allocation4 + $0x8a8] sm:$0xff]
    %v1232 = vld [vmem:[#allocation4 + $0x8b0] sm:$0xff]
    %v1233 = vld [vmem:[#allocation4 + $0x8b8] sm:$0xff]
    %v1234 = vld [vmem:[#allocation4 + $0x8c0] sm:$0xff]
    %v1235 = vld [vmem:[#allocation4 + $0x8c8] sm:$0xff]
    %v1236 = vld [vmem:[#allocation4 + $0x8d0] sm:$0xff]
    %v1237 = vld [vmem:[#allocation4 + $0x8d8] sm:$0xff]
    %v1238 = vld [vmem:[#allocation4 + $0x8e0] sm:$0xff]
    %v1239 = vld [vmem:[#allocation4 + $0x8e8] sm:$0xff]
    %v1240 = vld [vmem:[#allocation4 + $0x8f0] sm:$0xff]
    %v1241 = vld [vmem:[#allocation4 + $0x8f8] sm:$0xff]
    %v1242 = vld [vmem:[#allocation4 + $0x900] sm:$0xff]
    %v1243 = vld [vmem:[#allocation4 + $0x908] sm:$0xff]
    %v1244 = vld [vmem:[#allocation4 + $0x910] sm:$0xff]
    %v1245 = vld [vmem:[#allocation4 + $0x918] sm:$0xff]
    %v1246 = vld [vmem:[#allocation4 + $0x920] sm:$0xff]
    %v1247 = vld [vmem:[#allocation4 + $0x928] sm:$0xff]
    %v1248 = vld [vmem:[#allocation4 + $0x930] sm:$0xff]
    %v1249 = vld [vmem:[#allocation4 + $0x938] sm:$0xff]
    %v1250 = vld [vmem:[#allocation4 + $0x940] sm:$0xff]
    %v1251 = vld [vmem:[#allocation4 + $0x948] sm:$0xff]
    %v1252 = vld [vmem:[#allocation4 + $0x950] sm:$0xff]
    %v1253 = vld [vmem:[#allocation4 + $0x958] sm:$0xff]
    %v1254 = vld [vmem:[#allocation4 + $0x960] sm:$0xff]
    %v1255 = vld [vmem:[#allocation4 + $0x968] sm:$0xff]
    %v1256 = vld [vmem:[#allocation4 + $0x970] sm:$0xff]
    %v1257 = vld [vmem:[#allocation4 + $0x978] sm:$0xff]
    %v1258 = vld [vmem:[#allocation4 + $0x980] sm:$0xff]
    %v1259 = vld [vmem:[#allocation4 + $0x988] sm:$0xff]
    %v1260 = vld [vmem:[#allocation4 + $0x990] sm:$0xff]
    %v1261 = vld [vmem:[#allocation4 + $0x998] sm:$0xff]
    %v1262 = vld [vmem:[#allocation4 + $0x9a0] sm:$0xff]
    %v1263 = vld [vmem:[#allocation4 + $0x9a8] sm:$0xff]
    %v1264 = vld [vmem:[#allocation4 + $0x9b0] sm:$0xff]
    %v1265 = vld [vmem:[#allocation4 + $0x9b8] sm:$0xff]
    %v1266 = vld [vmem:[#allocation4 + $0x9c0] sm:$0xff]
    %v1267 = vld [vmem:[#allocation4 + $0x9c8] sm:$0xff]
    %v1268 = vld [vmem:[#allocation4 + $0x9d0] sm:$0xff]
    %v1269 = vld [vmem:[#allocation4 + $0x9d8] sm:$0xff]
    %v1270 = vld [vmem:[#allocation4 + $0x9e0] sm:$0xff]
    %v1271 = vld [vmem:[#allocation4 + $0x9e8] sm:$0xff]
    %v1272 = vld [vmem:[#allocation4 + $0x9f0] sm:$0xff]
    %v1273 = vld [vmem:[#allocation4 + $0x9f8] sm:$0xff]
    %v1274 = vld [vmem:[#allocation4 + $0xa00] sm:$0xff]
    %v1275 = vld [vmem:[#allocation4 + $0xa08] sm:$0xff]
    %v1276 = vld [vmem:[#allocation4 + $0xa10] sm:$0xff]
    %v1277 = vld [vmem:[#allocation4 + $0xa18] sm:$0xff]
    %v1278 = vld [vmem:[#allocation4 + $0xa20] sm:$0xff]
    %v1279 = vld [vmem:[#allocation4 + $0xa28] sm:$0xff]
    %v1280 = vld [vmem:[#allocation4 + $0xa30] sm:$0xff]
    %v1281 = vld [vmem:[#allocation4 + $0xa38] sm:$0xff]
    %v1282 = vld [vmem:[#allocation4 + $0xa40] sm:$0xff]
    %v1283 = vld [vmem:[#allocation4 + $0xa48] sm:$0xff]
    %v1284 = vld [vmem:[#allocation4 + $0xa50] sm:$0xff]
    %v1285 = vld [vmem:[#allocation4 + $0xa58] sm:$0xff]
    %v1286 = vld [vmem:[#allocation4 + $0xa60] sm:$0xff]
    %v1287 = vld [vmem:[#allocation4 + $0xa68] sm:$0xff]
    %v1288 = vld [vmem:[#allocation4 + $0xa70] sm:$0xff]
    %v1289 = vld [vmem:[#allocation4 + $0xa78] sm:$0xff]
    %v1290 = vld [vmem:[#allocation4 + $0xa80] sm:$0xff]
    %v1291 = vld [vmem:[#allocation4 + $0xa88] sm:$0xff]
    %v1292 = vld [vmem:[#allocation4 + $0xa90] sm:$0xff]
    %v1293 = vld [vmem:[#allocation4 + $0xa98] sm:$0xff]
    %v1294 = vld [vmem:[#allocation4 + $0xaa0] sm:$0xff]
    %v1295 = vld [vmem:[#allocation4 + $0xaa8] sm:$0xff]
    %v1296 = vld [vmem:[#allocation4 + $0xab0] sm:$0xff]
    %v1297 = vld [vmem:[#allocation4 + $0xab8] sm:$0xff]
    %v1298 = vld [vmem:[#allocation4 + $0xac0] sm:$0xff]
    %v1299 = vld [vmem:[#allocation4 + $0xac8] sm:$0xff]
    %v1300 = vld [vmem:[#allocation4 + $0xad0] sm:$0xff]
    %v1301 = vld [vmem:[#allocation4 + $0xad8] sm:$0xff]
    %v1302 = vld [vmem:[#allocation4 + $0xae0] sm:$0xff]
    %v1303 = vld [vmem:[#allocation4 + $0xae8] sm:$0xff]
    %v1304 = vld [vmem:[#allocation4 + $0xaf0] sm:$0xff]
    %v1305 = vld [vmem:[#allocation4 + $0xaf8] sm:$0xff]
    %v1306 = vld [vmem:[#allocation4 + $0xb00] sm:$0xff]
    %v1307 = vld [vmem:[#allocation4 + $0xb08] sm:$0xff]
    %v1308 = vld [vmem:[#allocation4 + $0xb10] sm:$0xff]
    %v1309 = vld [vmem:[#allocation4 + $0xb18] sm:$0xff]
    %v1310 = vld [vmem:[#allocation4 + $0xb20] sm:$0xff]
    %v1311 = vld [vmem:[#allocation4 + $0xb28] sm:$0xff]
    %v1312 = vld [vmem:[#allocation4 + $0xb30] sm:$0xff]
    %v1313 = vld [vmem:[#allocation4 + $0xb38] sm:$0xff]
    %v1314 = vld [vmem:[#allocation4 + $0xb40] sm:$0xff]
    %v1315 = vld [vmem:[#allocation4 + $0xb48] sm:$0xff]
    %v1316 = vld [vmem:[#allocation4 + $0xb50] sm:$0xff]
    %v1317 = vld [vmem:[#allocation4 + $0xb58] sm:$0xff]
    %v1318 = vld [vmem:[#allocation4 + $0xb60] sm:$0xff]
    %v1319 = vld [vmem:[#allocation4 + $0xb68] sm:$0xff]
    %v1320 = vld [vmem:[#allocation4 + $0xb70] sm:$0xff]
    %v1321 = vld [vmem:[#allocation4 + $0xb78] sm:$0xff]
    %v1322 = vld [vmem:[#allocation4 + $0xb80] sm:$0xff]
    %v1323 = vld [vmem:[#allocation4 + $0xb88] sm:$0xff]
    %v1324 = vld [vmem:[#allocation4 + $0xb90] sm:$0xff]
    %v1325 = vld [vmem:[#allocation4 + $0xb98] sm:$0xff]
    %v1326 = vld [vmem:[#allocation4 + $0xba0] sm:$0xff]
    %v1327 = vld [vmem:[#allocation4 + $0xba8] sm:$0xff]
    %v1328 = vld [vmem:[#allocation4 + $0xbb0] sm:$0xff]
    %v1329 = vld [vmem:[#allocation4 + $0xbb8] sm:$0xff]
    %v1330 = vld [vmem:[#allocation4 + $0xbc0] sm:$0xff]
    %v1331 = vld [vmem:[#allocation4 + $0xbc8] sm:$0xff]
    %v1332 = vld [vmem:[#allocation4 + $0xbd0] sm:$0xff]
    %v1333 = vld [vmem:[#allocation4 + $0xbd8] sm:$0xff]
    %v1334 = vld [vmem:[#allocation4 + $0xbe0] sm:$0xff]
    %v1335 = vld [vmem:[#allocation4 + $0xbe8] sm:$0xff]
    %v1336 = vld [vmem:[#allocation4 + $0xbf0] sm:$0xff]
    %v1337 = vld [vmem:[#allocation4 + $0xbf8] sm:$0xff]
    %v1338 = vunpack.c.l.s8.bf16 %v954
    %v1339 = vunpack.c.l.s8.bf16 %v955
    %v1340 = vunpack.c.l.s8.bf16 %v956
    %v1341 = vunpack.c.l.s8.bf16 %v957
    %v1342 = vunpack.c.h.s8.bf16 %v954
    %v1343 = vunpack.c.h.s8.bf16 %v955
    %v1344 = vunpack.c.h.s8.bf16 %v956
    %v1345 = vunpack.c.h.s8.bf16 %v957
    %v1346 = vunpack.c.l.s8.bf16 %v958
    %v1347 = vunpack.c.l.s8.bf16 %v959
    %v1348 = vunpack.c.l.s8.bf16 %v960
    %v1349 = vunpack.c.l.s8.bf16 %v961
    %v1350 = vunpack.c.h.s8.bf16 %v958
    %v1351 = vunpack.c.h.s8.bf16 %v959
    %v1352 = vunpack.c.h.s8.bf16 %v960
    %v1353 = vunpack.c.h.s8.bf16 %v961
    %v1354 = vunpack.c.l.s8.bf16 %v962
    %v1355 = vunpack.c.l.s8.bf16 %v963
    %v1356 = vunpack.c.l.s8.bf16 %v964
    %v1357 = vunpack.c.l.s8.bf16 %v965
    %v1358 = vunpack.c.h.s8.bf16 %v962
    %v1359 = vunpack.c.h.s8.bf16 %v963
    %v1360 = vunpack.c.h.s8.bf16 %v964
    %v1361 = vunpack.c.h.s8.bf16 %v965
    %v1362 = vunpack.c.l.s8.bf16 %v966
    %v1363 = vunpack.c.l.s8.bf16 %v967
    %v1364 = vunpack.c.l.s8.bf16 %v968
    %v1365 = vunpack.c.l.s8.bf16 %v969
    %v1366 = vunpack.c.h.s8.bf16 %v966
    %v1367 = vunpack.c.h.s8.bf16 %v967
    %v1368 = vunpack.c.h.s8.bf16 %v968
    %v1369 = vunpack.c.h.s8.bf16 %v969
    %v1370 = vunpack.c.l.s8.bf16 %v970
    %v1371 = vunpack.c.l.s8.bf16 %v971
    %v1372 = vunpack.c.l.s8.bf16 %v972
    %v1373 = vunpack.c.l.s8.bf16 %v973
    %v1374 = vunpack.c.h.s8.bf16 %v970
    %v1375 = vunpack.c.h.s8.bf16 %v971
    %v1376 = vunpack.c.h.s8.bf16 %v972
    %v1377 = vunpack.c.h.s8.bf16 %v973
    %v1378 = vunpack.c.l.s8.bf16 %v974
    %v1379 = vunpack.c.l.s8.bf16 %v975
    %v1380 = vunpack.c.l.s8.bf16 %v976
    %v1381 = vunpack.c.l.s8.bf16 %v977
    %v1382 = vunpack.c.h.s8.bf16 %v974
    %v1383 = vunpack.c.h.s8.bf16 %v975
    %v1384 = vunpack.c.h.s8.bf16 %v976
    %v1385 = vunpack.c.h.s8.bf16 %v977
    %v1386 = vunpack.c.l.s8.bf16 %v978
    %v1387 = vunpack.c.l.s8.bf16 %v979
    %v1388 = vunpack.c.l.s8.bf16 %v980
    %v1389 = vunpack.c.l.s8.bf16 %v981
    %v1390 = vunpack.c.h.s8.bf16 %v978
    %v1391 = vunpack.c.h.s8.bf16 %v979
    %v1392 = vunpack.c.h.s8.bf16 %v980
    %v1393 = vunpack.c.h.s8.bf16 %v981
    %v1394 = vunpack.c.l.s8.bf16 %v982
    %v1395 = vunpack.c.l.s8.bf16 %v983
    %v1396 = vunpack.c.l.s8.bf16 %v984
    %v1397 = vunpack.c.l.s8.bf16 %v985
    %v1398 = vunpack.c.h.s8.bf16 %v982
    %v1399 = vunpack.c.h.s8.bf16 %v983
    %v1400 = vunpack.c.h.s8.bf16 %v984
    %v1401 = vunpack.c.h.s8.bf16 %v985
    %v1402 = vunpack.c.l.s8.bf16 %v986
    %v1403 = vunpack.c.l.s8.bf16 %v987
    %v1404 = vunpack.c.l.s8.bf16 %v988
    %v1405 = vunpack.c.l.s8.bf16 %v989
    %v1406 = vunpack.c.h.s8.bf16 %v986
    %v1407 = vunpack.c.h.s8.bf16 %v987
    %v1408 = vunpack.c.h.s8.bf16 %v988
    %v1409 = vunpack.c.h.s8.bf16 %v989
    %v1410 = vunpack.c.l.s8.bf16 %v990
    %v1411 = vunpack.c.l.s8.bf16 %v991
    %v1412 = vunpack.c.l.s8.bf16 %v992
    %v1413 = vunpack.c.l.s8.bf16 %v993
    %v1414 = vunpack.c.h.s8.bf16 %v990
    %v1415 = vunpack.c.h.s8.bf16 %v991
    %v1416 = vunpack.c.h.s8.bf16 %v992
    %v1417 = vunpack.c.h.s8.bf16 %v993
    %v1418 = vunpack.c.l.s8.bf16 %v994
    %v1419 = vunpack.c.l.s8.bf16 %v995
    %v1420 = vunpack.c.l.s8.bf16 %v996
    %v1421 = vunpack.c.l.s8.bf16 %v997
    %v1422 = vunpack.c.h.s8.bf16 %v994
    %v1423 = vunpack.c.h.s8.bf16 %v995
    %v1424 = vunpack.c.h.s8.bf16 %v996
    %v1425 = vunpack.c.h.s8.bf16 %v997
    %v1426 = vunpack.c.l.s8.bf16 %v998
    %v1427 = vunpack.c.l.s8.bf16 %v999
    %v1428 = vunpack.c.l.s8.bf16 %v1000
    %v1429 = vunpack.c.l.s8.bf16 %v1001
    %v1430 = vunpack.c.h.s8.bf16 %v998
    %v1431 = vunpack.c.h.s8.bf16 %v999
    %v1432 = vunpack.c.h.s8.bf16 %v1000
    %v1433 = vunpack.c.h.s8.bf16 %v1001
    %v1434 = vunpack.c.l.s8.bf16 %v1002
    %v1435 = vunpack.c.l.s8.bf16 %v1003
    %v1436 = vunpack.c.l.s8.bf16 %v1004
    %v1437 = vunpack.c.l.s8.bf16 %v1005
    %v1438 = vunpack.c.h.s8.bf16 %v1002
    %v1439 = vunpack.c.h.s8.bf16 %v1003
    %v1440 = vunpack.c.h.s8.bf16 %v1004
    %v1441 = vunpack.c.h.s8.bf16 %v1005
    %v1442 = vunpack.c.l.s8.bf16 %v1006
    %v1443 = vunpack.c.l.s8.bf16 %v1007
    %v1444 = vunpack.c.l.s8.bf16 %v1008
    %v1445 = vunpack.c.l.s8.bf16 %v1009
    %v1446 = vunpack.c.h.s8.bf16 %v1006
    %v1447 = vunpack.c.h.s8.bf16 %v1007
    %v1448 = vunpack.c.h.s8.bf16 %v1008
    %v1449 = vunpack.c.h.s8.bf16 %v1009
    %v1450 = vunpack.c.l.s8.bf16 %v1010
    %v1451 = vunpack.c.l.s8.bf16 %v1011
    %v1452 = vunpack.c.l.s8.bf16 %v1012
    %v1453 = vunpack.c.l.s8.bf16 %v1013
    %v1454 = vunpack.c.h.s8.bf16 %v1010
    %v1455 = vunpack.c.h.s8.bf16 %v1011
    %v1456 = vunpack.c.h.s8.bf16 %v1012
    %v1457 = vunpack.c.h.s8.bf16 %v1013
    %v1458 = vunpack.c.l.s8.bf16 %v1014
    %v1459 = vunpack.c.l.s8.bf16 %v1015
    %v1460 = vunpack.c.l.s8.bf16 %v1016
    %v1461 = vunpack.c.l.s8.bf16 %v1017
    %v1462 = vunpack.c.h.s8.bf16 %v1014
    %v1463 = vunpack.c.h.s8.bf16 %v1015
    %v1464 = vunpack.c.h.s8.bf16 %v1016
    %v1465 = vunpack.c.h.s8.bf16 %v1017
    %v1466 = vunpack.c.l.s8.bf16 %v1018
    %v1467 = vunpack.c.l.s8.bf16 %v1019
    %v1468 = vunpack.c.l.s8.bf16 %v1020
    %v1469 = vunpack.c.l.s8.bf16 %v1021
    %v1470 = vunpack.c.h.s8.bf16 %v1018
    %v1471 = vunpack.c.h.s8.bf16 %v1019
    %v1472 = vunpack.c.h.s8.bf16 %v1020
    %v1473 = vunpack.c.h.s8.bf16 %v1021
    %v1474 = vunpack.c.l.s8.bf16 %v1022
    %v1475 = vunpack.c.l.s8.bf16 %v1023
    %v1476 = vunpack.c.l.s8.bf16 %v1024
    %v1477 = vunpack.c.l.s8.bf16 %v1025
    %v1478 = vunpack.c.h.s8.bf16 %v1022
    %v1479 = vunpack.c.h.s8.bf16 %v1023
    %v1480 = vunpack.c.h.s8.bf16 %v1024
    %v1481 = vunpack.c.h.s8.bf16 %v1025
    %v1482 = vunpack.c.l.s8.bf16 %v1026
    %v1483 = vunpack.c.l.s8.bf16 %v1027
    %v1484 = vunpack.c.l.s8.bf16 %v1028
    %v1485 = vunpack.c.l.s8.bf16 %v1029
    %v1486 = vunpack.c.h.s8.bf16 %v1026
    %v1487 = vunpack.c.h.s8.bf16 %v1027
    %v1488 = vunpack.c.h.s8.bf16 %v1028
    %v1489 = vunpack.c.h.s8.bf16 %v1029
    %v1490 = vunpack.c.l.s8.bf16 %v1030
    %v1491 = vunpack.c.l.s8.bf16 %v1031
    %v1492 = vunpack.c.l.s8.bf16 %v1032
    %v1493 = vunpack.c.l.s8.bf16 %v1033
    %v1494 = vunpack.c.h.s8.bf16 %v1030
    %v1495 = vunpack.c.h.s8.bf16 %v1031
    %v1496 = vunpack.c.h.s8.bf16 %v1032
    %v1497 = vunpack.c.h.s8.bf16 %v1033
    %v1498 = vunpack.c.l.s8.bf16 %v1034
    %v1499 = vunpack.c.l.s8.bf16 %v1035
    %v1500 = vunpack.c.l.s8.bf16 %v1036
    %v1501 = vunpack.c.l.s8.bf16 %v1037
    %v1502 = vunpack.c.h.s8.bf16 %v1034
    %v1503 = vunpack.c.h.s8.bf16 %v1035
    %v1504 = vunpack.c.h.s8.bf16 %v1036
    %v1505 = vunpack.c.h.s8.bf16 %v1037
    %v1506 = vunpack.c.l.s8.bf16 %v1038
    %v1507 = vunpack.c.l.s8.bf16 %v1039
    %v1508 = vunpack.c.l.s8.bf16 %v1040
    %v1509 = vunpack.c.l.s8.bf16 %v1041
    %v1510 = vunpack.c.h.s8.bf16 %v1038
    %v1511 = vunpack.c.h.s8.bf16 %v1039
    %v1512 = vunpack.c.h.s8.bf16 %v1040
    %v1513 = vunpack.c.h.s8.bf16 %v1041
    %v1514 = vunpack.c.l.s8.bf16 %v1042
    %v1515 = vunpack.c.l.s8.bf16 %v1043
    %v1516 = vunpack.c.l.s8.bf16 %v1044
    %v1517 = vunpack.c.l.s8.bf16 %v1045
    %v1518 = vunpack.c.h.s8.bf16 %v1042
    %v1519 = vunpack.c.h.s8.bf16 %v1043
    %v1520 = vunpack.c.h.s8.bf16 %v1044
    %v1521 = vunpack.c.h.s8.bf16 %v1045
    %v1522 = vunpack.c.l.s8.bf16 %v1046
    %v1523 = vunpack.c.l.s8.bf16 %v1047
    %v1524 = vunpack.c.l.s8.bf16 %v1048
    %v1525 = vunpack.c.l.s8.bf16 %v1049
    %v1526 = vunpack.c.h.s8.bf16 %v1046
    %v1527 = vunpack.c.h.s8.bf16 %v1047
    %v1528 = vunpack.c.h.s8.bf16 %v1048
    %v1529 = vunpack.c.h.s8.bf16 %v1049
    %v1530 = vunpack.c.l.s8.bf16 %v1050
    %v1531 = vunpack.c.l.s8.bf16 %v1051
    %v1532 = vunpack.c.l.s8.bf16 %v1052
    %v1533 = vunpack.c.l.s8.bf16 %v1053
    %v1534 = vunpack.c.h.s8.bf16 %v1050
    %v1535 = vunpack.c.h.s8.bf16 %v1051
    %v1536 = vunpack.c.h.s8.bf16 %v1052
    %v1537 = vunpack.c.h.s8.bf16 %v1053
    %v1538 = vunpack.c.l.s8.bf16 %v1054
    %v1539 = vunpack.c.l.s8.bf16 %v1055
    %v1540 = vunpack.c.l.s8.bf16 %v1056
    %v1541 = vunpack.c.l.s8.bf16 %v1057
    %v1542 = vunpack.c.h.s8.bf16 %v1054
    %v1543 = vunpack.c.h.s8.bf16 %v1055
    %v1544 = vunpack.c.h.s8.bf16 %v1056
    %v1545 = vunpack.c.h.s8.bf16 %v1057
    %v1546 = vunpack.c.l.s8.bf16 %v1058
    %v1547 = vunpack.c.l.s8.bf16 %v1059
    %v1548 = vunpack.c.l.s8.bf16 %v1060
    %v1549 = vunpack.c.l.s8.bf16 %v1061
    %v1550 = vunpack.c.h.s8.bf16 %v1058
    %v1551 = vunpack.c.h.s8.bf16 %v1059
    %v1552 = vunpack.c.h.s8.bf16 %v1060
    %v1553 = vunpack.c.h.s8.bf16 %v1061
    %v1554 = vunpack.c.l.s8.bf16 %v1062
    %v1555 = vunpack.c.l.s8.bf16 %v1063
    %v1556 = vunpack.c.l.s8.bf16 %v1064
    %v1557 = vunpack.c.l.s8.bf16 %v1065
    %v1558 = vunpack.c.h.s8.bf16 %v1062
    %v1559 = vunpack.c.h.s8.bf16 %v1063
    %v1560 = vunpack.c.h.s8.bf16 %v1064
    %v1561 = vunpack.c.h.s8.bf16 %v1065
    %v1562 = vunpack.c.l.s8.bf16 %v1066
    %v1563 = vunpack.c.l.s8.bf16 %v1067
    %v1564 = vunpack.c.l.s8.bf16 %v1068
    %v1565 = vunpack.c.l.s8.bf16 %v1069
    %v1566 = vunpack.c.h.s8.bf16 %v1066
    %v1567 = vunpack.c.h.s8.bf16 %v1067
    %v1568 = vunpack.c.h.s8.bf16 %v1068
    %v1569 = vunpack.c.h.s8.bf16 %v1069
    %v1570 = vunpack.c.l.s8.bf16 %v1070
    %v1571 = vunpack.c.l.s8.bf16 %v1071
    %v1572 = vunpack.c.l.s8.bf16 %v1072
    %v1573 = vunpack.c.l.s8.bf16 %v1073
    %v1574 = vunpack.c.h.s8.bf16 %v1070
    %v1575 = vunpack.c.h.s8.bf16 %v1071
    %v1576 = vunpack.c.h.s8.bf16 %v1072
    %v1577 = vunpack.c.h.s8.bf16 %v1073
    %v1578 = vunpack.c.l.s8.bf16 %v1074
    %v1579 = vunpack.c.l.s8.bf16 %v1075
    %v1580 = vunpack.c.l.s8.bf16 %v1076
    %v1581 = vunpack.c.l.s8.bf16 %v1077
    %v1582 = vunpack.c.h.s8.bf16 %v1074
    %v1583 = vunpack.c.h.s8.bf16 %v1075
    %v1584 = vunpack.c.h.s8.bf16 %v1076
    %v1585 = vunpack.c.h.s8.bf16 %v1077
    %v1586 = vunpack.c.l.s8.bf16 %v1078
    %v1587 = vunpack.c.l.s8.bf16 %v1079
    %v1588 = vunpack.c.l.s8.bf16 %v1080
    %v1589 = vunpack.c.l.s8.bf16 %v1081
    %v1590 = vunpack.c.h.s8.bf16 %v1078
    %v1591 = vunpack.c.h.s8.bf16 %v1079
    %v1592 = vunpack.c.h.s8.bf16 %v1080
    %v1593 = vunpack.c.h.s8.bf16 %v1081
    %v1594 = vunpack.c.l.s8.bf16 %v1082
    %v1595 = vunpack.c.l.s8.bf16 %v1083
    %v1596 = vunpack.c.l.s8.bf16 %v1084
    %v1597 = vunpack.c.l.s8.bf16 %v1085
    %v1598 = vunpack.c.h.s8.bf16 %v1082
    %v1599 = vunpack.c.h.s8.bf16 %v1083
    %v1600 = vunpack.c.h.s8.bf16 %v1084
    %v1601 = vunpack.c.h.s8.bf16 %v1085
    %v1602 = vunpack.c.l.s8.bf16 %v1086
    %v1603 = vunpack.c.l.s8.bf16 %v1087
    %v1604 = vunpack.c.l.s8.bf16 %v1088
    %v1605 = vunpack.c.l.s8.bf16 %v1089
    %v1606 = vunpack.c.h.s8.bf16 %v1086
    %v1607 = vunpack.c.h.s8.bf16 %v1087
    %v1608 = vunpack.c.h.s8.bf16 %v1088
    %v1609 = vunpack.c.h.s8.bf16 %v1089
    %v1610 = vunpack.c.l.s8.bf16 %v1090
    %v1611 = vunpack.c.l.s8.bf16 %v1091
    %v1612 = vunpack.c.l.s8.bf16 %v1092
    %v1613 = vunpack.c.l.s8.bf16 %v1093
    %v1614 = vunpack.c.h.s8.bf16 %v1090
    %v1615 = vunpack.c.h.s8.bf16 %v1091
    %v1616 = vunpack.c.h.s8.bf16 %v1092
    %v1617 = vunpack.c.h.s8.bf16 %v1093
    %v1618 = vunpack.c.l.s8.bf16 %v1094
    %v1619 = vunpack.c.l.s8.bf16 %v1095
    %v1620 = vunpack.c.l.s8.bf16 %v1096
    %v1621 = vunpack.c.l.s8.bf16 %v1097
    %v1622 = vunpack.c.h.s8.bf16 %v1094
    %v1623 = vunpack.c.h.s8.bf16 %v1095
    %v1624 = vunpack.c.h.s8.bf16 %v1096
    %v1625 = vunpack.c.h.s8.bf16 %v1097
    %v1626 = vunpack.c.l.s8.bf16 %v1098
    %v1627 = vunpack.c.l.s8.bf16 %v1099
    %v1628 = vunpack.c.l.s8.bf16 %v1100
    %v1629 = vunpack.c.l.s8.bf16 %v1101
    %v1630 = vunpack.c.h.s8.bf16 %v1098
    %v1631 = vunpack.c.h.s8.bf16 %v1099
    %v1632 = vunpack.c.h.s8.bf16 %v1100
    %v1633 = vunpack.c.h.s8.bf16 %v1101
    %v1634 = vunpack.c.l.s8.bf16 %v1102
    %v1635 = vunpack.c.l.s8.bf16 %v1103
    %v1636 = vunpack.c.l.s8.bf16 %v1104
    %v1637 = vunpack.c.l.s8.bf16 %v1105
    %v1638 = vunpack.c.h.s8.bf16 %v1102
    %v1639 = vunpack.c.h.s8.bf16 %v1103
    %v1640 = vunpack.c.h.s8.bf16 %v1104
    %v1641 = vunpack.c.h.s8.bf16 %v1105
    %v1642 = vunpack.c.l.s8.bf16 %v1106
    %v1643 = vunpack.c.l.s8.bf16 %v1107
    %v1644 = vunpack.c.l.s8.bf16 %v1108
    %v1645 = vunpack.c.l.s8.bf16 %v1109
    %v1646 = vunpack.c.h.s8.bf16 %v1106
    %v1647 = vunpack.c.h.s8.bf16 %v1107
    %v1648 = vunpack.c.h.s8.bf16 %v1108
    %v1649 = vunpack.c.h.s8.bf16 %v1109
    %v1650 = vunpack.c.l.s8.bf16 %v1110
    %v1651 = vunpack.c.l.s8.bf16 %v1111
    %v1652 = vunpack.c.l.s8.bf16 %v1112
    %v1653 = vunpack.c.l.s8.bf16 %v1113
    %v1654 = vunpack.c.h.s8.bf16 %v1110
    %v1655 = vunpack.c.h.s8.bf16 %v1111
    %v1656 = vunpack.c.h.s8.bf16 %v1112
    %v1657 = vunpack.c.h.s8.bf16 %v1113
    %v1658 = vunpack.c.l.s8.bf16 %v1114
    %v1659 = vunpack.c.l.s8.bf16 %v1115
    %v1660 = vunpack.c.l.s8.bf16 %v1116
    %v1661 = vunpack.c.l.s8.bf16 %v1117
    %v1662 = vunpack.c.h.s8.bf16 %v1114
    %v1663 = vunpack.c.h.s8.bf16 %v1115
    %v1664 = vunpack.c.h.s8.bf16 %v1116
    %v1665 = vunpack.c.h.s8.bf16 %v1117
    %v1666 = vunpack.c.l.s8.bf16 %v1118
    %v1667 = vunpack.c.l.s8.bf16 %v1119
    %v1668 = vunpack.c.l.s8.bf16 %v1120
    %v1669 = vunpack.c.l.s8.bf16 %v1121
    %v1670 = vunpack.c.h.s8.bf16 %v1118
    %v1671 = vunpack.c.h.s8.bf16 %v1119
    %v1672 = vunpack.c.h.s8.bf16 %v1120
    %v1673 = vunpack.c.h.s8.bf16 %v1121
    %v1674 = vunpack.c.l.s8.bf16 %v1122
    %v1675 = vunpack.c.l.s8.bf16 %v1123
    %v1676 = vunpack.c.l.s8.bf16 %v1124
    %v1677 = vunpack.c.l.s8.bf16 %v1125
    %v1678 = vunpack.c.h.s8.bf16 %v1122
    %v1679 = vunpack.c.h.s8.bf16 %v1123
    %v1680 = vunpack.c.h.s8.bf16 %v1124
    %v1681 = vunpack.c.h.s8.bf16 %v1125
    %v1682 = vunpack.c.l.s8.bf16 %v1126
    %v1683 = vunpack.c.l.s8.bf16 %v1127
    %v1684 = vunpack.c.l.s8.bf16 %v1128
    %v1685 = vunpack.c.l.s8.bf16 %v1129
    %v1686 = vunpack.c.h.s8.bf16 %v1126
    %v1687 = vunpack.c.h.s8.bf16 %v1127
    %v1688 = vunpack.c.h.s8.bf16 %v1128
    %v1689 = vunpack.c.h.s8.bf16 %v1129
    %v1690 = vunpack.c.l.s8.bf16 %v1130
    %v1691 = vunpack.c.l.s8.bf16 %v1131
    %v1692 = vunpack.c.l.s8.bf16 %v1132
    %v1693 = vunpack.c.l.s8.bf16 %v1133
    %v1694 = vunpack.c.h.s8.bf16 %v1130
    %v1695 = vunpack.c.h.s8.bf16 %v1131
    %v1696 = vunpack.c.h.s8.bf16 %v1132
    %v1697 = vunpack.c.h.s8.bf16 %v1133
    %v1698 = vunpack.c.l.s8.bf16 %v1134
    %v1699 = vunpack.c.l.s8.bf16 %v1135
    %v1700 = vunpack.c.l.s8.bf16 %v1136
    %v1701 = vunpack.c.l.s8.bf16 %v1137
    %v1702 = vunpack.c.h.s8.bf16 %v1134
    %v1703 = vunpack.c.h.s8.bf16 %v1135
    %v1704 = vunpack.c.h.s8.bf16 %v1136
    %v1705 = vunpack.c.h.s8.bf16 %v1137
    %v1706 = vunpack.c.l.s8.bf16 %v1138
    %v1707 = vunpack.c.l.s8.bf16 %v1139
    %v1708 = vunpack.c.l.s8.bf16 %v1140
    %v1709 = vunpack.c.l.s8.bf16 %v1141
    %v1710 = vunpack.c.h.s8.bf16 %v1138
    %v1711 = vunpack.c.h.s8.bf16 %v1139
    %v1712 = vunpack.c.h.s8.bf16 %v1140
    %v1713 = vunpack.c.h.s8.bf16 %v1141
    %v1714 = vunpack.c.l.s8.bf16 %v1142
    %v1715 = vunpack.c.l.s8.bf16 %v1143
    %v1716 = vunpack.c.l.s8.bf16 %v1144
    %v1717 = vunpack.c.l.s8.bf16 %v1145
    %v1718 = vunpack.c.h.s8.bf16 %v1142
    %v1719 = vunpack.c.h.s8.bf16 %v1143
    %v1720 = vunpack.c.h.s8.bf16 %v1144
    %v1721 = vunpack.c.h.s8.bf16 %v1145
    %v1722 = vunpack.c.l.s8.bf16 %v1146
    %v1723 = vunpack.c.l.s8.bf16 %v1147
    %v1724 = vunpack.c.l.s8.bf16 %v1148
    %v1725 = vunpack.c.l.s8.bf16 %v1149
    %v1726 = vunpack.c.h.s8.bf16 %v1146
    %v1727 = vunpack.c.h.s8.bf16 %v1147
    %v1728 = vunpack.c.h.s8.bf16 %v1148
    %v1729 = vunpack.c.h.s8.bf16 %v1149
    %v1730 = vunpack.c.l.s8.bf16 %v1150
    %v1731 = vunpack.c.l.s8.bf16 %v1151
    %v1732 = vunpack.c.l.s8.bf16 %v1152
    %v1733 = vunpack.c.l.s8.bf16 %v1153
    %v1734 = vunpack.c.h.s8.bf16 %v1150
    %v1735 = vunpack.c.h.s8.bf16 %v1151
    %v1736 = vunpack.c.h.s8.bf16 %v1152
    %v1737 = vunpack.c.h.s8.bf16 %v1153
    %v1738 = vunpack.c.l.s8.bf16 %v1154
    %v1739 = vunpack.c.l.s8.bf16 %v1155
    %v1740 = vunpack.c.l.s8.bf16 %v1156
    %v1741 = vunpack.c.l.s8.bf16 %v1157
    %v1742 = vunpack.c.h.s8.bf16 %v1154
    %v1743 = vunpack.c.h.s8.bf16 %v1155
    %v1744 = vunpack.c.h.s8.bf16 %v1156
    %v1745 = vunpack.c.h.s8.bf16 %v1157
    %v1746 = vunpack.c.l.s8.bf16 %v1158
    %v1747 = vunpack.c.l.s8.bf16 %v1159
    %v1748 = vunpack.c.l.s8.bf16 %v1160
    %v1749 = vunpack.c.l.s8.bf16 %v1161
    %v1750 = vunpack.c.h.s8.bf16 %v1158
    %v1751 = vunpack.c.h.s8.bf16 %v1159
    %v1752 = vunpack.c.h.s8.bf16 %v1160
    %v1753 = vunpack.c.h.s8.bf16 %v1161
    %v1754 = vunpack.c.l.s8.bf16 %v1162
    %v1755 = vunpack.c.l.s8.bf16 %v1163
    %v1756 = vunpack.c.l.s8.bf16 %v1164
    %v1757 = vunpack.c.l.s8.bf16 %v1165
    %v1758 = vunpack.c.h.s8.bf16 %v1162
    %v1759 = vunpack.c.h.s8.bf16 %v1163
    %v1760 = vunpack.c.h.s8.bf16 %v1164
    %v1761 = vunpack.c.h.s8.bf16 %v1165
    %v1762 = vunpack.c.l.s8.bf16 %v1166
    %v1763 = vunpack.c.l.s8.bf16 %v1167
    %v1764 = vunpack.c.l.s8.bf16 %v1168
    %v1765 = vunpack.c.l.s8.bf16 %v1169
    %v1766 = vunpack.c.h.s8.bf16 %v1166
    %v1767 = vunpack.c.h.s8.bf16 %v1167
    %v1768 = vunpack.c.h.s8.bf16 %v1168
    %v1769 = vunpack.c.h.s8.bf16 %v1169
    %v1770 = vunpack.c.l.s8.bf16 %v1170
    %v1771 = vunpack.c.l.s8.bf16 %v1171
    %v1772 = vunpack.c.l.s8.bf16 %v1172
    %v1773 = vunpack.c.l.s8.bf16 %v1173
    %v1774 = vunpack.c.h.s8.bf16 %v1170
    %v1775 = vunpack.c.h.s8.bf16 %v1171
    %v1776 = vunpack.c.h.s8.bf16 %v1172
    %v1777 = vunpack.c.h.s8.bf16 %v1173
    %v1778 = vunpack.c.l.s8.bf16 %v1174
    %v1779 = vunpack.c.l.s8.bf16 %v1175
    %v1780 = vunpack.c.l.s8.bf16 %v1176
    %v1781 = vunpack.c.l.s8.bf16 %v1177
    %v1782 = vunpack.c.h.s8.bf16 %v1174
    %v1783 = vunpack.c.h.s8.bf16 %v1175
    %v1784 = vunpack.c.h.s8.bf16 %v1176
    %v1785 = vunpack.c.h.s8.bf16 %v1177
    %v1786 = vunpack.c.l.s8.bf16 %v1178
    %v1787 = vunpack.c.l.s8.bf16 %v1179
    %v1788 = vunpack.c.l.s8.bf16 %v1180
    %v1789 = vunpack.c.l.s8.bf16 %v1181
    %v1790 = vunpack.c.h.s8.bf16 %v1178
    %v1791 = vunpack.c.h.s8.bf16 %v1179
    %v1792 = vunpack.c.h.s8.bf16 %v1180
    %v1793 = vunpack.c.h.s8.bf16 %v1181
    %v1794 = vunpack.c.l.s8.bf16 %v1182
    %v1795 = vunpack.c.l.s8.bf16 %v1183
    %v1796 = vunpack.c.l.s8.bf16 %v1184
    %v1797 = vunpack.c.l.s8.bf16 %v1185
    %v1798 = vunpack.c.h.s8.bf16 %v1182
    %v1799 = vunpack.c.h.s8.bf16 %v1183
    %v1800 = vunpack.c.h.s8.bf16 %v1184
    %v1801 = vunpack.c.h.s8.bf16 %v1185
    %v1802 = vunpack.c.l.s8.bf16 %v1186
    %v1803 = vunpack.c.l.s8.bf16 %v1187
    %v1804 = vunpack.c.l.s8.bf16 %v1188
    %v1805 = vunpack.c.l.s8.bf16 %v1189
    %v1806 = vunpack.c.h.s8.bf16 %v1186
    %v1807 = vunpack.c.h.s8.bf16 %v1187
    %v1808 = vunpack.c.h.s8.bf16 %v1188
    %v1809 = vunpack.c.h.s8.bf16 %v1189
    %v1810 = vunpack.c.l.s8.bf16 %v1190
    %v1811 = vunpack.c.l.s8.bf16 %v1191
    %v1812 = vunpack.c.l.s8.bf16 %v1192
    %v1813 = vunpack.c.l.s8.bf16 %v1193
    %v1814 = vunpack.c.h.s8.bf16 %v1190
    %v1815 = vunpack.c.h.s8.bf16 %v1191
    %v1816 = vunpack.c.h.s8.bf16 %v1192
    %v1817 = vunpack.c.h.s8.bf16 %v1193
    %v1818 = vunpack.c.l.s8.bf16 %v1194
    %v1819 = vunpack.c.l.s8.bf16 %v1195
    %v1820 = vunpack.c.l.s8.bf16 %v1196
    %v1821 = vunpack.c.l.s8.bf16 %v1197
    %v1822 = vunpack.c.h.s8.bf16 %v1194
    %v1823 = vunpack.c.h.s8.bf16 %v1195
    %v1824 = vunpack.c.h.s8.bf16 %v1196
    %v1825 = vunpack.c.h.s8.bf16 %v1197
    %v1826 = vunpack.c.l.s8.bf16 %v1198
    %v1827 = vunpack.c.l.s8.bf16 %v1199
    %v1828 = vunpack.c.l.s8.bf16 %v1200
    %v1829 = vunpack.c.l.s8.bf16 %v1201
    %v1830 = vunpack.c.h.s8.bf16 %v1198
    %v1831 = vunpack.c.h.s8.bf16 %v1199
    %v1832 = vunpack.c.h.s8.bf16 %v1200
    %v1833 = vunpack.c.h.s8.bf16 %v1201
    %v1834 = vunpack.c.l.s8.bf16 %v1202
    %v1835 = vunpack.c.l.s8.bf16 %v1203
    %v1836 = vunpack.c.l.s8.bf16 %v1204
    %v1837 = vunpack.c.l.s8.bf16 %v1205
    %v1838 = vunpack.c.h.s8.bf16 %v1202
    %v1839 = vunpack.c.h.s8.bf16 %v1203
    %v1840 = vunpack.c.h.s8.bf16 %v1204
    %v1841 = vunpack.c.h.s8.bf16 %v1205
    %v1842 = vunpack.c.l.s8.bf16 %v1206
    %v1843 = vunpack.c.l.s8.bf16 %v1207
    %v1844 = vunpack.c.l.s8.bf16 %v1208
    %v1845 = vunpack.c.l.s8.bf16 %v1209
    %v1846 = vunpack.c.h.s8.bf16 %v1206
    %v1847 = vunpack.c.h.s8.bf16 %v1207
    %v1848 = vunpack.c.h.s8.bf16 %v1208
    %v1849 = vunpack.c.h.s8.bf16 %v1209
    %v1850 = vunpack.c.l.s8.bf16 %v1210
    %v1851 = vunpack.c.l.s8.bf16 %v1211
    %v1852 = vunpack.c.l.s8.bf16 %v1212
    %v1853 = vunpack.c.l.s8.bf16 %v1213
    %v1854 = vunpack.c.h.s8.bf16 %v1210
    %v1855 = vunpack.c.h.s8.bf16 %v1211
    %v1856 = vunpack.c.h.s8.bf16 %v1212
    %v1857 = vunpack.c.h.s8.bf16 %v1213
    %v1858 = vunpack.c.l.s8.bf16 %v1214
    %v1859 = vunpack.c.l.s8.bf16 %v1215
    %v1860 = vunpack.c.l.s8.bf16 %v1216
    %v1861 = vunpack.c.l.s8.bf16 %v1217
    %v1862 = vunpack.c.h.s8.bf16 %v1214
    %v1863 = vunpack.c.h.s8.bf16 %v1215
    %v1864 = vunpack.c.h.s8.bf16 %v1216
    %v1865 = vunpack.c.h.s8.bf16 %v1217
    %v1866 = vunpack.c.l.s8.bf16 %v1218
    %v1867 = vunpack.c.l.s8.bf16 %v1219
    %v1868 = vunpack.c.l.s8.bf16 %v1220
    %v1869 = vunpack.c.l.s8.bf16 %v1221
    %v1870 = vunpack.c.h.s8.bf16 %v1218
    %v1871 = vunpack.c.h.s8.bf16 %v1219
    %v1872 = vunpack.c.h.s8.bf16 %v1220
    %v1873 = vunpack.c.h.s8.bf16 %v1221
    %v1874 = vunpack.c.l.s8.bf16 %v1222
    %v1875 = vunpack.c.l.s8.bf16 %v1223
    %v1876 = vunpack.c.l.s8.bf16 %v1224
    %v1877 = vunpack.c.l.s8.bf16 %v1225
    %v1878 = vunpack.c.h.s8.bf16 %v1222
    %v1879 = vunpack.c.h.s8.bf16 %v1223
    %v1880 = vunpack.c.h.s8.bf16 %v1224
    %v1881 = vunpack.c.h.s8.bf16 %v1225
    %v1882 = vunpack.c.l.s8.bf16 %v1226
    %v1883 = vunpack.c.l.s8.bf16 %v1227
    %v1884 = vunpack.c.l.s8.bf16 %v1228
    %v1885 = vunpack.c.l.s8.bf16 %v1229
    %v1886 = vunpack.c.h.s8.bf16 %v1226
    %v1887 = vunpack.c.h.s8.bf16 %v1227
    %v1888 = vunpack.c.h.s8.bf16 %v1228
    %v1889 = vunpack.c.h.s8.bf16 %v1229
    %v1890 = vunpack.c.l.s8.bf16 %v1230
    %v1891 = vunpack.c.l.s8.bf16 %v1231
    %v1892 = vunpack.c.l.s8.bf16 %v1232
    %v1893 = vunpack.c.l.s8.bf16 %v1233
    %v1894 = vunpack.c.h.s8.bf16 %v1230
    %v1895 = vunpack.c.h.s8.bf16 %v1231
    %v1896 = vunpack.c.h.s8.bf16 %v1232
    %v1897 = vunpack.c.h.s8.bf16 %v1233
    %v1898 = vunpack.c.l.s8.bf16 %v1234
    %v1899 = vunpack.c.l.s8.bf16 %v1235
    %v1900 = vunpack.c.l.s8.bf16 %v1236
    %v1901 = vunpack.c.l.s8.bf16 %v1237
    %v1902 = vunpack.c.h.s8.bf16 %v1234
    %v1903 = vunpack.c.h.s8.bf16 %v1235
    %v1904 = vunpack.c.h.s8.bf16 %v1236
    %v1905 = vunpack.c.h.s8.bf16 %v1237
    %v1906 = vunpack.c.l.s8.bf16 %v1238
    %v1907 = vunpack.c.l.s8.bf16 %v1239
    %v1908 = vunpack.c.l.s8.bf16 %v1240
    %v1909 = vunpack.c.l.s8.bf16 %v1241
    %v1910 = vunpack.c.h.s8.bf16 %v1238
    %v1911 = vunpack.c.h.s8.bf16 %v1239
    %v1912 = vunpack.c.h.s8.bf16 %v1240
    %v1913 = vunpack.c.h.s8.bf16 %v1241
    %v1914 = vunpack.c.l.s8.bf16 %v1242
    %v1915 = vunpack.c.l.s8.bf16 %v1243
    %v1916 = vunpack.c.l.s8.bf16 %v1244
    %v1917 = vunpack.c.l.s8.bf16 %v1245
    %v1918 = vunpack.c.h.s8.bf16 %v1242
    %v1919 = vunpack.c.h.s8.bf16 %v1243
    %v1920 = vunpack.c.h.s8.bf16 %v1244
    %v1921 = vunpack.c.h.s8.bf16 %v1245
    %v1922 = vunpack.c.l.s8.bf16 %v1246
    %v1923 = vunpack.c.l.s8.bf16 %v1247
    %v1924 = vunpack.c.l.s8.bf16 %v1248
    %v1925 = vunpack.c.l.s8.bf16 %v1249
    %v1926 = vunpack.c.h.s8.bf16 %v1246
    %v1927 = vunpack.c.h.s8.bf16 %v1247
    %v1928 = vunpack.c.h.s8.bf16 %v1248
    %v1929 = vunpack.c.h.s8.bf16 %v1249
    %v1930 = vunpack.c.l.s8.bf16 %v1250
    %v1931 = vunpack.c.l.s8.bf16 %v1251
    %v1932 = vunpack.c.l.s8.bf16 %v1252
    %v1933 = vunpack.c.l.s8.bf16 %v1253
    %v1934 = vunpack.c.h.s8.bf16 %v1250
    %v1935 = vunpack.c.h.s8.bf16 %v1251
    %v1936 = vunpack.c.h.s8.bf16 %v1252
    %v1937 = vunpack.c.h.s8.bf16 %v1253
    %v1938 = vunpack.c.l.s8.bf16 %v1254
    %v1939 = vunpack.c.l.s8.bf16 %v1255
    %v1940 = vunpack.c.l.s8.bf16 %v1256
    %v1941 = vunpack.c.l.s8.bf16 %v1257
    %v1942 = vunpack.c.h.s8.bf16 %v1254
    %v1943 = vunpack.c.h.s8.bf16 %v1255
    %v1944 = vunpack.c.h.s8.bf16 %v1256
    %v1945 = vunpack.c.h.s8.bf16 %v1257
    %v1946 = vunpack.c.l.s8.bf16 %v1258
    %v1947 = vunpack.c.l.s8.bf16 %v1259
    %v1948 = vunpack.c.l.s8.bf16 %v1260
    %v1949 = vunpack.c.l.s8.bf16 %v1261
    %v1950 = vunpack.c.h.s8.bf16 %v1258
    %v1951 = vunpack.c.h.s8.bf16 %v1259
    %v1952 = vunpack.c.h.s8.bf16 %v1260
    %v1953 = vunpack.c.h.s8.bf16 %v1261
    %v1954 = vunpack.c.l.s8.bf16 %v1262
    %v1955 = vunpack.c.l.s8.bf16 %v1263
    %v1956 = vunpack.c.l.s8.bf16 %v1264
    %v1957 = vunpack.c.l.s8.bf16 %v1265
    %v1958 = vunpack.c.h.s8.bf16 %v1262
    %v1959 = vunpack.c.h.s8.bf16 %v1263
    %v1960 = vunpack.c.h.s8.bf16 %v1264
    %v1961 = vunpack.c.h.s8.bf16 %v1265
    %v1962 = vunpack.c.l.s8.bf16 %v1266
    %v1963 = vunpack.c.l.s8.bf16 %v1267
    %v1964 = vunpack.c.l.s8.bf16 %v1268
    %v1965 = vunpack.c.l.s8.bf16 %v1269
    %v1966 = vunpack.c.h.s8.bf16 %v1266
    %v1967 = vunpack.c.h.s8.bf16 %v1267
    %v1968 = vunpack.c.h.s8.bf16 %v1268
    %v1969 = vunpack.c.h.s8.bf16 %v1269
    %v1970 = vunpack.c.l.s8.bf16 %v1270
    %v1971 = vunpack.c.l.s8.bf16 %v1271
    %v1972 = vunpack.c.l.s8.bf16 %v1272
    %v1973 = vunpack.c.l.s8.bf16 %v1273
    %v1974 = vunpack.c.h.s8.bf16 %v1270
    %v1975 = vunpack.c.h.s8.bf16 %v1271
    %v1976 = vunpack.c.h.s8.bf16 %v1272
    %v1977 = vunpack.c.h.s8.bf16 %v1273
    %v1978 = vunpack.c.l.s8.bf16 %v1274
    %v1979 = vunpack.c.l.s8.bf16 %v1275
    %v1980 = vunpack.c.l.s8.bf16 %v1276
    %v1981 = vunpack.c.l.s8.bf16 %v1277
    %v1982 = vunpack.c.h.s8.bf16 %v1274
    %v1983 = vunpack.c.h.s8.bf16 %v1275
    %v1984 = vunpack.c.h.s8.bf16 %v1276
    %v1985 = vunpack.c.h.s8.bf16 %v1277
    %v1986 = vunpack.c.l.s8.bf16 %v1278
    %v1987 = vunpack.c.l.s8.bf16 %v1279
    %v1988 = vunpack.c.l.s8.bf16 %v1280
    %v1989 = vunpack.c.l.s8.bf16 %v1281
    %v1990 = vunpack.c.h.s8.bf16 %v1278
    %v1991 = vunpack.c.h.s8.bf16 %v1279
    %v1992 = vunpack.c.h.s8.bf16 %v1280
    %v1993 = vunpack.c.h.s8.bf16 %v1281
    %v1994 = vunpack.c.l.s8.bf16 %v1282
    %v1995 = vunpack.c.l.s8.bf16 %v1283
    %v1996 = vunpack.c.l.s8.bf16 %v1284
    %v1997 = vunpack.c.l.s8.bf16 %v1285
    %v1998 = vunpack.c.h.s8.bf16 %v1282
    %v1999 = vunpack.c.h.s8.bf16 %v1283
    %v2000 = vunpack.c.h.s8.bf16 %v1284
    %v2001 = vunpack.c.h.s8.bf16 %v1285
    %v2002 = vunpack.c.l.s8.bf16 %v1286
    %v2003 = vunpack.c.l.s8.bf16 %v1287
    %v2004 = vunpack.c.l.s8.bf16 %v1288
    %v2005 = vunpack.c.l.s8.bf16 %v1289
    %v2006 = vunpack.c.h.s8.bf16 %v1286
    %v2007 = vunpack.c.h.s8.bf16 %v1287
    %v2008 = vunpack.c.h.s8.bf16 %v1288
    %v2009 = vunpack.c.h.s8.bf16 %v1289
    %v2010 = vunpack.c.l.s8.bf16 %v1290
    %v2011 = vunpack.c.l.s8.bf16 %v1291
    %v2012 = vunpack.c.l.s8.bf16 %v1292
    %v2013 = vunpack.c.l.s8.bf16 %v1293
    %v2014 = vunpack.c.h.s8.bf16 %v1290
    %v2015 = vunpack.c.h.s8.bf16 %v1291
    %v2016 = vunpack.c.h.s8.bf16 %v1292
    %v2017 = vunpack.c.h.s8.bf16 %v1293
    %v2018 = vunpack.c.l.s8.bf16 %v1294
    %v2019 = vunpack.c.l.s8.bf16 %v1295
    %v2020 = vunpack.c.l.s8.bf16 %v1296
    %v2021 = vunpack.c.l.s8.bf16 %v1297
    %v2022 = vunpack.c.h.s8.bf16 %v1294
    %v2023 = vunpack.c.h.s8.bf16 %v1295
    %v2024 = vunpack.c.h.s8.bf16 %v1296
    %v2025 = vunpack.c.h.s8.bf16 %v1297
    %v2026 = vunpack.c.l.s8.bf16 %v1298
    %v2027 = vunpack.c.l.s8.bf16 %v1299
    %v2028 = vunpack.c.l.s8.bf16 %v1300
    %v2029 = vunpack.c.l.s8.bf16 %v1301
    %v2030 = vunpack.c.h.s8.bf16 %v1298
    %v2031 = vunpack.c.h.s8.bf16 %v1299
    %v2032 = vunpack.c.h.s8.bf16 %v1300
    %v2033 = vunpack.c.h.s8.bf16 %v1301
    %v2034 = vunpack.c.l.s8.bf16 %v1302
    %v2035 = vunpack.c.l.s8.bf16 %v1303
    %v2036 = vunpack.c.l.s8.bf16 %v1304
    %v2037 = vunpack.c.l.s8.bf16 %v1305
    %v2038 = vunpack.c.h.s8.bf16 %v1302
    %v2039 = vunpack.c.h.s8.bf16 %v1303
    %v2040 = vunpack.c.h.s8.bf16 %v1304
    %v2041 = vunpack.c.h.s8.bf16 %v1305
    %v2042 = vunpack.c.l.s8.bf16 %v1306
    %v2043 = vunpack.c.l.s8.bf16 %v1307
    %v2044 = vunpack.c.l.s8.bf16 %v1308
    %v2045 = vunpack.c.l.s8.bf16 %v1309
    %v2046 = vunpack.c.h.s8.bf16 %v1306
    %v2047 = vunpack.c.h.s8.bf16 %v1307
    %v2048 = vunpack.c.h.s8.bf16 %v1308
    %v2049 = vunpack.c.h.s8.bf16 %v1309
    %v2050 = vunpack.c.l.s8.bf16 %v1310
    %v2051 = vunpack.c.l.s8.bf16 %v1311
    %v2052 = vunpack.c.l.s8.bf16 %v1312
    %v2053 = vunpack.c.l.s8.bf16 %v1313
    %v2054 = vunpack.c.h.s8.bf16 %v1310
    %v2055 = vunpack.c.h.s8.bf16 %v1311
    %v2056 = vunpack.c.h.s8.bf16 %v1312
    %v2057 = vunpack.c.h.s8.bf16 %v1313
    %v2058 = vunpack.c.l.s8.bf16 %v1314
    %v2059 = vunpack.c.l.s8.bf16 %v1315
    %v2060 = vunpack.c.l.s8.bf16 %v1316
    %v2061 = vunpack.c.l.s8.bf16 %v1317
    %v2062 = vunpack.c.h.s8.bf16 %v1314
    %v2063 = vunpack.c.h.s8.bf16 %v1315
    %v2064 = vunpack.c.h.s8.bf16 %v1316
    %v2065 = vunpack.c.h.s8.bf16 %v1317
    %v2066 = vunpack.c.l.s8.bf16 %v1318
    %v2067 = vunpack.c.l.s8.bf16 %v1319
    %v2068 = vunpack.c.l.s8.bf16 %v1320
    %v2069 = vunpack.c.l.s8.bf16 %v1321
    %v2070 = vunpack.c.h.s8.bf16 %v1318
    %v2071 = vunpack.c.h.s8.bf16 %v1319
    %v2072 = vunpack.c.h.s8.bf16 %v1320
    %v2073 = vunpack.c.h.s8.bf16 %v1321
    %v2074 = vunpack.c.l.s8.bf16 %v1322
    %v2075 = vunpack.c.l.s8.bf16 %v1323
    %v2076 = vunpack.c.l.s8.bf16 %v1324
    %v2077 = vunpack.c.l.s8.bf16 %v1325
    %v2078 = vunpack.c.h.s8.bf16 %v1322
    %v2079 = vunpack.c.h.s8.bf16 %v1323
    %v2080 = vunpack.c.h.s8.bf16 %v1324
    %v2081 = vunpack.c.h.s8.bf16 %v1325
    %v2082 = vunpack.c.l.s8.bf16 %v1326
    %v2083 = vunpack.c.l.s8.bf16 %v1327
    %v2084 = vunpack.c.l.s8.bf16 %v1328
    %v2085 = vunpack.c.l.s8.bf16 %v1329
    %v2086 = vunpack.c.h.s8.bf16 %v1326
    %v2087 = vunpack.c.h.s8.bf16 %v1327
    %v2088 = vunpack.c.h.s8.bf16 %v1328
    %v2089 = vunpack.c.h.s8.bf16 %v1329
    %v2090 = vunpack.c.l.s8.bf16 %v1330
    %v2091 = vunpack.c.l.s8.bf16 %v1331
    %v2092 = vunpack.c.l.s8.bf16 %v1332
    %v2093 = vunpack.c.l.s8.bf16 %v1333
    %v2094 = vunpack.c.h.s8.bf16 %v1330
    %v2095 = vunpack.c.h.s8.bf16 %v1331
    %v2096 = vunpack.c.h.s8.bf16 %v1332
    %v2097 = vunpack.c.h.s8.bf16 %v1333
    %v2098 = vunpack.c.l.s8.bf16 %v1334
    %v2099 = vunpack.c.l.s8.bf16 %v1335
    %v2100 = vunpack.c.l.s8.bf16 %v1336
    %v2101 = vunpack.c.l.s8.bf16 %v1337
    %v2102 = vunpack.c.h.s8.bf16 %v1334
    %v2103 = vunpack.c.h.s8.bf16 %v1335
    %v2104 = vunpack.c.h.s8.bf16 %v1336
    %v2105 = vunpack.c.h.s8.bf16 %v1337
    %v2106 = vpack.c.bf16 %v930, %v930
    %v2107 = vpack.c.bf16 %v931, %v931
    %v2108 = vpack.c.bf16 %v932, %v932
    %v2109 = vpack.c.bf16 %v933, %v933
    %v2110 = vpack.c.bf16 %v934, %v934
    %v2111 = vpack.c.bf16 %v935, %v935
    %v2112 = vpack.c.bf16 %v936, %v936
    %v2113 = vpack.c.bf16 %v937, %v937
    %v2114 = vpack.c.bf16 %v938, %v938
    %v2115 = vpack.c.bf16 %v939, %v939
    %v2116 = vpack.c.bf16 %v940, %v940
    %v2117 = vpack.c.bf16 %v941, %v941
    %v2118 = vpack.c.bf16 %v942, %v942
    %v2119 = vpack.c.bf16 %v943, %v943
    %v2120 = vpack.c.bf16 %v944, %v944
    %v2121 = vpack.c.bf16 %v945, %v945
    %v2122 = vpack.c.bf16 %v946, %v946
    %v2123 = vpack.c.bf16 %v947, %v947
    %v2124 = vpack.c.bf16 %v948, %v948
    %v2125 = vpack.c.bf16 %v949, %v949
    %v2126 = vpack.c.bf16 %v950, %v950
    %v2127 = vpack.c.bf16 %v951, %v951
    %v2128 = vpack.c.bf16 %v952, %v952
    %v2129 = vpack.c.bf16 %v953, %v953
    %2130 = vmatprep.subr.bf16.mxu0 %v1367
    %2131 = vmatpush1.bf16.msra.mxu0 %v1366
    %2132 = vmatprep.subr.bf16.mxu0 %v1363
    %2133 = vmatpush1.bf16.msra.mxu0 %v1362
    %2134 = vmatprep.subr.bf16.mxu0 %v1359
    %2135 = vmatpush1.bf16.msra.mxu0 %v1358
    %2136 = vmatprep.subr.bf16.mxu0 %v1355
    %2137 = vmatpush1.bf16.msra.mxu0 %v1354
    %2138 = vmatprep.subr.bf16.mxu0 %v1351
    %2139 = vmatpush1.bf16.msra.mxu0 %v1350
    %2140 = vmatprep.subr.bf16.mxu0 %v1347
    %2141 = vmatpush1.bf16.msra.mxu0 %v1346
    %2142 = vmatprep.subr.bf16.mxu0 %v1343
    %2143 = vmatpush1.bf16.msra.mxu0 %v1342
    %2144 = vmatprep.subr.bf16.mxu0 %v1339
    %2145 = vmatpush1.bf16.msra.mxu0 %v1338
    %2146 = vmatprep.subr.bf16.mxu0 %v1399
    %2147 = vmatpush2.bf16.msra.mxu0 %v1398
    %2148 = vmatprep.subr.bf16.mxu0 %v1395
    %2149 = vmatpush2.bf16.msra.mxu0 %v1394
    %2150 = vmatprep.subr.bf16.mxu0 %v1391
    %2151 = vmatpush2.bf16.msra.mxu0 %v1390
    %2152 = vmatprep.subr.bf16.mxu0 %v1387
    %2153 = vmatpush2.bf16.msra.mxu0 %v1386
    %2154 = vmatprep.subr.bf16.mxu0 %v1383
    %2155 = vmatpush2.bf16.msra.mxu0 %v1382
    %2156 = vmatprep.subr.bf16.mxu0 %v1379
    %2157 = vmatpush2.bf16.msra.mxu0 %v1378
    %2158 = vmatprep.subr.bf16.mxu0 %v1375
    %2159 = vmatpush2.bf16.msra.mxu0 %v1374
    %2160 = vmatprep.subr.bf16.mxu0 %v1371
    %2161 = vmatpush2.bf16.msra.mxu0 %v1370
    %2162 = vmatprep.mubr.bf16.mxu0 %v2107
    %2163 = vmatmul.mubr.bf16.gmra.mxu0 %v2106
    %v2164 = vpop.f32.mrf.mxu0
    %v2165 = vadd.f32 0.0, %v2164
    %v2166 = vpop.f32.mrf.mxu0
    %v2167 = vadd.f32 0.0, %v2166
    %v2168 = vpop.f32.mrf.mxu0
    %v2169 = vpop.f32.mrf.mxu0
    %2170 = vdwg.mxu0
    %2171 = vmatprep.subr.bf16.mxu0 %v1431
    %2172 = vmatpush1.bf16.msra.mxu0 %v1430
    %2173 = vmatprep.subr.bf16.mxu0 %v1427
    %2174 = vmatpush1.bf16.msra.mxu0 %v1426
    %2175 = vmatprep.subr.bf16.mxu0 %v1423
    %2176 = vmatpush1.bf16.msra.mxu0 %v1422
    %2177 = vmatprep.subr.bf16.mxu0 %v1419
    %2178 = vmatpush1.bf16.msra.mxu0 %v1418
    %2179 = vmatprep.subr.bf16.mxu0 %v1415
    %2180 = vmatpush1.bf16.msra.mxu0 %v1414
    %2181 = vmatprep.subr.bf16.mxu0 %v1411
    %2182 = vmatpush1.bf16.msra.mxu0 %v1410
    %2183 = vmatprep.subr.bf16.mxu0 %v1407
    %2184 = vmatpush1.bf16.msra.mxu0 %v1406
    %2185 = vmatprep.subr.bf16.mxu0 %v1403
    %2186 = vmatpush1.bf16.msra.mxu0 %v1402
    %2187 = vmatprep.subr.bf16.mxu0 %v1463
    %2188 = vmatpush2.bf16.msra.mxu0 %v1462
    %2189 = vmatprep.subr.bf16.mxu0 %v1459
    %2190 = vmatpush2.bf16.msra.mxu0 %v1458
    %2191 = vmatprep.subr.bf16.mxu0 %v1455
    %2192 = vmatpush2.bf16.msra.mxu0 %v1454
    %2193 = vmatprep.subr.bf16.mxu0 %v1451
    %2194 = vmatpush2.bf16.msra.mxu0 %v1450
    %2195 = vmatprep.subr.bf16.mxu0 %v1447
    %2196 = vmatpush2.bf16.msra.mxu0 %v1446
    %2197 = vmatprep.subr.bf16.mxu0 %v1443
    %2198 = vmatpush2.bf16.msra.mxu0 %v1442
    %2199 = vmatprep.subr.bf16.mxu0 %v1439
    %2200 = vmatpush2.bf16.msra.mxu0 %v1438
    %2201 = vmatprep.subr.bf16.mxu0 %v1435
    %2202 = vmatpush2.bf16.msra.mxu0 %v1434
    %2203 = vmatprep.mubr.bf16.mxu0 %v2109
    %2204 = vmatmul.mubr.bf16.gmra.mxu0 %v2108
    %v2205 = vpop.f32.mrf.mxu0
    %v2206 = vadd.f32 %v2165, %v2205
    %v2207 = vpop.f32.mrf.mxu0
    %v2208 = vadd.f32 %v2167, %v2207
    %v2209 = vpop.f32.mrf.mxu0
    %v2210 = vpop.f32.mrf.mxu0
    %2211 = vdwg.mxu0
    %2212 = vmatprep.subr.bf16.mxu0 %v1495
    %2213 = vmatpush1.bf16.msra.mxu0 %v1494
    %2214 = vmatprep.subr.bf16.mxu0 %v1491
    %2215 = vmatpush1.bf16.msra.mxu0 %v1490
    %2216 = vmatprep.subr.bf16.mxu0 %v1487
    %2217 = vmatpush1.bf16.msra.mxu0 %v1486
    %2218 = vmatprep.subr.bf16.mxu0 %v1483
    %2219 = vmatpush1.bf16.msra.mxu0 %v1482
    %2220 = vmatprep.subr.bf16.mxu0 %v1479
    %2221 = vmatpush1.bf16.msra.mxu0 %v1478
    %2222 = vmatprep.subr.bf16.mxu0 %v1475
    %2223 = vmatpush1.bf16.msra.mxu0 %v1474
    %2224 = vmatprep.subr.bf16.mxu0 %v1471
    %2225 = vmatpush1.bf16.msra.mxu0 %v1470
    %2226 = vmatprep.subr.bf16.mxu0 %v1467
    %2227 = vmatpush1.bf16.msra.mxu0 %v1466
    %2228 = vmatprep.subr.bf16.mxu0 %v1527
    %2229 = vmatpush2.bf16.msra.mxu0 %v1526
    %2230 = vmatprep.subr.bf16.mxu0 %v1523
    %2231 = vmatpush2.bf16.msra.mxu0 %v1522
    %2232 = vmatprep.subr.bf16.mxu0 %v1519
    %2233 = vmatpush2.bf16.msra.mxu0 %v1518
    %2234 = vmatprep.subr.bf16.mxu0 %v1515
    %2235 = vmatpush2.bf16.msra.mxu0 %v1514
    %2236 = vmatprep.subr.bf16.mxu0 %v1511
    %2237 = vmatpush2.bf16.msra.mxu0 %v1510
    %2238 = vmatprep.subr.bf16.mxu0 %v1507
    %2239 = vmatpush2.bf16.msra.mxu0 %v1506
    %2240 = vmatprep.subr.bf16.mxu0 %v1503
    %2241 = vmatpush2.bf16.msra.mxu0 %v1502
    %2242 = vmatprep.subr.bf16.mxu0 %v1499
    %2243 = vmatpush2.bf16.msra.mxu0 %v1498
    %2244 = vmatprep.mubr.bf16.mxu0 %v2111
    %2245 = vmatmul.mubr.bf16.gmra.mxu0 %v2110
    %v2246 = vpop.f32.mrf.mxu0
    %v2247 = vadd.f32 %v2206, %v2246
    %v2248 = vpop.f32.mrf.mxu0
    %v2249 = vadd.f32 %v2208, %v2248
    %v2250 = vpop.f32.mrf.mxu0
    %v2251 = vpop.f32.mrf.mxu0
    %2252 = vdwg.mxu0
    %2253 = vmatprep.subr.bf16.mxu0 %v1559
    %2254 = vmatpush1.bf16.msra.mxu0 %v1558
    %2255 = vmatprep.subr.bf16.mxu0 %v1555
    %2256 = vmatpush1.bf16.msra.mxu0 %v1554
    %2257 = vmatprep.subr.bf16.mxu0 %v1551
    %2258 = vmatpush1.bf16.msra.mxu0 %v1550
    %2259 = vmatprep.subr.bf16.mxu0 %v1547
    %2260 = vmatpush1.bf16.msra.mxu0 %v1546
    %2261 = vmatprep.subr.bf16.mxu0 %v1543
    %2262 = vmatpush1.bf16.msra.mxu0 %v1542
    %2263 = vmatprep.subr.bf16.mxu0 %v1539
    %2264 = vmatpush1.bf16.msra.mxu0 %v1538
    %2265 = vmatprep.subr.bf16.mxu0 %v1535
    %2266 = vmatpush1.bf16.msra.mxu0 %v1534
    %2267 = vmatprep.subr.bf16.mxu0 %v1531
    %2268 = vmatpush1.bf16.msra.mxu0 %v1530
    %2269 = vmatprep.subr.bf16.mxu0 %v1591
    %2270 = vmatpush2.bf16.msra.mxu0 %v1590
    %2271 = vmatprep.subr.bf16.mxu0 %v1587
    %2272 = vmatpush2.bf16.msra.mxu0 %v1586
    %2273 = vmatprep.subr.bf16.mxu0 %v1583
    %2274 = vmatpush2.bf16.msra.mxu0 %v1582
    %2275 = vmatprep.subr.bf16.mxu0 %v1579
    %2276 = vmatpush2.bf16.msra.mxu0 %v1578
    %2277 = vmatprep.subr.bf16.mxu0 %v1575
    %2278 = vmatpush2.bf16.msra.mxu0 %v1574
    %2279 = vmatprep.subr.bf16.mxu0 %v1571
    %2280 = vmatpush2.bf16.msra.mxu0 %v1570
    %2281 = vmatprep.subr.bf16.mxu0 %v1567
    %2282 = vmatpush2.bf16.msra.mxu0 %v1566
    %2283 = vmatprep.subr.bf16.mxu0 %v1563
    %2284 = vmatpush2.bf16.msra.mxu0 %v1562
    %2285 = vmatprep.mubr.bf16.mxu0 %v2113
    %2286 = vmatmul.mubr.bf16.gmra.mxu0 %v2112
    %v2287 = vpop.f32.mrf.mxu0
    %v2288 = vadd.f32 %v2247, %v2287
    %v2289 = vpop.f32.mrf.mxu0
    %v2290 = vadd.f32 %v2249, %v2289
    %v2291 = vpop.f32.mrf.mxu0
    %v2292 = vpop.f32.mrf.mxu0
    %2293 = vdwg.mxu0
    %2294 = vmatprep.subr.bf16.mxu0 %v1623
    %2295 = vmatpush1.bf16.msra.mxu0 %v1622
    %2296 = vmatprep.subr.bf16.mxu0 %v1619
    %2297 = vmatpush1.bf16.msra.mxu0 %v1618
    %2298 = vmatprep.subr.bf16.mxu0 %v1615
    %2299 = vmatpush1.bf16.msra.mxu0 %v1614
    %2300 = vmatprep.subr.bf16.mxu0 %v1611
    %2301 = vmatpush1.bf16.msra.mxu0 %v1610
    %2302 = vmatprep.subr.bf16.mxu0 %v1607
    %2303 = vmatpush1.bf16.msra.mxu0 %v1606
    %2304 = vmatprep.subr.bf16.mxu0 %v1603
    %2305 = vmatpush1.bf16.msra.mxu0 %v1602
    %2306 = vmatprep.subr.bf16.mxu0 %v1599
    %2307 = vmatpush1.bf16.msra.mxu0 %v1598
    %2308 = vmatprep.subr.bf16.mxu0 %v1595
    %2309 = vmatpush1.bf16.msra.mxu0 %v1594
    %2310 = vmatprep.subr.bf16.mxu0 %v1655
    %2311 = vmatpush2.bf16.msra.mxu0 %v1654
    %2312 = vmatprep.subr.bf16.mxu0 %v1651
    %2313 = vmatpush2.bf16.msra.mxu0 %v1650
    %2314 = vmatprep.subr.bf16.mxu0 %v1647
    %2315 = vmatpush2.bf16.msra.mxu0 %v1646
    %2316 = vmatprep.subr.bf16.mxu0 %v1643
    %2317 = vmatpush2.bf16.msra.mxu0 %v1642
    %2318 = vmatprep.subr.bf16.mxu0 %v1639
    %2319 = vmatpush2.bf16.msra.mxu0 %v1638
    %2320 = vmatprep.subr.bf16.mxu0 %v1635
    %2321 = vmatpush2.bf16.msra.mxu0 %v1634
    %2322 = vmatprep.subr.bf16.mxu0 %v1631
    %2323 = vmatpush2.bf16.msra.mxu0 %v1630
    %2324 = vmatprep.subr.bf16.mxu0 %v1627
    %2325 = vmatpush2.bf16.msra.mxu0 %v1626
    %2326 = vmatprep.mubr.bf16.mxu0 %v2115
    %2327 = vmatmul.mubr.bf16.gmra.mxu0 %v2114
    %v2328 = vpop.f32.mrf.mxu0
    %v2329 = vadd.f32 %v2288, %v2328
    %v2330 = vpop.f32.mrf.mxu0
    %v2331 = vadd.f32 %v2290, %v2330
    %v2332 = vpop.f32.mrf.mxu0
    %v2333 = vpop.f32.mrf.mxu0
    %2334 = vdwg.mxu0
    %2335 = vmatprep.subr.bf16.mxu0 %v1687
    %2336 = vmatpush1.bf16.msra.mxu0 %v1686
    %2337 = vmatprep.subr.bf16.mxu0 %v1683
    %2338 = vmatpush1.bf16.msra.mxu0 %v1682
    %2339 = vmatprep.subr.bf16.mxu0 %v1679
    %2340 = vmatpush1.bf16.msra.mxu0 %v1678
    %2341 = vmatprep.subr.bf16.mxu0 %v1675
    %2342 = vmatpush1.bf16.msra.mxu0 %v1674
    %2343 = vmatprep.subr.bf16.mxu0 %v1671
    %2344 = vmatpush1.bf16.msra.mxu0 %v1670
    %2345 = vmatprep.subr.bf16.mxu0 %v1667
    %2346 = vmatpush1.bf16.msra.mxu0 %v1666
    %2347 = vmatprep.subr.bf16.mxu0 %v1663
    %2348 = vmatpush1.bf16.msra.mxu0 %v1662
    %2349 = vmatprep.subr.bf16.mxu0 %v1659
    %2350 = vmatpush1.bf16.msra.mxu0 %v1658
    %2351 = vmatprep.subr.bf16.mxu0 %v1719
    %2352 = vmatpush2.bf16.msra.mxu0 %v1718
    %2353 = vmatprep.subr.bf16.mxu0 %v1715
    %2354 = vmatpush2.bf16.msra.mxu0 %v1714
    %2355 = vmatprep.subr.bf16.mxu0 %v1711
    %2356 = vmatpush2.bf16.msra.mxu0 %v1710
    %2357 = vmatprep.subr.bf16.mxu0 %v1707
    %2358 = vmatpush2.bf16.msra.mxu0 %v1706
    %2359 = vmatprep.subr.bf16.mxu0 %v1703
    %2360 = vmatpush2.bf16.msra.mxu0 %v1702
    %2361 = vmatprep.subr.bf16.mxu0 %v1699
    %2362 = vmatpush2.bf16.msra.mxu0 %v1698
    %2363 = vmatprep.subr.bf16.mxu0 %v1695
    %2364 = vmatpush2.bf16.msra.mxu0 %v1694
    %2365 = vmatprep.subr.bf16.mxu0 %v1691
    %2366 = vmatpush2.bf16.msra.mxu0 %v1690
    %2367 = vmatprep.mubr.bf16.mxu0 %v2117
    %2368 = vmatmul.mubr.bf16.gmra.mxu0 %v2116
    %v2369 = vpop.f32.mrf.mxu0
    %v2370 = vadd.f32 %v2329, %v2369
    %v2371 = vpop.f32.mrf.mxu0
    %v2372 = vadd.f32 %v2331, %v2371
    %v2373 = vpop.f32.mrf.mxu0
    %v2374 = vpop.f32.mrf.mxu0
    %2375 = vdwg.mxu0
    %2376 = vmatprep.subr.bf16.mxu0 %v1751
    %2377 = vmatpush1.bf16.msra.mxu0 %v1750
    %2378 = vmatprep.subr.bf16.mxu0 %v1747
    %2379 = vmatpush1.bf16.msra.mxu0 %v1746
    %2380 = vmatprep.subr.bf16.mxu0 %v1743
    %2381 = vmatpush1.bf16.msra.mxu0 %v1742
    %2382 = vmatprep.subr.bf16.mxu0 %v1739
    %2383 = vmatpush1.bf16.msra.mxu0 %v1738
    %2384 = vmatprep.subr.bf16.mxu0 %v1735
    %2385 = vmatpush1.bf16.msra.mxu0 %v1734
    %2386 = vmatprep.subr.bf16.mxu0 %v1731
    %2387 = vmatpush1.bf16.msra.mxu0 %v1730
    %2388 = vmatprep.subr.bf16.mxu0 %v1727
    %2389 = vmatpush1.bf16.msra.mxu0 %v1726
    %2390 = vmatprep.subr.bf16.mxu0 %v1723
    %2391 = vmatpush1.bf16.msra.mxu0 %v1722
    %2392 = vmatprep.subr.bf16.mxu0 %v1783
    %2393 = vmatpush2.bf16.msra.mxu0 %v1782
    %2394 = vmatprep.subr.bf16.mxu0 %v1779
    %2395 = vmatpush2.bf16.msra.mxu0 %v1778
    %2396 = vmatprep.subr.bf16.mxu0 %v1775
    %2397 = vmatpush2.bf16.msra.mxu0 %v1774
    %2398 = vmatprep.subr.bf16.mxu0 %v1771
    %2399 = vmatpush2.bf16.msra.mxu0 %v1770
    %2400 = vmatprep.subr.bf16.mxu0 %v1767
    %2401 = vmatpush2.bf16.msra.mxu0 %v1766
    %2402 = vmatprep.subr.bf16.mxu0 %v1763
    %2403 = vmatpush2.bf16.msra.mxu0 %v1762
    %2404 = vmatprep.subr.bf16.mxu0 %v1759
    %2405 = vmatpush2.bf16.msra.mxu0 %v1758
    %2406 = vmatprep.subr.bf16.mxu0 %v1755
    %2407 = vmatpush2.bf16.msra.mxu0 %v1754
    %2408 = vmatprep.mubr.bf16.mxu0 %v2119
    %2409 = vmatmul.mubr.bf16.gmra.mxu0 %v2118
    %v2410 = vpop.f32.mrf.mxu0
    %v2411 = vadd.f32 %v2370, %v2410
    %v2412 = vpop.f32.mrf.mxu0
    %v2413 = vadd.f32 %v2372, %v2412
    %v2414 = vpop.f32.mrf.mxu0
    %v2415 = vpop.f32.mrf.mxu0
    %2416 = vdwg.mxu0
    %2417 = vmatprep.subr.bf16.mxu0 %v1815
    %2418 = vmatpush1.bf16.msra.mxu0 %v1814
    %2419 = vmatprep.subr.bf16.mxu0 %v1811
    %2420 = vmatpush1.bf16.msra.mxu0 %v1810
    %2421 = vmatprep.subr.bf16.mxu0 %v1807
    %2422 = vmatpush1.bf16.msra.mxu0 %v1806
    %2423 = vmatprep.subr.bf16.mxu0 %v1803
    %2424 = vmatpush1.bf16.msra.mxu0 %v1802
    %2425 = vmatprep.subr.bf16.mxu0 %v1799
    %2426 = vmatpush1.bf16.msra.mxu0 %v1798
    %2427 = vmatprep.subr.bf16.mxu0 %v1795
    %2428 = vmatpush1.bf16.msra.mxu0 %v1794
    %2429 = vmatprep.subr.bf16.mxu0 %v1791
    %2430 = vmatpush1.bf16.msra.mxu0 %v1790
    %2431 = vmatprep.subr.bf16.mxu0 %v1787
    %2432 = vmatpush1.bf16.msra.mxu0 %v1786
    %2433 = vmatprep.subr.bf16.mxu0 %v1847
    %2434 = vmatpush2.bf16.msra.mxu0 %v1846
    %2435 = vmatprep.subr.bf16.mxu0 %v1843
    %2436 = vmatpush2.bf16.msra.mxu0 %v1842
    %2437 = vmatprep.subr.bf16.mxu0 %v1839
    %2438 = vmatpush2.bf16.msra.mxu0 %v1838
    %2439 = vmatprep.subr.bf16.mxu0 %v1835
    %2440 = vmatpush2.bf16.msra.mxu0 %v1834
    %2441 = vmatprep.subr.bf16.mxu0 %v1831
    %2442 = vmatpush2.bf16.msra.mxu0 %v1830
    %2443 = vmatprep.subr.bf16.mxu0 %v1827
    %2444 = vmatpush2.bf16.msra.mxu0 %v1826
    %2445 = vmatprep.subr.bf16.mxu0 %v1823
    %2446 = vmatpush2.bf16.msra.mxu0 %v1822
    %2447 = vmatprep.subr.bf16.mxu0 %v1819
    %2448 = vmatpush2.bf16.msra.mxu0 %v1818
    %2449 = vmatprep.mubr.bf16.mxu0 %v2121
    %2450 = vmatmul.mubr.bf16.gmra.mxu0 %v2120
    %v2451 = vpop.f32.mrf.mxu0
    %v2452 = vadd.f32 %v2411, %v2451
    %v2453 = vpop.f32.mrf.mxu0
    %v2454 = vadd.f32 %v2413, %v2453
    %v2455 = vpop.f32.mrf.mxu0
    %v2456 = vpop.f32.mrf.mxu0
    %2457 = vdwg.mxu0
    %2458 = vmatprep.subr.bf16.mxu0 %v1879
    %2459 = vmatpush1.bf16.msra.mxu0 %v1878
    %2460 = vmatprep.subr.bf16.mxu0 %v1875
    %2461 = vmatpush1.bf16.msra.mxu0 %v1874
    %2462 = vmatprep.subr.bf16.mxu0 %v1871
    %2463 = vmatpush1.bf16.msra.mxu0 %v1870
    %2464 = vmatprep.subr.bf16.mxu0 %v1867
    %2465 = vmatpush1.bf16.msra.mxu0 %v1866
    %2466 = vmatprep.subr.bf16.mxu0 %v1863
    %2467 = vmatpush1.bf16.msra.mxu0 %v1862
    %2468 = vmatprep.subr.bf16.mxu0 %v1859
    %2469 = vmatpush1.bf16.msra.mxu0 %v1858
    %2470 = vmatprep.subr.bf16.mxu0 %v1855
    %2471 = vmatpush1.bf16.msra.mxu0 %v1854
    %2472 = vmatprep.subr.bf16.mxu0 %v1851
    %2473 = vmatpush1.bf16.msra.mxu0 %v1850
    %2474 = vmatprep.subr.bf16.mxu0 %v1911
    %2475 = vmatpush2.bf16.msra.mxu0 %v1910
    %2476 = vmatprep.subr.bf16.mxu0 %v1907
    %2477 = vmatpush2.bf16.msra.mxu0 %v1906
    %2478 = vmatprep.subr.bf16.mxu0 %v1903
    %2479 = vmatpush2.bf16.msra.mxu0 %v1902
    %2480 = vmatprep.subr.bf16.mxu0 %v1899
    %2481 = vmatpush2.bf16.msra.mxu0 %v1898
    %2482 = vmatprep.subr.bf16.mxu0 %v1895
    %2483 = vmatpush2.bf16.msra.mxu0 %v1894
    %2484 = vmatprep.subr.bf16.mxu0 %v1891
    %2485 = vmatpush2.bf16.msra.mxu0 %v1890
    %2486 = vmatprep.subr.bf16.mxu0 %v1887
    %2487 = vmatpush2.bf16.msra.mxu0 %v1886
    %2488 = vmatprep.subr.bf16.mxu0 %v1883
    %2489 = vmatpush2.bf16.msra.mxu0 %v1882
    %2490 = vmatprep.mubr.bf16.mxu0 %v2123
    %2491 = vmatmul.mubr.bf16.gmra.mxu0 %v2122
    %v2492 = vpop.f32.mrf.mxu0
    %v2493 = vadd.f32 %v2452, %v2492
    %v2494 = vpop.f32.mrf.mxu0
    %v2495 = vadd.f32 %v2454, %v2494
    %v2496 = vpop.f32.mrf.mxu0
    %v2497 = vpop.f32.mrf.mxu0
    %2498 = vdwg.mxu0
    %2499 = vmatprep.subr.bf16.mxu0 %v1943
    %2500 = vmatpush1.bf16.msra.mxu0 %v1942
    %2501 = vmatprep.subr.bf16.mxu0 %v1939
    %2502 = vmatpush1.bf16.msra.mxu0 %v1938
    %2503 = vmatprep.subr.bf16.mxu0 %v1935
    %2504 = vmatpush1.bf16.msra.mxu0 %v1934
    %2505 = vmatprep.subr.bf16.mxu0 %v1931
    %2506 = vmatpush1.bf16.msra.mxu0 %v1930
    %2507 = vmatprep.subr.bf16.mxu0 %v1927
    %2508 = vmatpush1.bf16.msra.mxu0 %v1926
    %2509 = vmatprep.subr.bf16.mxu0 %v1923
    %2510 = vmatpush1.bf16.msra.mxu0 %v1922
    %2511 = vmatprep.subr.bf16.mxu0 %v1919
    %2512 = vmatpush1.bf16.msra.mxu0 %v1918
    %2513 = vmatprep.subr.bf16.mxu0 %v1915
    %2514 = vmatpush1.bf16.msra.mxu0 %v1914
    %2515 = vmatprep.subr.bf16.mxu0 %v1975
    %2516 = vmatpush2.bf16.msra.mxu0 %v1974
    %2517 = vmatprep.subr.bf16.mxu0 %v1971
    %2518 = vmatpush2.bf16.msra.mxu0 %v1970
    %2519 = vmatprep.subr.bf16.mxu0 %v1967
    %2520 = vmatpush2.bf16.msra.mxu0 %v1966
    %2521 = vmatprep.subr.bf16.mxu0 %v1963
    %2522 = vmatpush2.bf16.msra.mxu0 %v1962
    %2523 = vmatprep.subr.bf16.mxu0 %v1959
    %2524 = vmatpush2.bf16.msra.mxu0 %v1958
    %2525 = vmatprep.subr.bf16.mxu0 %v1955
    %2526 = vmatpush2.bf16.msra.mxu0 %v1954
    %2527 = vmatprep.subr.bf16.mxu0 %v1951
    %2528 = vmatpush2.bf16.msra.mxu0 %v1950
    %2529 = vmatprep.subr.bf16.mxu0 %v1947
    %2530 = vmatpush2.bf16.msra.mxu0 %v1946
    %2531 = vmatprep.mubr.bf16.mxu0 %v2125
    %2532 = vmatmul.mubr.bf16.gmra.mxu0 %v2124
    %v2533 = vpop.f32.mrf.mxu0
    %v2534 = vadd.f32 %v2493, %v2533
    %v2535 = vpop.f32.mrf.mxu0
    %v2536 = vadd.f32 %v2495, %v2535
    %v2537 = vpop.f32.mrf.mxu0
    %v2538 = vpop.f32.mrf.mxu0
    %2539 = vdwg.mxu0
    %2540 = vmatprep.subr.bf16.mxu0 %v2007
    %2541 = vmatpush1.bf16.msra.mxu0 %v2006
    %2542 = vmatprep.subr.bf16.mxu0 %v2003
    %2543 = vmatpush1.bf16.msra.mxu0 %v2002
    %2544 = vmatprep.subr.bf16.mxu0 %v1999
    %2545 = vmatpush1.bf16.msra.mxu0 %v1998
    %2546 = vmatprep.subr.bf16.mxu0 %v1995
    %2547 = vmatpush1.bf16.msra.mxu0 %v1994
    %2548 = vmatprep.subr.bf16.mxu0 %v1991
    %2549 = vmatpush1.bf16.msra.mxu0 %v1990
    %2550 = vmatprep.subr.bf16.mxu0 %v1987
    %2551 = vmatpush1.bf16.msra.mxu0 %v1986
    %2552 = vmatprep.subr.bf16.mxu0 %v1983
    %2553 = vmatpush1.bf16.msra.mxu0 %v1982
    %2554 = vmatprep.subr.bf16.mxu0 %v1979
    %2555 = vmatpush1.bf16.msra.mxu0 %v1978
    %2556 = vmatprep.subr.bf16.mxu0 %v2039
    %2557 = vmatpush2.bf16.msra.mxu0 %v2038
    %2558 = vmatprep.subr.bf16.mxu0 %v2035
    %2559 = vmatpush2.bf16.msra.mxu0 %v2034
    %2560 = vmatprep.subr.bf16.mxu0 %v2031
    %2561 = vmatpush2.bf16.msra.mxu0 %v2030
    %2562 = vmatprep.subr.bf16.mxu0 %v2027
    %2563 = vmatpush2.bf16.msra.mxu0 %v2026
    %2564 = vmatprep.subr.bf16.mxu0 %v2023
    %2565 = vmatpush2.bf16.msra.mxu0 %v2022
    %2566 = vmatprep.subr.bf16.mxu0 %v2019
    %2567 = vmatpush2.bf16.msra.mxu0 %v2018
    %2568 = vmatprep.subr.bf16.mxu0 %v2015
    %2569 = vmatpush2.bf16.msra.mxu0 %v2014
    %2570 = vmatprep.subr.bf16.mxu0 %v2011
    %2571 = vmatpush2.bf16.msra.mxu0 %v2010
    %2572 = vmatprep.mubr.bf16.mxu0 %v2127
    %2573 = vmatmul.mubr.bf16.gmra.mxu0 %v2126
    %v2574 = vpop.f32.mrf.mxu0
    %v2575 = vadd.f32 %v2534, %v2574
    %v2576 = vpop.f32.mrf.mxu0
    %v2577 = vadd.f32 %v2536, %v2576
    %v2578 = vpop.f32.mrf.mxu0
    %v2579 = vpop.f32.mrf.mxu0
    %2580 = vdwg.mxu0
    %2581 = vmatprep.subr.bf16.mxu0 %v2071
    %2582 = vmatpush1.bf16.msra.mxu0 %v2070
    %2583 = vmatprep.subr.bf16.mxu0 %v2067
    %2584 = vmatpush1.bf16.msra.mxu0 %v2066
    %2585 = vmatprep.subr.bf16.mxu0 %v2063
    %2586 = vmatpush1.bf16.msra.mxu0 %v2062
    %2587 = vmatprep.subr.bf16.mxu0 %v2059
    %2588 = vmatpush1.bf16.msra.mxu0 %v2058
    %2589 = vmatprep.subr.bf16.mxu0 %v2055
    %2590 = vmatpush1.bf16.msra.mxu0 %v2054
    %2591 = vmatprep.subr.bf16.mxu0 %v2051
    %2592 = vmatpush1.bf16.msra.mxu0 %v2050
    %2593 = vmatprep.subr.bf16.mxu0 %v2047
    %2594 = vmatpush1.bf16.msra.mxu0 %v2046
    %2595 = vmatprep.subr.bf16.mxu0 %v2043
    %2596 = vmatpush1.bf16.msra.mxu0 %v2042
    %2597 = vmatprep.subr.bf16.mxu0 %v2103
    %2598 = vmatpush2.bf16.msra.mxu0 %v2102
    %2599 = vmatprep.subr.bf16.mxu0 %v2099
    %2600 = vmatpush2.bf16.msra.mxu0 %v2098
    %2601 = vmatprep.subr.bf16.mxu0 %v2095
    %2602 = vmatpush2.bf16.msra.mxu0 %v2094
    %2603 = vmatprep.subr.bf16.mxu0 %v2091
    %2604 = vmatpush2.bf16.msra.mxu0 %v2090
    %2605 = vmatprep.subr.bf16.mxu0 %v2087
    %2606 = vmatpush2.bf16.msra.mxu0 %v2086
    %2607 = vmatprep.subr.bf16.mxu0 %v2083
    %2608 = vmatpush2.bf16.msra.mxu0 %v2082
    %2609 = vmatprep.subr.bf16.mxu0 %v2079
    %2610 = vmatpush2.bf16.msra.mxu0 %v2078
    %2611 = vmatprep.subr.bf16.mxu0 %v2075
    %2612 = vmatpush2.bf16.msra.mxu0 %v2074
    %2613 = vmatprep.mubr.bf16.mxu0 %v2129
    %2614 = vmatmul.mubr.bf16.gmra.mxu0 %v2128
    %v2615 = vpop.f32.mrf.mxu0
    %v2616 = vadd.f32 %v2575, %v2615
    %v2617 = vpop.f32.mrf.mxu0
    %v2618 = vadd.f32 %v2577, %v2617
    %v2619 = vpop.f32.mrf.mxu0
    %v2620 = vpop.f32.mrf.mxu0
    %2621 = vdwg.mxu0
    %2622 = vmatprep.subr.bf16.mxu0 %v1369
    %2623 = vmatpush1.bf16.msra.mxu0 %v1368
    %2624 = vmatprep.subr.bf16.mxu0 %v1365
    %2625 = vmatpush1.bf16.msra.mxu0 %v1364
    %2626 = vmatprep.subr.bf16.mxu0 %v1361
    %2627 = vmatpush1.bf16.msra.mxu0 %v1360
    %2628 = vmatprep.subr.bf16.mxu0 %v1357
    %2629 = vmatpush1.bf16.msra.mxu0 %v1356
    %2630 = vmatprep.subr.bf16.mxu0 %v1353
    %2631 = vmatpush1.bf16.msra.mxu0 %v1352
    %2632 = vmatprep.subr.bf16.mxu0 %v1349
    %2633 = vmatpush1.bf16.msra.mxu0 %v1348
    %2634 = vmatprep.subr.bf16.mxu0 %v1345
    %2635 = vmatpush1.bf16.msra.mxu0 %v1344
    %2636 = vmatprep.subr.bf16.mxu0 %v1341
    %2637 = vmatpush1.bf16.msra.mxu0 %v1340
    %2638 = vmatprep.subr.bf16.mxu0 %v1401
    %2639 = vmatpush2.bf16.msra.mxu0 %v1400
    %2640 = vmatprep.subr.bf16.mxu0 %v1397
    %2641 = vmatpush2.bf16.msra.mxu0 %v1396
    %2642 = vmatprep.subr.bf16.mxu0 %v1393
    %2643 = vmatpush2.bf16.msra.mxu0 %v1392
    %2644 = vmatprep.subr.bf16.mxu0 %v1389
    %2645 = vmatpush2.bf16.msra.mxu0 %v1388
    %2646 = vmatprep.subr.bf16.mxu0 %v1385
    %2647 = vmatpush2.bf16.msra.mxu0 %v1384
    %2648 = vmatprep.subr.bf16.mxu0 %v1381
    %2649 = vmatpush2.bf16.msra.mxu0 %v1380
    %2650 = vmatprep.subr.bf16.mxu0 %v1377
    %2651 = vmatpush2.bf16.msra.mxu0 %v1376
    %2652 = vmatprep.subr.bf16.mxu0 %v1373
    %2653 = vmatpush2.bf16.msra.mxu0 %v1372
    %2654 = vmatprep.mubr.bf16.mxu0 %v2107
    %2655 = vmatmul.mubr.bf16.gmra.mxu0 %v2106
    %v2656 = vpop.f32.mrf.mxu0
    %v2657 = vadd.f32 0.0, %v2656
    %v2658 = vpop.f32.mrf.mxu0
    %v2659 = vadd.f32 0.0, %v2658
    %v2660 = vpop.f32.mrf.mxu0
    %v2661 = vpop.f32.mrf.mxu0
    %2662 = vdwg.mxu0
    %2663 = vmatprep.subr.bf16.mxu0 %v1433
    %2664 = vmatpush1.bf16.msra.mxu0 %v1432
    %2665 = vmatprep.subr.bf16.mxu0 %v1429
    %2666 = vmatpush1.bf16.msra.mxu0 %v1428
    %2667 = vmatprep.subr.bf16.mxu0 %v1425
    %2668 = vmatpush1.bf16.msra.mxu0 %v1424
    %2669 = vmatprep.subr.bf16.mxu0 %v1421
    %2670 = vmatpush1.bf16.msra.mxu0 %v1420
    %2671 = vmatprep.subr.bf16.mxu0 %v1417
    %2672 = vmatpush1.bf16.msra.mxu0 %v1416
    %2673 = vmatprep.subr.bf16.mxu0 %v1413
    %2674 = vmatpush1.bf16.msra.mxu0 %v1412
    %2675 = vmatprep.subr.bf16.mxu0 %v1409
    %2676 = vmatpush1.bf16.msra.mxu0 %v1408
    %2677 = vmatprep.subr.bf16.mxu0 %v1405
    %2678 = vmatpush1.bf16.msra.mxu0 %v1404
    %2679 = vmatprep.subr.bf16.mxu0 %v1465
    %2680 = vmatpush2.bf16.msra.mxu0 %v1464
    %2681 = vmatprep.subr.bf16.mxu0 %v1461
    %2682 = vmatpush2.bf16.msra.mxu0 %v1460
    %2683 = vmatprep.subr.bf16.mxu0 %v1457
    %2684 = vmatpush2.bf16.msra.mxu0 %v1456
    %2685 = vmatprep.subr.bf16.mxu0 %v1453
    %2686 = vmatpush2.bf16.msra.mxu0 %v1452
    %2687 = vmatprep.subr.bf16.mxu0 %v1449
    %2688 = vmatpush2.bf16.msra.mxu0 %v1448
    %2689 = vmatprep.subr.bf16.mxu0 %v1445
    %2690 = vmatpush2.bf16.msra.mxu0 %v1444
    %2691 = vmatprep.subr.bf16.mxu0 %v1441
    %2692 = vmatpush2.bf16.msra.mxu0 %v1440
    %2693 = vmatprep.subr.bf16.mxu0 %v1437
    %2694 = vmatpush2.bf16.msra.mxu0 %v1436
    %2695 = vmatprep.mubr.bf16.mxu0 %v2109
    %2696 = vmatmul.mubr.bf16.gmra.mxu0 %v2108
    %v2697 = vpop.f32.mrf.mxu0
    %v2698 = vadd.f32 %v2657, %v2697
    %v2699 = vpop.f32.mrf.mxu0
    %v2700 = vadd.f32 %v2659, %v2699
    %v2701 = vpop.f32.mrf.mxu0
    %v2702 = vpop.f32.mrf.mxu0
    %2703 = vdwg.mxu0
    %2704 = vmatprep.subr.bf16.mxu0 %v1497
    %2705 = vmatpush1.bf16.msra.mxu0 %v1496
    %2706 = vmatprep.subr.bf16.mxu0 %v1493
    %2707 = vmatpush1.bf16.msra.mxu0 %v1492
    %2708 = vmatprep.subr.bf16.mxu0 %v1489
    %2709 = vmatpush1.bf16.msra.mxu0 %v1488
    %2710 = vmatprep.subr.bf16.mxu0 %v1485
    %2711 = vmatpush1.bf16.msra.mxu0 %v1484
    %2712 = vmatprep.subr.bf16.mxu0 %v1481
    %2713 = vmatpush1.bf16.msra.mxu0 %v1480
    %2714 = vmatprep.subr.bf16.mxu0 %v1477
    %2715 = vmatpush1.bf16.msra.mxu0 %v1476
    %2716 = vmatprep.subr.bf16.mxu0 %v1473
    %2717 = vmatpush1.bf16.msra.mxu0 %v1472
    %2718 = vmatprep.subr.bf16.mxu0 %v1469
    %2719 = vmatpush1.bf16.msra.mxu0 %v1468
    %2720 = vmatprep.subr.bf16.mxu0 %v1529
    %2721 = vmatpush2.bf16.msra.mxu0 %v1528
    %2722 = vmatprep.subr.bf16.mxu0 %v1525
    %2723 = vmatpush2.bf16.msra.mxu0 %v1524
    %2724 = vmatprep.subr.bf16.mxu0 %v1521
    %2725 = vmatpush2.bf16.msra.mxu0 %v1520
    %2726 = vmatprep.subr.bf16.mxu0 %v1517
    %2727 = vmatpush2.bf16.msra.mxu0 %v1516
    %2728 = vmatprep.subr.bf16.mxu0 %v1513
    %2729 = vmatpush2.bf16.msra.mxu0 %v1512
    %2730 = vmatprep.subr.bf16.mxu0 %v1509
    %2731 = vmatpush2.bf16.msra.mxu0 %v1508
    %2732 = vmatprep.subr.bf16.mxu0 %v1505
    %2733 = vmatpush2.bf16.msra.mxu0 %v1504
    %2734 = vmatprep.subr.bf16.mxu0 %v1501
    %2735 = vmatpush2.bf16.msra.mxu0 %v1500
    %2736 = vmatprep.mubr.bf16.mxu0 %v2111
    %2737 = vmatmul.mubr.bf16.gmra.mxu0 %v2110
    %v2738 = vpop.f32.mrf.mxu0
    %v2739 = vadd.f32 %v2698, %v2738
    %v2740 = vpop.f32.mrf.mxu0
    %v2741 = vadd.f32 %v2700, %v2740
    %v2742 = vpop.f32.mrf.mxu0
    %v2743 = vpop.f32.mrf.mxu0
    %2744 = vdwg.mxu0
    %2745 = vmatprep.subr.bf16.mxu0 %v1561
    %2746 = vmatpush1.bf16.msra.mxu0 %v1560
    %2747 = vmatprep.subr.bf16.mxu0 %v1557
    %2748 = vmatpush1.bf16.msra.mxu0 %v1556
    %2749 = vmatprep.subr.bf16.mxu0 %v1553
    %2750 = vmatpush1.bf16.msra.mxu0 %v1552
    %2751 = vmatprep.subr.bf16.mxu0 %v1549
    %2752 = vmatpush1.bf16.msra.mxu0 %v1548
    %2753 = vmatprep.subr.bf16.mxu0 %v1545
    %2754 = vmatpush1.bf16.msra.mxu0 %v1544
    %2755 = vmatprep.subr.bf16.mxu0 %v1541
    %2756 = vmatpush1.bf16.msra.mxu0 %v1540
    %2757 = vmatprep.subr.bf16.mxu0 %v1537
    %2758 = vmatpush1.bf16.msra.mxu0 %v1536
    %2759 = vmatprep.subr.bf16.mxu0 %v1533
    %2760 = vmatpush1.bf16.msra.mxu0 %v1532
    %2761 = vmatprep.subr.bf16.mxu0 %v1593
    %2762 = vmatpush2.bf16.msra.mxu0 %v1592
    %2763 = vmatprep.subr.bf16.mxu0 %v1589
    %2764 = vmatpush2.bf16.msra.mxu0 %v1588
    %2765 = vmatprep.subr.bf16.mxu0 %v1585
    %2766 = vmatpush2.bf16.msra.mxu0 %v1584
    %2767 = vmatprep.subr.bf16.mxu0 %v1581
    %2768 = vmatpush2.bf16.msra.mxu0 %v1580
    %2769 = vmatprep.subr.bf16.mxu0 %v1577
    %2770 = vmatpush2.bf16.msra.mxu0 %v1576
    %2771 = vmatprep.subr.bf16.mxu0 %v1573
    %2772 = vmatpush2.bf16.msra.mxu0 %v1572
    %2773 = vmatprep.subr.bf16.mxu0 %v1569
    %2774 = vmatpush2.bf16.msra.mxu0 %v1568
    %2775 = vmatprep.subr.bf16.mxu0 %v1565
    %2776 = vmatpush2.bf16.msra.mxu0 %v1564
    %2777 = vmatprep.mubr.bf16.mxu0 %v2113
    %2778 = vmatmul.mubr.bf16.gmra.mxu0 %v2112
    %v2779 = vpop.f32.mrf.mxu0
    %v2780 = vadd.f32 %v2739, %v2779
    %v2781 = vpop.f32.mrf.mxu0
    %v2782 = vadd.f32 %v2741, %v2781
    %v2783 = vpop.f32.mrf.mxu0
    %v2784 = vpop.f32.mrf.mxu0
    %2785 = vdwg.mxu0
    %2786 = vmatprep.subr.bf16.mxu0 %v1625
    %2787 = vmatpush1.bf16.msra.mxu0 %v1624
    %2788 = vmatprep.subr.bf16.mxu0 %v1621
    %2789 = vmatpush1.bf16.msra.mxu0 %v1620
    %2790 = vmatprep.subr.bf16.mxu0 %v1617
    %2791 = vmatpush1.bf16.msra.mxu0 %v1616
    %2792 = vmatprep.subr.bf16.mxu0 %v1613
    %2793 = vmatpush1.bf16.msra.mxu0 %v1612
    %2794 = vmatprep.subr.bf16.mxu0 %v1609
    %2795 = vmatpush1.bf16.msra.mxu0 %v1608
    %2796 = vmatprep.subr.bf16.mxu0 %v1605
    %2797 = vmatpush1.bf16.msra.mxu0 %v1604
    %2798 = vmatprep.subr.bf16.mxu0 %v1601
    %2799 = vmatpush1.bf16.msra.mxu0 %v1600
    %2800 = vmatprep.subr.bf16.mxu0 %v1597
    %2801 = vmatpush1.bf16.msra.mxu0 %v1596
    %2802 = vmatprep.subr.bf16.mxu0 %v1657
    %2803 = vmatpush2.bf16.msra.mxu0 %v1656
    %2804 = vmatprep.subr.bf16.mxu0 %v1653
    %2805 = vmatpush2.bf16.msra.mxu0 %v1652
    %2806 = vmatprep.subr.bf16.mxu0 %v1649
    %2807 = vmatpush2.bf16.msra.mxu0 %v1648
    %2808 = vmatprep.subr.bf16.mxu0 %v1645
    %2809 = vmatpush2.bf16.msra.mxu0 %v1644
    %2810 = vmatprep.subr.bf16.mxu0 %v1641
    %2811 = vmatpush2.bf16.msra.mxu0 %v1640
    %2812 = vmatprep.subr.bf16.mxu0 %v1637
    %2813 = vmatpush2.bf16.msra.mxu0 %v1636
    %2814 = vmatprep.subr.bf16.mxu0 %v1633
    %2815 = vmatpush2.bf16.msra.mxu0 %v1632
    %2816 = vmatprep.subr.bf16.mxu0 %v1629
    %2817 = vmatpush2.bf16.msra.mxu0 %v1628
    %2818 = vmatprep.mubr.bf16.mxu0 %v2115
    %2819 = vmatmul.mubr.bf16.gmra.mxu0 %v2114
    %v2820 = vpop.f32.mrf.mxu0
    %v2821 = vadd.f32 %v2780, %v2820
    %v2822 = vpop.f32.mrf.mxu0
    %v2823 = vadd.f32 %v2782, %v2822
    %v2824 = vpop.f32.mrf.mxu0
    %v2825 = vpop.f32.mrf.mxu0
    %2826 = vdwg.mxu0
    %2827 = vmatprep.subr.bf16.mxu0 %v1689
    %2828 = vmatpush1.bf16.msra.mxu0 %v1688
    %2829 = vmatprep.subr.bf16.mxu0 %v1685
    %2830 = vmatpush1.bf16.msra.mxu0 %v1684
    %2831 = vmatprep.subr.bf16.mxu0 %v1681
    %2832 = vmatpush1.bf16.msra.mxu0 %v1680
    %2833 = vmatprep.subr.bf16.mxu0 %v1677
    %2834 = vmatpush1.bf16.msra.mxu0 %v1676
    %2835 = vmatprep.subr.bf16.mxu0 %v1673
    %2836 = vmatpush1.bf16.msra.mxu0 %v1672
    %2837 = vmatprep.subr.bf16.mxu0 %v1669
    %2838 = vmatpush1.bf16.msra.mxu0 %v1668
    %2839 = vmatprep.subr.bf16.mxu0 %v1665
    %2840 = vmatpush1.bf16.msra.mxu0 %v1664
    %2841 = vmatprep.subr.bf16.mxu0 %v1661
    %2842 = vmatpush1.bf16.msra.mxu0 %v1660
    %2843 = vmatprep.subr.bf16.mxu0 %v1721
    %2844 = vmatpush2.bf16.msra.mxu0 %v1720
    %2845 = vmatprep.subr.bf16.mxu0 %v1717
    %2846 = vmatpush2.bf16.msra.mxu0 %v1716
    %2847 = vmatprep.subr.bf16.mxu0 %v1713
    %2848 = vmatpush2.bf16.msra.mxu0 %v1712
    %2849 = vmatprep.subr.bf16.mxu0 %v1709
    %2850 = vmatpush2.bf16.msra.mxu0 %v1708
    %2851 = vmatprep.subr.bf16.mxu0 %v1705
    %2852 = vmatpush2.bf16.msra.mxu0 %v1704
    %2853 = vmatprep.subr.bf16.mxu0 %v1701
    %2854 = vmatpush2.bf16.msra.mxu0 %v1700
    %2855 = vmatprep.subr.bf16.mxu0 %v1697
    %2856 = vmatpush2.bf16.msra.mxu0 %v1696
    %2857 = vmatprep.subr.bf16.mxu0 %v1693
    %2858 = vmatpush2.bf16.msra.mxu0 %v1692
    %2859 = vmatprep.mubr.bf16.mxu0 %v2117
    %2860 = vmatmul.mubr.bf16.gmra.mxu0 %v2116
    %v2861 = vpop.f32.mrf.mxu0
    %v2862 = vadd.f32 %v2821, %v2861
    %v2863 = vpop.f32.mrf.mxu0
    %v2864 = vadd.f32 %v2823, %v2863
    %v2865 = vpop.f32.mrf.mxu0
    %v2866 = vpop.f32.mrf.mxu0
    %2867 = vdwg.mxu0
    %2868 = vmatprep.subr.bf16.mxu0 %v1753
    %2869 = vmatpush1.bf16.msra.mxu0 %v1752
    %2870 = vmatprep.subr.bf16.mxu0 %v1749
    %2871 = vmatpush1.bf16.msra.mxu0 %v1748
    %2872 = vmatprep.subr.bf16.mxu0 %v1745
    %2873 = vmatpush1.bf16.msra.mxu0 %v1744
    %2874 = vmatprep.subr.bf16.mxu0 %v1741
    %2875 = vmatpush1.bf16.msra.mxu0 %v1740
    %2876 = vmatprep.subr.bf16.mxu0 %v1737
    %2877 = vmatpush1.bf16.msra.mxu0 %v1736
    %2878 = vmatprep.subr.bf16.mxu0 %v1733
    %2879 = vmatpush1.bf16.msra.mxu0 %v1732
    %2880 = vmatprep.subr.bf16.mxu0 %v1729
    %2881 = vmatpush1.bf16.msra.mxu0 %v1728
    %2882 = vmatprep.subr.bf16.mxu0 %v1725
    %2883 = vmatpush1.bf16.msra.mxu0 %v1724
    %2884 = vmatprep.subr.bf16.mxu0 %v1785
    %2885 = vmatpush2.bf16.msra.mxu0 %v1784
    %2886 = vmatprep.subr.bf16.mxu0 %v1781
    %2887 = vmatpush2.bf16.msra.mxu0 %v1780
    %2888 = vmatprep.subr.bf16.mxu0 %v1777
    %2889 = vmatpush2.bf16.msra.mxu0 %v1776
    %2890 = vmatprep.subr.bf16.mxu0 %v1773
    %2891 = vmatpush2.bf16.msra.mxu0 %v1772
    %2892 = vmatprep.subr.bf16.mxu0 %v1769
    %2893 = vmatpush2.bf16.msra.mxu0 %v1768
    %2894 = vmatprep.subr.bf16.mxu0 %v1765
    %2895 = vmatpush2.bf16.msra.mxu0 %v1764
    %2896 = vmatprep.subr.bf16.mxu0 %v1761
    %2897 = vmatpush2.bf16.msra.mxu0 %v1760
    %2898 = vmatprep.subr.bf16.mxu0 %v1757
    %2899 = vmatpush2.bf16.msra.mxu0 %v1756
    %2900 = vmatprep.mubr.bf16.mxu0 %v2119
    %2901 = vmatmul.mubr.bf16.gmra.mxu0 %v2118
    %v2902 = vpop.f32.mrf.mxu0
    %v2903 = vadd.f32 %v2862, %v2902
    %v2904 = vpop.f32.mrf.mxu0
    %v2905 = vadd.f32 %v2864, %v2904
    %v2906 = vpop.f32.mrf.mxu0
    %v2907 = vpop.f32.mrf.mxu0
    %2908 = vdwg.mxu0
    %2909 = vmatprep.subr.bf16.mxu0 %v1817
    %2910 = vmatpush1.bf16.msra.mxu0 %v1816
    %2911 = vmatprep.subr.bf16.mxu0 %v1813
    %2912 = vmatpush1.bf16.msra.mxu0 %v1812
    %2913 = vmatprep.subr.bf16.mxu0 %v1809
    %2914 = vmatpush1.bf16.msra.mxu0 %v1808
    %2915 = vmatprep.subr.bf16.mxu0 %v1805
    %2916 = vmatpush1.bf16.msra.mxu0 %v1804
    %2917 = vmatprep.subr.bf16.mxu0 %v1801
    %2918 = vmatpush1.bf16.msra.mxu0 %v1800
    %2919 = vmatprep.subr.bf16.mxu0 %v1797
    %2920 = vmatpush1.bf16.msra.mxu0 %v1796
    %2921 = vmatprep.subr.bf16.mxu0 %v1793
    %2922 = vmatpush1.bf16.msra.mxu0 %v1792
    %2923 = vmatprep.subr.bf16.mxu0 %v1789
    %2924 = vmatpush1.bf16.msra.mxu0 %v1788
    %2925 = vmatprep.subr.bf16.mxu0 %v1849
    %2926 = vmatpush2.bf16.msra.mxu0 %v1848
    %2927 = vmatprep.subr.bf16.mxu0 %v1845
    %2928 = vmatpush2.bf16.msra.mxu0 %v1844
    %2929 = vmatprep.subr.bf16.mxu0 %v1841
    %2930 = vmatpush2.bf16.msra.mxu0 %v1840
    %2931 = vmatprep.subr.bf16.mxu0 %v1837
    %2932 = vmatpush2.bf16.msra.mxu0 %v1836
    %2933 = vmatprep.subr.bf16.mxu0 %v1833
    %2934 = vmatpush2.bf16.msra.mxu0 %v1832
    %2935 = vmatprep.subr.bf16.mxu0 %v1829
    %2936 = vmatpush2.bf16.msra.mxu0 %v1828
    %2937 = vmatprep.subr.bf16.mxu0 %v1825
    %2938 = vmatpush2.bf16.msra.mxu0 %v1824
    %2939 = vmatprep.subr.bf16.mxu0 %v1821
    %2940 = vmatpush2.bf16.msra.mxu0 %v1820
    %2941 = vmatprep.mubr.bf16.mxu0 %v2121
    %2942 = vmatmul.mubr.bf16.gmra.mxu0 %v2120
    %v2943 = vpop.f32.mrf.mxu0
    %v2944 = vadd.f32 %v2903, %v2943
    %v2945 = vpop.f32.mrf.mxu0
    %v2946 = vadd.f32 %v2905, %v2945
    %v2947 = vpop.f32.mrf.mxu0
    %v2948 = vpop.f32.mrf.mxu0
    %2949 = vdwg.mxu0
    %2950 = vmatprep.subr.bf16.mxu0 %v1881
    %2951 = vmatpush1.bf16.msra.mxu0 %v1880
    %2952 = vmatprep.subr.bf16.mxu0 %v1877
    %2953 = vmatpush1.bf16.msra.mxu0 %v1876
    %2954 = vmatprep.subr.bf16.mxu0 %v1873
    %2955 = vmatpush1.bf16.msra.mxu0 %v1872
    %2956 = vmatprep.subr.bf16.mxu0 %v1869
    %2957 = vmatpush1.bf16.msra.mxu0 %v1868
    %2958 = vmatprep.subr.bf16.mxu0 %v1865
    %2959 = vmatpush1.bf16.msra.mxu0 %v1864
    %2960 = vmatprep.subr.bf16.mxu0 %v1861
    %2961 = vmatpush1.bf16.msra.mxu0 %v1860
    %2962 = vmatprep.subr.bf16.mxu0 %v1857
    %2963 = vmatpush1.bf16.msra.mxu0 %v1856
    %2964 = vmatprep.subr.bf16.mxu0 %v1853
    %2965 = vmatpush1.bf16.msra.mxu0 %v1852
    %2966 = vmatprep.subr.bf16.mxu0 %v1913
    %2967 = vmatpush2.bf16.msra.mxu0 %v1912
    %2968 = vmatprep.subr.bf16.mxu0 %v1909
    %2969 = vmatpush2.bf16.msra.mxu0 %v1908
    %2970 = vmatprep.subr.bf16.mxu0 %v1905
    %2971 = vmatpush2.bf16.msra.mxu0 %v1904
    %2972 = vmatprep.subr.bf16.mxu0 %v1901
    %2973 = vmatpush2.bf16.msra.mxu0 %v1900
    %2974 = vmatprep.subr.bf16.mxu0 %v1897
    %2975 = vmatpush2.bf16.msra.mxu0 %v1896
    %2976 = vmatprep.subr.bf16.mxu0 %v1893
    %2977 = vmatpush2.bf16.msra.mxu0 %v1892
    %2978 = vmatprep.subr.bf16.mxu0 %v1889
    %2979 = vmatpush2.bf16.msra.mxu0 %v1888
    %2980 = vmatprep.subr.bf16.mxu0 %v1885
    %2981 = vmatpush2.bf16.msra.mxu0 %v1884
    %2982 = vmatprep.mubr.bf16.mxu0 %v2123
    %2983 = vmatmul.mubr.bf16.gmra.mxu0 %v2122
    %v2984 = vpop.f32.mrf.mxu0
    %v2985 = vadd.f32 %v2944, %v2984
    %v2986 = vpop.f32.mrf.mxu0
    %v2987 = vadd.f32 %v2946, %v2986
    %v2988 = vpop.f32.mrf.mxu0
    %v2989 = vpop.f32.mrf.mxu0
    %2990 = vdwg.mxu0
    %2991 = vmatprep.subr.bf16.mxu0 %v1945
    %2992 = vmatpush1.bf16.msra.mxu0 %v1944
    %2993 = vmatprep.subr.bf16.mxu0 %v1941
    %2994 = vmatpush1.bf16.msra.mxu0 %v1940
    %2995 = vmatprep.subr.bf16.mxu0 %v1937
    %2996 = vmatpush1.bf16.msra.mxu0 %v1936
    %2997 = vmatprep.subr.bf16.mxu0 %v1933
    %2998 = vmatpush1.bf16.msra.mxu0 %v1932
    %2999 = vmatprep.subr.bf16.mxu0 %v1929
    %3000 = vmatpush1.bf16.msra.mxu0 %v1928
    %3001 = vmatprep.subr.bf16.mxu0 %v1925
    %3002 = vmatpush1.bf16.msra.mxu0 %v1924
    %3003 = vmatprep.subr.bf16.mxu0 %v1921
    %3004 = vmatpush1.bf16.msra.mxu0 %v1920
    %3005 = vmatprep.subr.bf16.mxu0 %v1917
    %3006 = vmatpush1.bf16.msra.mxu0 %v1916
    %3007 = vmatprep.subr.bf16.mxu0 %v1977
    %3008 = vmatpush2.bf16.msra.mxu0 %v1976
    %3009 = vmatprep.subr.bf16.mxu0 %v1973
    %3010 = vmatpush2.bf16.msra.mxu0 %v1972
    %3011 = vmatprep.subr.bf16.mxu0 %v1969
    %3012 = vmatpush2.bf16.msra.mxu0 %v1968
    %3013 = vmatprep.subr.bf16.mxu0 %v1965
    %3014 = vmatpush2.bf16.msra.mxu0 %v1964
    %3015 = vmatprep.subr.bf16.mxu0 %v1961
    %3016 = vmatpush2.bf16.msra.mxu0 %v1960
    %3017 = vmatprep.subr.bf16.mxu0 %v1957
    %3018 = vmatpush2.bf16.msra.mxu0 %v1956
    %3019 = vmatprep.subr.bf16.mxu0 %v1953
    %3020 = vmatpush2.bf16.msra.mxu0 %v1952
    %3021 = vmatprep.subr.bf16.mxu0 %v1949
    %3022 = vmatpush2.bf16.msra.mxu0 %v1948
    %3023 = vmatprep.mubr.bf16.mxu0 %v2125
    %3024 = vmatmul.mubr.bf16.gmra.mxu0 %v2124
    %v3025 = vpop.f32.mrf.mxu0
    %v3026 = vadd.f32 %v2985, %v3025
    %v3027 = vpop.f32.mrf.mxu0
    %v3028 = vadd.f32 %v2987, %v3027
    %v3029 = vpop.f32.mrf.mxu0
    %v3030 = vpop.f32.mrf.mxu0
    %3031 = vdwg.mxu0
    %3032 = vmatprep.subr.bf16.mxu0 %v2009
    %3033 = vmatpush1.bf16.msra.mxu0 %v2008
    %3034 = vmatprep.subr.bf16.mxu0 %v2005
    %3035 = vmatpush1.bf16.msra.mxu0 %v2004
    %3036 = vmatprep.subr.bf16.mxu0 %v2001
    %3037 = vmatpush1.bf16.msra.mxu0 %v2000
    %3038 = vmatprep.subr.bf16.mxu0 %v1997
    %3039 = vmatpush1.bf16.msra.mxu0 %v1996
    %3040 = vmatprep.subr.bf16.mxu0 %v1993
    %3041 = vmatpush1.bf16.msra.mxu0 %v1992
    %3042 = vmatprep.subr.bf16.mxu0 %v1989
    %3043 = vmatpush1.bf16.msra.mxu0 %v1988
    %3044 = vmatprep.subr.bf16.mxu0 %v1985
    %3045 = vmatpush1.bf16.msra.mxu0 %v1984
    %3046 = vmatprep.subr.bf16.mxu0 %v1981
    %3047 = vmatpush1.bf16.msra.mxu0 %v1980
    %3048 = vmatprep.subr.bf16.mxu0 %v2041
    %3049 = vmatpush2.bf16.msra.mxu0 %v2040
    %3050 = vmatprep.subr.bf16.mxu0 %v2037
    %3051 = vmatpush2.bf16.msra.mxu0 %v2036
    %3052 = vmatprep.subr.bf16.mxu0 %v2033
    %3053 = vmatpush2.bf16.msra.mxu0 %v2032
    %3054 = vmatprep.subr.bf16.mxu0 %v2029
    %3055 = vmatpush2.bf16.msra.mxu0 %v2028
    %3056 = vmatprep.subr.bf16.mxu0 %v2025
    %3057 = vmatpush2.bf16.msra.mxu0 %v2024
    %3058 = vmatprep.subr.bf16.mxu0 %v2021
    %3059 = vmatpush2.bf16.msra.mxu0 %v2020
    %3060 = vmatprep.subr.bf16.mxu0 %v2017
    %3061 = vmatpush2.bf16.msra.mxu0 %v2016
    %3062 = vmatprep.subr.bf16.mxu0 %v2013
    %3063 = vmatpush2.bf16.msra.mxu0 %v2012
    %3064 = vmatprep.mubr.bf16.mxu0 %v2127
    %3065 = vmatmul.mubr.bf16.gmra.mxu0 %v2126
    %v3066 = vpop.f32.mrf.mxu0
    %v3067 = vadd.f32 %v3026, %v3066
    %v3068 = vpop.f32.mrf.mxu0
    %v3069 = vadd.f32 %v3028, %v3068
    %v3070 = vpop.f32.mrf.mxu0
    %v3071 = vpop.f32.mrf.mxu0
    %3072 = vdwg.mxu0
    %3073 = vmatprep.subr.bf16.mxu0 %v2073
    %3074 = vmatpush1.bf16.msra.mxu0 %v2072
    %3075 = vmatprep.subr.bf16.mxu0 %v2069
    %3076 = vmatpush1.bf16.msra.mxu0 %v2068
    %3077 = vmatprep.subr.bf16.mxu0 %v2065
    %3078 = vmatpush1.bf16.msra.mxu0 %v2064
    %3079 = vmatprep.subr.bf16.mxu0 %v2061
    %3080 = vmatpush1.bf16.msra.mxu0 %v2060
    %3081 = vmatprep.subr.bf16.mxu0 %v2057
    %3082 = vmatpush1.bf16.msra.mxu0 %v2056
    %3083 = vmatprep.subr.bf16.mxu0 %v2053
    %3084 = vmatpush1.bf16.msra.mxu0 %v2052
    %3085 = vmatprep.subr.bf16.mxu0 %v2049
    %3086 = vmatpush1.bf16.msra.mxu0 %v2048
    %3087 = vmatprep.subr.bf16.mxu0 %v2045
    %3088 = vmatpush1.bf16.msra.mxu0 %v2044
    %3089 = vmatprep.subr.bf16.mxu0 %v2105
    %3090 = vmatpush2.bf16.msra.mxu0 %v2104
    %3091 = vmatprep.subr.bf16.mxu0 %v2101
    %3092 = vmatpush2.bf16.msra.mxu0 %v2100
    %3093 = vmatprep.subr.bf16.mxu0 %v2097
    %3094 = vmatpush2.bf16.msra.mxu0 %v2096
    %3095 = vmatprep.subr.bf16.mxu0 %v2093
    %3096 = vmatpush2.bf16.msra.mxu0 %v2092
    %3097 = vmatprep.subr.bf16.mxu0 %v2089
    %3098 = vmatpush2.bf16.msra.mxu0 %v2088
    %3099 = vmatprep.subr.bf16.mxu0 %v2085
    %3100 = vmatpush2.bf16.msra.mxu0 %v2084
    %3101 = vmatprep.subr.bf16.mxu0 %v2081
    %3102 = vmatpush2.bf16.msra.mxu0 %v2080
    %3103 = vmatprep.subr.bf16.mxu0 %v2077
    %3104 = vmatpush2.bf16.msra.mxu0 %v2076
    %3105 = vmatprep.mubr.bf16.mxu0 %v2129
    %3106 = vmatmul.mubr.bf16.gmra.mxu0 %v2128
    %v3107 = vpop.f32.mrf.mxu0
    %v3108 = vadd.f32 %v3067, %v3107
    %v3109 = vpop.f32.mrf.mxu0
    %v3110 = vadd.f32 %v3069, %v3109
    %v3111 = vpop.f32.mrf.mxu0
    %v3112 = vpop.f32.mrf.mxu0
    %3113 = vdwg.mxu0
    %v3114 = vld [vmem:[#allocation6] sm:$0xf]
    %v3116 = vlaneseq
    %v3117 = vshrl.u32 %v3116, 7
    %v3118 = vsub.s32 0, %v3117
    %v3119 = vrot.slane %v3114, %v3118
    %v3120 = vlaneseq
    %v3121 = vshrl.u32 %v3120, 7
    %v3122 = vsub.s32 1, %v3121
    %v3123 = vrot.slane %v3114, %v3122
    %v3124 = vlaneseq
    %v3125 = vshrl.u32 %v3124, 7
    %v3126 = vsub.s32 2, %v3125
    %v3127 = vrot.slane %v3114, %v3126
    %v3128 = vlaneseq
    %v3129 = vshrl.u32 %v3128, 7
    %v3130 = vsub.s32 3, %v3129
    %v3131 = vrot.slane %v3114, %v3130
    %v3136 = vmul.f32 %v2616, %v3119
    %v3137 = vmul.f32 %v2618, %v3123
    %v3138 = vmul.f32 %v3108, %v3127
    %v3139 = vmul.f32 %v3110, %v3131
    %v3140 = vld [vmem:[#allocation7] sm:$0xf]
    %v3142 = vlaneseq
    %v3143 = vshrl.u32 %v3142, 7
    %v3144 = vsub.s32 0, %v3143
    %v3145 = vrot.slane %v3140, %v3144
    %v3146 = vlaneseq
    %v3147 = vshrl.u32 %v3146, 7
    %v3148 = vsub.s32 1, %v3147
    %v3149 = vrot.slane %v3140, %v3148
    %v3150 = vlaneseq
    %v3151 = vshrl.u32 %v3150, 7
    %v3152 = vsub.s32 2, %v3151
    %v3153 = vrot.slane %v3140, %v3152
    %v3154 = vlaneseq
    %v3155 = vshrl.u32 %v3154, 7
    %v3156 = vsub.s32 3, %v3155
    %v3157 = vrot.slane %v3140, %v3156
    %v3162 = vadd.f32 %v3136, %v3145
    %v3163 = vadd.f32 %v3137, %v3149
    %v3164 = vadd.f32 %v3138, %v3153
    %v3165 = vadd.f32 %v3139, %v3157
    %v3166 = vmax.f32 %v3162, 0.0
    %v3167 = vmax.f32 %v3163, 0.0
    %v3168 = vmax.f32 %v3164, 0.0
    %v3169 = vmax.f32 %v3165, 0.0
    %v3170 = vpack.c.bf16 %v3166, %v3166
    %v3171 = vpack.c.bf16 %v3167, %v3167
    %v3172 = vpack.c.bf16 %v3168, %v3168
    %v3173 = vpack.c.bf16 %v3169, %v3169
    %v3174 = vld [vmem:[#allocation9] sm:$0xf]
    %v3175 = vld [vmem:[#allocation9 + $0x4] sm:$0xf]
    %v3176 = vld [vmem:[#allocation9 + $0x8] sm:$0xf]
    %v3177 = vld [vmem:[#allocation9 + $0xc] sm:$0xf]
    %v3178 = vld [vmem:[#allocation9 + $0x10] sm:$0xf]
    %v3179 = vld [vmem:[#allocation9 + $0x14] sm:$0xf]
    %v3180 = vld [vmem:[#allocation9 + $0x18] sm:$0xf]
    %v3181 = vld [vmem:[#allocation9 + $0x1c] sm:$0xf]
    %v3182 = vld [vmem:[#allocation9 + $0x20] sm:$0xf]
    %v3183 = vld [vmem:[#allocation9 + $0x24] sm:$0xf]
    %v3184 = vld [vmem:[#allocation9 + $0x28] sm:$0xf]
    %v3185 = vld [vmem:[#allocation9 + $0x2c] sm:$0xf]
    %v3186 = vld [vmem:[#allocation9 + $0x30] sm:$0xf]
    %v3187 = vld [vmem:[#allocation9 + $0x34] sm:$0xf]
    %v3188 = vld [vmem:[#allocation9 + $0x38] sm:$0xf]
    %v3189 = vld [vmem:[#allocation9 + $0x3c] sm:$0xf]
    %v3190 = vld [vmem:[#allocation9 + $0x40] sm:$0xf]
    %v3191 = vld [vmem:[#allocation9 + $0x44] sm:$0xf]
    %v3192 = vld [vmem:[#allocation9 + $0x48] sm:$0xf]
    %v3193 = vld [vmem:[#allocation9 + $0x4c] sm:$0xf]
    %v3194 = vld [vmem:[#allocation9 + $0x50] sm:$0xf]
    %v3195 = vld [vmem:[#allocation9 + $0x54] sm:$0xf]
    %v3196 = vld [vmem:[#allocation9 + $0x58] sm:$0xf]
    %v3197 = vld [vmem:[#allocation9 + $0x5c] sm:$0xf]
    %v3198 = vld [vmem:[#allocation9 + $0x60] sm:$0xf]
    %v3199 = vld [vmem:[#allocation9 + $0x64] sm:$0xf]
    %v3200 = vld [vmem:[#allocation9 + $0x68] sm:$0xf]
    %v3201 = vld [vmem:[#allocation9 + $0x6c] sm:$0xf]
    %v3202 = vld [vmem:[#allocation9 + $0x70] sm:$0xf]
    %v3203 = vld [vmem:[#allocation9 + $0x74] sm:$0xf]
    %v3204 = vld [vmem:[#allocation9 + $0x78] sm:$0xf]
    %v3205 = vld [vmem:[#allocation9 + $0x7c] sm:$0xf]
    %v3206 = vld [vmem:[#allocation9 + $0x80] sm:$0xf]
    %v3207 = vld [vmem:[#allocation9 + $0x84] sm:$0xf]
    %v3208 = vld [vmem:[#allocation9 + $0x88] sm:$0xf]
    %v3209 = vld [vmem:[#allocation9 + $0x8c] sm:$0xf]
    %v3210 = vld [vmem:[#allocation9 + $0x90] sm:$0xf]
    %v3211 = vld [vmem:[#allocation9 + $0x94] sm:$0xf]
    %v3212 = vld [vmem:[#allocation9 + $0x98] sm:$0xf]
    %v3213 = vld [vmem:[#allocation9 + $0x9c] sm:$0xf]
    %v3214 = vld [vmem:[#allocation9 + $0xa0] sm:$0xf]
    %v3215 = vld [vmem:[#allocation9 + $0xa4] sm:$0xf]
    %v3216 = vld [vmem:[#allocation9 + $0xa8] sm:$0xf]
    %v3217 = vld [vmem:[#allocation9 + $0xac] sm:$0xf]
    %v3218 = vld [vmem:[#allocation9 + $0xb0] sm:$0xf]
    %v3219 = vld [vmem:[#allocation9 + $0xb4] sm:$0xf]
    %v3220 = vld [vmem:[#allocation9 + $0xb8] sm:$0xf]
    %v3221 = vld [vmem:[#allocation9 + $0xbc] sm:$0xf]
    %v3222 = vld [vmem:[#allocation9 + $0xc0] sm:$0xf]
    %v3223 = vld [vmem:[#allocation9 + $0xc4] sm:$0xf]
    %v3224 = vld [vmem:[#allocation9 + $0xc8] sm:$0xf]
    %v3225 = vld [vmem:[#allocation9 + $0xcc] sm:$0xf]
    %v3226 = vld [vmem:[#allocation9 + $0xd0] sm:$0xf]
    %v3227 = vld [vmem:[#allocation9 + $0xd4] sm:$0xf]
    %v3228 = vld [vmem:[#allocation9 + $0xd8] sm:$0xf]
    %v3229 = vld [vmem:[#allocation9 + $0xdc] sm:$0xf]
    %v3230 = vld [vmem:[#allocation9 + $0xe0] sm:$0xf]
    %v3231 = vld [vmem:[#allocation9 + $0xe4] sm:$0xf]
    %v3232 = vld [vmem:[#allocation9 + $0xe8] sm:$0xf]
    %v3233 = vld [vmem:[#allocation9 + $0xec] sm:$0xf]
    %v3234 = vld [vmem:[#allocation9 + $0xf0] sm:$0xf]
    %v3235 = vld [vmem:[#allocation9 + $0xf4] sm:$0xf]
    %v3236 = vld [vmem:[#allocation9 + $0xf8] sm:$0xf]
    %v3237 = vld [vmem:[#allocation9 + $0xfc] sm:$0xf]
    %v3238 = vld [vmem:[#allocation10] sm:$0x1]
    %v3240 = vlaneseq
    %v3241 = vshrl.u32 %v3240, 7
    %v3242 = vsub.s32 0, %v3241
    %v3243 = vrot.slane %v3238, %v3242
    %v3309 = vunpack.c.l.b16 %v3174
    %v3310 = vunpack.c.l.b16 %v3175
    %v3311 = vunpack.c.l.b16 %v3176
    %v3312 = vunpack.c.l.b16 %v3177
    %v3313 = vunpack.c.l.b16 %v3178
    %v3314 = vunpack.c.l.b16 %v3179
    %v3315 = vunpack.c.l.b16 %v3180
    %v3316 = vunpack.c.l.b16 %v3181
    %v3317 = vunpack.c.l.b16 %v3182
    %v3318 = vunpack.c.l.b16 %v3183
    %v3319 = vunpack.c.l.b16 %v3184
    %v3320 = vunpack.c.l.b16 %v3185
    %v3321 = vunpack.c.l.b16 %v3186
    %v3322 = vunpack.c.l.b16 %v3187
    %v3323 = vunpack.c.l.b16 %v3188
    %v3324 = vunpack.c.l.b16 %v3189
    %v3325 = vunpack.c.l.b16 %v3190
    %v3326 = vunpack.c.l.b16 %v3191
    %v3327 = vunpack.c.l.b16 %v3192
    %v3328 = vunpack.c.l.b16 %v3193
    %v3329 = vunpack.c.l.b16 %v3194
    %v3330 = vunpack.c.l.b16 %v3195
    %v3331 = vunpack.c.l.b16 %v3196
    %v3332 = vunpack.c.l.b16 %v3197
    %v3333 = vunpack.c.l.b16 %v3198
    %v3334 = vunpack.c.l.b16 %v3199
    %v3335 = vunpack.c.l.b16 %v3200
    %v3336 = vunpack.c.l.b16 %v3201
    %v3337 = vunpack.c.l.b16 %v3202
    %v3338 = vunpack.c.l.b16 %v3203
    %v3339 = vunpack.c.l.b16 %v3204
    %v3340 = vunpack.c.l.b16 %v3205
    %v3341 = vunpack.c.l.b16 %v3206
    %v3342 = vunpack.c.l.b16 %v3207
    %v3343 = vunpack.c.l.b16 %v3208
    %v3344 = vunpack.c.l.b16 %v3209
    %v3345 = vunpack.c.l.b16 %v3210
    %v3346 = vunpack.c.l.b16 %v3211
    %v3347 = vunpack.c.l.b16 %v3212
    %v3348 = vunpack.c.l.b16 %v3213
    %v3349 = vunpack.c.l.b16 %v3214
    %v3350 = vunpack.c.l.b16 %v3215
    %v3351 = vunpack.c.l.b16 %v3216
    %v3352 = vunpack.c.l.b16 %v3217
    %v3353 = vunpack.c.l.b16 %v3218
    %v3354 = vunpack.c.l.b16 %v3219
    %v3355 = vunpack.c.l.b16 %v3220
    %v3356 = vunpack.c.l.b16 %v3221
    %v3357 = vunpack.c.l.b16 %v3222
    %v3358 = vunpack.c.l.b16 %v3223
    %v3359 = vunpack.c.l.b16 %v3224
    %v3360 = vunpack.c.l.b16 %v3225
    %v3361 = vunpack.c.l.b16 %v3226
    %v3362 = vunpack.c.l.b16 %v3227
    %v3363 = vunpack.c.l.b16 %v3228
    %v3364 = vunpack.c.l.b16 %v3229
    %v3365 = vunpack.c.l.b16 %v3230
    %v3366 = vunpack.c.l.b16 %v3231
    %v3367 = vunpack.c.l.b16 %v3232
    %v3368 = vunpack.c.l.b16 %v3233
    %v3369 = vunpack.c.l.b16 %v3234
    %v3370 = vunpack.c.l.b16 %v3235
    %v3371 = vunpack.c.l.b16 %v3236
    %v3372 = vunpack.c.l.b16 %v3237
    %v3373 = vpack.c.b16 %v3310, %v3309
    %v3374 = vpack.c.b16 %v3312, %v3311
    %v3375 = vpack.c.b16 %v3314, %v3313
    %v3376 = vpack.c.b16 %v3316, %v3315
    %v3377 = vpack.c.b16 %v3318, %v3317
    %v3378 = vpack.c.b16 %v3320, %v3319
    %v3379 = vpack.c.b16 %v3322, %v3321
    %v3380 = vpack.c.b16 %v3324, %v3323
    %v3381 = vpack.c.b16 %v3326, %v3325
    %v3382 = vpack.c.b16 %v3328, %v3327
    %v3383 = vpack.c.b16 %v3330, %v3329
    %v3384 = vpack.c.b16 %v3332, %v3331
    %v3385 = vpack.c.b16 %v3334, %v3333
    %v3386 = vpack.c.b16 %v3336, %v3335
    %v3387 = vpack.c.b16 %v3338, %v3337
    %v3388 = vpack.c.b16 %v3340, %v3339
    %v3389 = vpack.c.b16 %v3342, %v3341
    %v3390 = vpack.c.b16 %v3344, %v3343
    %v3391 = vpack.c.b16 %v3346, %v3345
    %v3392 = vpack.c.b16 %v3348, %v3347
    %v3393 = vpack.c.b16 %v3350, %v3349
    %v3394 = vpack.c.b16 %v3352, %v3351
    %v3395 = vpack.c.b16 %v3354, %v3353
    %v3396 = vpack.c.b16 %v3356, %v3355
    %v3397 = vpack.c.b16 %v3358, %v3357
    %v3398 = vpack.c.b16 %v3360, %v3359
    %v3399 = vpack.c.b16 %v3362, %v3361
    %v3400 = vpack.c.b16 %v3364, %v3363
    %v3401 = vpack.c.b16 %v3366, %v3365
    %v3402 = vpack.c.b16 %v3368, %v3367
    %v3403 = vpack.c.b16 %v3370, %v3369
    %v3404 = vpack.c.b16 %v3372, %v3371
    %3437 = vmatprep.subr.bf16.mxu0 0
    %3438 = vmatpush1.bf16.msra.mxu0 %v3380
    %3439 = vmatprep.subr.bf16.mxu0 0
    %3440 = vmatpush1.bf16.msra.mxu0 %v3379
    %3441 = vmatprep.subr.bf16.mxu0 0
    %3442 = vmatpush1.bf16.msra.mxu0 %v3378
    %3443 = vmatprep.subr.bf16.mxu0 0
    %3444 = vmatpush1.bf16.msra.mxu0 %v3377
    %3445 = vmatprep.subr.bf16.mxu0 0
    %3446 = vmatpush1.bf16.msra.mxu0 %v3376
    %3447 = vmatprep.subr.bf16.mxu0 0
    %3448 = vmatpush1.bf16.msra.mxu0 %v3375
    %3449 = vmatprep.subr.bf16.mxu0 0
    %3450 = vmatpush1.bf16.msra.mxu0 %v3374
    %3451 = vmatprep.subr.bf16.mxu0 0
    %3452 = vmatpush1.bf16.msra.mxu0 %v3373
    %3453 = vmatprep.subr.bf16.mxu0 0
    %3454 = vmatpush2.bf16.msra.mxu0 %v3388
    %3455 = vmatprep.subr.bf16.mxu0 0
    %3456 = vmatpush2.bf16.msra.mxu0 %v3387
    %3457 = vmatprep.subr.bf16.mxu0 0
    %3458 = vmatpush2.bf16.msra.mxu0 %v3386
    %3459 = vmatprep.subr.bf16.mxu0 0
    %3460 = vmatpush2.bf16.msra.mxu0 %v3385
    %3461 = vmatprep.subr.bf16.mxu0 0
    %3462 = vmatpush2.bf16.msra.mxu0 %v3384
    %3463 = vmatprep.subr.bf16.mxu0 0
    %3464 = vmatpush2.bf16.msra.mxu0 %v3383
    %3465 = vmatprep.subr.bf16.mxu0 0
    %3466 = vmatpush2.bf16.msra.mxu0 %v3382
    %3467 = vmatprep.subr.bf16.mxu0 0
    %3468 = vmatpush2.bf16.msra.mxu0 %v3381
    %3469 = vmatprep.mubr.bf16.mxu0 %v3171
    %3470 = vmatmul.mubr.bf16.gmra.mxu0 %v3170
    %v3471 = vpop.f32.mrf.mxu0
    %v3472 = vadd.f32 %v3243, %v3471
    %v3473 = vpop.f32.mrf.mxu0
    %v3474 = vpop.f32.mrf.mxu0
    %v3475 = vpop.f32.mrf.mxu0
    %3476 = vdwg.mxu0
    %3477 = vmatprep.subr.bf16.mxu0 0
    %3478 = vmatpush1.bf16.msra.mxu0 %v3396
    %3479 = vmatprep.subr.bf16.mxu0 0
    %3480 = vmatpush1.bf16.msra.mxu0 %v3395
    %3481 = vmatprep.subr.bf16.mxu0 0
    %3482 = vmatpush1.bf16.msra.mxu0 %v3394
    %3483 = vmatprep.subr.bf16.mxu0 0
    %3484 = vmatpush1.bf16.msra.mxu0 %v3393
    %3485 = vmatprep.subr.bf16.mxu0 0
    %3486 = vmatpush1.bf16.msra.mxu0 %v3392
    %3487 = vmatprep.subr.bf16.mxu0 0
    %3488 = vmatpush1.bf16.msra.mxu0 %v3391
    %3489 = vmatprep.subr.bf16.mxu0 0
    %3490 = vmatpush1.bf16.msra.mxu0 %v3390
    %3491 = vmatprep.subr.bf16.mxu0 0
    %3492 = vmatpush1.bf16.msra.mxu0 %v3389
    %3493 = vmatprep.subr.bf16.mxu0 0
    %3494 = vmatpush2.bf16.msra.mxu0 %v3404
    %3495 = vmatprep.subr.bf16.mxu0 0
    %3496 = vmatpush2.bf16.msra.mxu0 %v3403
    %3497 = vmatprep.subr.bf16.mxu0 0
    %3498 = vmatpush2.bf16.msra.mxu0 %v3402
    %3499 = vmatprep.subr.bf16.mxu0 0
    %3500 = vmatpush2.bf16.msra.mxu0 %v3401
    %3501 = vmatprep.subr.bf16.mxu0 0
    %3502 = vmatpush2.bf16.msra.mxu0 %v3400
    %3503 = vmatprep.subr.bf16.mxu0 0
    %3504 = vmatpush2.bf16.msra.mxu0 %v3399
    %3505 = vmatprep.subr.bf16.mxu0 0
    %3506 = vmatpush2.bf16.msra.mxu0 %v3398
    %3507 = vmatprep.subr.bf16.mxu0 0
    %3508 = vmatpush2.bf16.msra.mxu0 %v3397
    %3509 = vmatprep.mubr.bf16.mxu0 %v3173
    %3510 = vmatmul.mubr.bf16.gmra.mxu0 %v3172
    %v3511 = vpop.f32.mrf.mxu0
    %v3512 = vadd.f32 %v3472, %v3511
    %v3513 = vpop.f32.mrf.mxu0
    %v3514 = vpop.f32.mrf.mxu0
    %v3515 = vpop.f32.mrf.mxu0
    %3516 = vdwg.mxu0
    %3517 = vst [vmem:[%s7] sm:$0xff] %v3512
    // Predicated region
    $region54: #{combined_model_forward.1} parent=1 // pred_check
      _
    $region55: #{combined_model_forward.1} parent=1 // pred_check_branch
      %3519 = sbr.rel (0) target = $region57
    $region56: #{combined_model_forward.1} parent=1 // pred_region
      _
    $region57: #{combined_model_forward.1} parent=1 // pred_fallthru
      _
    // Predicated region
    $region58: #{combined_model_forward.1} parent=1 // pred_check
      _
    $region59: #{combined_model_forward.1} parent=1 // pred_check_branch
      %3521 = sbr.rel (0) target = $region61
    $region60: #{combined_model_forward.1} parent=1 // pred_region
      _
    $region61: #{combined_model_forward.1} parent=1 // pred_fallthru
      _
    %3522 = vsyncpa [#allocation3], 1
    %3523 = vsyncpa [#allocation5], 1
    %3524 = vsyncpa [#allocation8], 1
    %3525 = vsyncpa [#allocation11], 1

</llo_original>
